<compile_context>
chip_gen: v7x
topology: tpu7x:2x2x1
jax: 0.10.0
libtpu: 0.0.40
codegen_flags: <defaults>
</compile_context>

<pallas_src>
import functools

import jax
import jax.numpy as jnp
from jax.experimental import pallas as pl
from jax.experimental.pallas import tpu as pltpu

_VMEM = pl.BlockSpec(memory_space=pltpu.MemorySpace.VMEM)

DEPTHS = [24, 16, 24, 32, 64, 72, 144, 240]   # _get_depths(0.75), rounded to mult. of 8
NUM_CLASSES = 1000
FC_PAD = 1024                                  # lane-dense classifier output
BN_EPS = 1e-5


# --------------------------------------------------------------------------------------
# Fused inverted-residual kernel (also used for the stem via im2col "expansion")
# --------------------------------------------------------------------------------------

def _block_kernel(x_ref, w1_ref, b1_ref, wd_ref, bd_ref, w2_ref, b2_ref, o_ref,
                  tflat_ref, exp_ref, dwf_ref,
                  *, K, stride, residual, H, W, Ho, Wo):
    """One inverted-residual block for a single batch element (grid over batch).

    x_ref : (1, H*W, Cin) bf16          w1 : (Cin, Cmid) bf16 (BN scale folded)
    wd    : (K*K, Cmid) f32 (folded)    w2 : (Cmid, Cout) bf16 (folded)
    o_ref : (1, Ho*Wo, Cout) bf16
    scratch: tflat (H*W, Cmid) f32, exp (H, W+2p, Cmid) f32, dwf (Ho*Wo, Cmid) bf16
    """
    pad = K // 2
    Wp = W + 2 * pad           # padded width held in VMEM scratch
    Wd = Wp - K + 1            # stride-1 depthwise output width (== W)
    cmid = w1_ref.shape[1]

    # ---- expand 1x1 conv + bias + ReLU (one big MXU matmul over all H*W rows) ----
    tflat_ref[...] = jnp.maximum(
        jnp.dot(x_ref[0], w1_ref[...], preferred_element_type=jnp.float32)
        + b1_ref[...], 0.0)

    # ---- write W-halo zeros and interior rows of the depthwise input (in-kernel pad) ----
    zero_halo = jnp.zeros((H, pad, cmid), jnp.float32)
    exp_ref[:, 0:pad, :] = zero_halo
    exp_ref[:, pad + W:, :] = zero_halo
    for h in range(H):
        exp_ref[h, pad:pad + W, :] = tflat_ref[h * W:(h + 1) * W, :]

    # ---- depthwise KxK + bias + ReLU; only the required (strided) output rows ----
    if stride > 1 and Wo > 1:
        r = jax.lax.broadcasted_iota(jnp.int32, (Wo, Wd), 0)
        c = jax.lax.broadcasted_iota(jnp.int32, (Wo, Wd), 1)
        sel = (c == stride * r).astype(jnp.bfloat16)      # 0/1 W-subsample matrix

    bd = bd_ref[...]
    for ho in range(Ho):
        acc = None
        for kh in range(K):
            hin = stride * ho + kh - pad
            if hin < 0 or hin >= H:
                continue                                   # zero-padded row -> no term
            xrow = exp_ref[hin]                            # (Wp, cmid) f32
            for kw in range(K):
                i = kh * K + kw
                term = xrow[kw:kw + Wd, :] * wd_ref[i:i + 1, :]
                acc = term if acc is None else acc + term
        y = jnp.maximum(acc + bd, 0.0).astype(jnp.bfloat16)   # (Wd, cmid)
        if stride == 1:
            dwf_ref[ho * Wo:(ho + 1) * Wo, :] = y
        elif Wo == 1:
            dwf_ref[ho * Wo:(ho + 1) * Wo, :] = y[0:1, :]
        else:
            dwf_ref[ho * Wo:(ho + 1) * Wo, :] = jnp.dot(
                sel, y, preferred_element_type=jnp.float32).astype(jnp.bfloat16)

    # ---- project 1x1 conv + bias, fused residual add, bf16 output ----
    p = jnp.dot(dwf_ref[...], w2_ref[...], preferred_element_type=jnp.float32) + b2_ref[...]
    if residual:
        p = p + x_ref[0].astype(jnp.float32)
    o_ref[0] = p.astype(jnp.bfloat16)


def _head_kernel(x_ref, wl_ref, bl_ref, wf_ref, bf_ref, o_ref, *, N, HW):
    """Final 1x1 conv -> 1280 + BN + ReLU, global mean over H*W, Linear(1280, 1024-padded)."""
    wl = wl_ref[...]
    bl = bl_ref[...]
    wf = wf_ref[...]
    bf = bf_ref[...]
    inv = 1.0 / float(HW)
    for nb in range(N):
        y = jnp.dot(x_ref[nb], wl, preferred_element_type=jnp.float32) + bl
        y = jnp.maximum(y, 0.0)
        feat = (jnp.sum(y, axis=0, keepdims=True) * inv).astype(jnp.bfloat16)
        # TODO(synk): Dropout(p=0.2) precedes the Linear layer; identity in eval mode.
        o_ref[nb:nb + 1, :] = jnp.dot(feat, wf, preferred_element_type=jnp.float32) + bf


# --------------------------------------------------------------------------------------
# pallas_call wrappers
# --------------------------------------------------------------------------------------

def _full_spec(shape):
    return pl.BlockSpec(tuple(shape), lambda b: (0, 0))


def fused_block(x, H, W, p):
    """x: (N, H*W, Cin) bf16 -> (N, Ho*Wo, Cout) bf16, one pallas_call, grid over batch."""
    K, stride, residual = p["K"], p["stride"], p["residual"]
    n, hw, cin = x.shape
    cmid = p["w1"].shape[1]
    cout = p["w2"].shape[1]
    pad = K // 2
    Ho = (H + 2 * pad - K) // stride + 1
    Wo = (W + 2 * pad - K) // stride + 1
    kernel = functools.partial(_block_kernel, K=K, stride=stride, residual=residual,
                               H=H, W=W, Ho=Ho, Wo=Wo)
    out = pl.pallas_call(
        kernel,
        grid=(n,),
        in_specs=[
            pl.BlockSpec((1, hw, cin), lambda b: (b, 0, 0)),
            _full_spec(p["w1"].shape), _full_spec(p["b1"].shape),
            _full_spec(p["wd"].shape), _full_spec(p["bd"].shape),
            _full_spec(p["w2"].shape), _full_spec(p["b2"].shape),
        ],
        out_specs=pl.BlockSpec((1, Ho * Wo, cout), lambda b: (b, 0, 0)),
        out_shape=jax.ShapeDtypeStruct((n, Ho * Wo, cout), jnp.bfloat16),
        scratch_shapes=[
            pltpu.VMEM((hw, cmid), jnp.float32),             # expansion output (flat)
            pltpu.VMEM((H, W + 2 * pad, cmid), jnp.float32),  # W-padded depthwise input
            pltpu.VMEM((Ho * Wo, cmid), jnp.bfloat16),        # depthwise output (flat)
        ],
        compiler_params=pltpu.CompilerParams(
            dimension_semantics=("parallel",),
            vmem_limit_bytes=32 * 1024 * 1024),
    )(x, p["w1"], p["b1"], p["wd"], p["bd"], p["w2"], p["b2"])
    return out, Ho, Wo


def _im2col_stem(x, K, stride, pad):
    """XLA glue (runs once): (kh, kw, cin)-ordered patches for the stride-2 stem conv."""
    x = jnp.pad(x, ((0, 0), (pad, pad), (pad, pad), (0, 0)))
    _, hp, wp, _ = x.shape
    ho = (hp - K) // stride + 1
    wo = (wp - K) // stride + 1
    cols = []
    for kh in range(K):
        for kw in range(K):
            cols.append(x[:, kh:kh + (ho - 1) * stride + 1:stride,
                          kw:kw + (wo - 1) * stride + 1:stride, :])
    return jnp.concatenate(cols, axis=-1), ho, wo


# --------------------------------------------------------------------------------------
# Deterministic parameter construction (BN folded into weights, inference semantics)
# --------------------------------------------------------------------------------------

class _KeyGen:
    def __init__(self, seed=0):
        self._key = jax.random.PRNGKey(seed)

    def __call__(self):
        self._key, k = jax.random.split(self._key)
        return k


def _bn_fold(kg, c):
    gamma = jax.random.uniform(kg(), (c,), jnp.float32, 0.5, 1.5)
    beta = 0.1 * jax.random.normal(kg(), (c,), jnp.float32)
    rmean = 0.1 * jax.random.normal(kg(), (c,), jnp.float32)
    rvar = jax.random.uniform(kg(), (c,), jnp.float32, 0.5, 1.5)
    scale = gamma / jnp.sqrt(rvar + BN_EPS)
    bias = beta - rmean * scale
    return scale, bias.reshape(1, c)


def _pw_folded(kg, cin, cout):
    w = jax.random.normal(kg(), (cin, cout), jnp.float32) / jnp.sqrt(float(cin))
    s, b = _bn_fold(kg, cout)
    return (w * s[None, :]).astype(jnp.bfloat16), b


def _dw_folded(kg, K, c):
    w = jax.random.normal(kg(), (K * K, c), jnp.float32) / float(K)
    s, b = _bn_fold(kg, c)
    return (w * s[None, :]).astype(jnp.float32), b


def _block_params(kg, cin, cout, K, stride, exp):
    cmid = cin * exp
    w1, b1 = _pw_folded(kg, cin, cmid)
    wd, bd = _dw_folded(kg, K, cmid)
    w2, b2 = _pw_folded(kg, cmid, cout)
    return dict(w1=w1, b1=b1, wd=wd, bd=bd, w2=w2, b2=b2,
                K=K, stride=stride, residual=(cin == cout and stride == 1))


def build_params(seed=0):
    kg = _KeyGen(seed)
    d = DEPTHS
    p = {}
    # Stem: conv3x3/s2 (im2col matmul 27->24) + dw3x3/s1 + pw 24->16; same fused kernel.
    s_w1, s_b1 = _pw_folded(kg, 27, d[0])
    s_wd, s_bd = _dw_folded(kg, 3, d[0])
    s_w2, s_b2 = _pw_folded(kg, d[0], d[1])
    p["stem"] = dict(w1=s_w1, b1=s_b1, wd=s_wd, bd=s_bd, w2=s_w2, b2=s_b2,
                     K=3, stride=1, residual=False)
    # Inverted-residual stacks: (cin, cout, kernel, stride, expansion, repeats)
    stack_cfg = [
        (d[1], d[2], 3, 2, 3, 3),
        (d[2], d[3], 5, 2, 3, 3),
        (d[3], d[4], 5, 2, 6, 3),
        (d[4], d[5], 3, 1, 6, 2),
        (d[5], d[6], 5, 2, 6, 4),
        (d[6], d[7], 3, 1, 6, 1),
    ]
    stacks = []
    for cin, cout, K, stride, exp, reps in stack_cfg:
        blocks = []
        c_in, s = cin, stride
        for _ in range(reps):
            blocks.append(_block_params(kg, c_in, cout, K, s, exp))
            c_in, s = cout, 1
        stacks.append(blocks)
    p["stacks"] = stacks
    # Final 1x1 conv -> 1280 + classifier (padded to 1024 lanes).
    p["convL_w"], p["convL_b"] = _pw_folded(kg, d[7], 1280)
    fc_w = jax.random.normal(kg(), (1280, NUM_CLASSES), jnp.float32) / jnp.sqrt(1280.0)
    fc_b = 0.01 * jax.random.normal(kg(), (NUM_CLASSES,), jnp.float32)
    p["fc_w"] = jnp.pad(fc_w, ((0, 0), (0, FC_PAD - NUM_CLASSES))).astype(jnp.bfloat16)
    p["fc_b"] = jnp.pad(fc_b, (0, FC_PAD - NUM_CLASSES)).reshape(1, FC_PAD)
    return p


# --------------------------------------------------------------------------------------
# Forward pass
# --------------------------------------------------------------------------------------

def mnasnet0_75_forward(params, x_nchw):
    # layout glue: NCHW -> NHWC once + stem im2col; everything after stays as flattened
    # (N, H*W, C) bf16 and only moves through the fused Pallas kernels.
    x = jnp.transpose(x_nchw.astype(jnp.float32), (0, 2, 3, 1))
    n = x.shape[0]
    patches, H, W = _im2col_stem(x, 3, 2, 1)                  # (N, H, W, 27)
    h = patches.reshape(n, H * W, 27).astype(jnp.bfloat16)

    # Fused stem: conv3x3/s2+BN+ReLU, dw3x3+BN+ReLU, pw 24->16+BN.
    h, H, W = fused_block(h, H, W, params["stem"])

    # Fused inverted-residual blocks.
    for stack in params["stacks"]:
        for blk in stack:
            h, H, W = fused_block(h, H, W, blk)

    # Fused head: 1x1 conv -> 1280 + BN + ReLU, global mean, Dropout(identity), Linear.
    logits_p = pl.pallas_call(
        functools.partial(_head_kernel, N=n, HW=H * W),
        out_shape=jax.ShapeDtypeStruct((n, FC_PAD), jnp.float32),
        in_specs=[_VMEM] * 5,
        out_specs=_VMEM,
    )(h, params["convL_w"], params["convL_b"], params["fc_w"], params["fc_b"])
    return logits_p[:, :NUM_CLASSES]


if __name__ == "__main__":
    params = build_params(seed=0)
    # NCHW input, 3 channels, 32x32 spatial (network stride 32 -> 1x1 final feature map).
    x = jax.random.normal(jax.random.PRNGKey(0), (2, 3, 32, 32), jnp.float32)
    out = mnasnet0_75_forward(params, x)
    out = jax.block_until_ready(out)
    assert out.shape == (2, NUM_CLASSES), out.shape
    assert bool(jnp.all(jnp.isfinite(out))), "non-finite logits"
    print("KERNEL_OK")
</pallas_src>

<mosaic_0001>
module attributes {stable_mosaic.version = 11 : i64} {
  func.func @_block_kernel(%arg0: i32, %arg1: memref<1x256x27xbf16, #tpu.memory_space<vmem>>, %arg2: memref<27x24xbf16, #tpu.memory_space<vmem>>, %arg3: memref<1x24xf32, #tpu.memory_space<vmem>>, %arg4: memref<9x24xf32, #tpu.memory_space<vmem>>, %arg5: memref<1x24xf32, #tpu.memory_space<vmem>>, %arg6: memref<24x16xbf16, #tpu.memory_space<vmem>>, %arg7: memref<1x16xf32, #tpu.memory_space<vmem>>, %arg8: memref<1x256x16xbf16, #tpu.memory_space<vmem>>, %arg9: memref<256x24xf32, #tpu.memory_space<vmem>>, %arg10: memref<16x18x24xf32, #tpu.memory_space<vmem>>, %arg11: memref<256x24xbf16, #tpu.memory_space<vmem>>) attributes {dimension_semantics = [#tpu.dimension_semantics<parallel>], iteration_bounds = array<i64: 2>, scalar_prefetch = 0 : i64, scratch_operands = 3 : i64, tpu.core_type = #tpu.core_type<tc>, window_params = [{transform_indices = @transform_0, window_bounds = array<i64: 1, 256, 27>}, {pipeline_mode = #tpu.pipeline_mode<synchronous>, transform_indices = @transform_1, window_bounds = array<i64: 27, 24>}, {pipeline_mode = #tpu.pipeline_mode<synchronous>, transform_indices = @transform_2, window_bounds = array<i64: 1, 24>}, {pipeline_mode = #tpu.pipeline_mode<synchronous>, transform_indices = @transform_3, window_bounds = array<i64: 9, 24>}, {pipeline_mode = #tpu.pipeline_mode<synchronous>, transform_indices = @transform_4, window_bounds = array<i64: 1, 24>}, {pipeline_mode = #tpu.pipeline_mode<synchronous>, transform_indices = @transform_5, window_bounds = array<i64: 24, 16>}, {pipeline_mode = #tpu.pipeline_mode<synchronous>, transform_indices = @transform_6, window_bounds = array<i64: 1, 16>}, {transform_indices = @transform_7, window_bounds = array<i64: 1, 256, 16>}]} {
    %c0 = arith.constant 0 : index
    %c0_0 = arith.constant 0 : index
    %c0_1 = arith.constant 0 : index
    %0 = vector.load %arg1[%c0, %c0_0, %c0_1] : memref<1x256x27xbf16, #tpu.memory_space<vmem>>, vector<1x256x27xbf16>
    %1 = vector.shape_cast %0 : vector<1x256x27xbf16> to vector<256x27xbf16>
    %c0_2 = arith.constant 0 : index
    %c0_3 = arith.constant 0 : index
    %2 = vector.load %arg2[%c0_2, %c0_3] : memref<27x24xbf16, #tpu.memory_space<vmem>>, vector<27x24xbf16>
    %cst = arith.constant dense<0.000000e+00> : vector<256x24xf32>
    %3 = tpu.matmul %1, %2, %cst {dimension_numbers = #tpu.dot_dimension_numbers<[1], [0], [0], [1], [0, 0, 1, 1], [], []>} : vector<256x27xbf16>, vector<27x24xbf16>, vector<256x24xf32> -> vector<256x24xf32>
    %c0_4 = arith.constant 0 : index
    %c0_5 = arith.constant 0 : index
    %4 = vector.load %arg3[%c0_4, %c0_5] : memref<1x24xf32, #tpu.memory_space<vmem>>, vector<1x24xf32>
    %5 = vector.broadcast %4 : vector<1x24xf32> to vector<256x24xf32>
    %6 = arith.addf %3, %5 : vector<256x24xf32>
    %cst_6 = arith.constant 0.000000e+00 : f32
    %7 = vector.broadcast %cst_6 : f32 to vector<256x24xf32>
    %8 = arith.maximumf %6, %7 : vector<256x24xf32>
    %c0_7 = arith.constant 0 : index
    %c0_8 = arith.constant 0 : index
    %9 = vector.load %arg9[%c0_7, %c0_8] : memref<256x24xf32, #tpu.memory_space<vmem>>, vector<256x24xf32>
    tpu.vector_store %arg9[%c0_7, %c0_8], %8 {strides = array<i32>} : memref<256x24xf32, #tpu.memory_space<vmem>>, vector<256x24xf32>,
    %cst_9 = arith.constant 0.000000e+00 : f32
    %10 = vector.broadcast %cst_9 : f32 to vector<16x1x24xf32>
    %c0_10 = arith.constant 0 : index
    %c0_11 = arith.constant 0 : index
    %c0_12 = arith.constant 0 : index
    %11 = vector.load %arg10[%c0_10, %c0_11, %c0_12] : memref<16x18x24xf32, #tpu.memory_space<vmem>>, vector<16x1x24xf32>
    tpu.vector_store %arg10[%c0_10, %c0_11, %c0_12], %10 {strides = array<i32>} : memref<16x18x24xf32, #tpu.memory_space<vmem>>, vector<16x1x24xf32>,
    %c0_13 = arith.constant 0 : index
    %c17 = arith.constant 17 : index
    %c0_14 = arith.constant 0 : index
    %12 = vector.load %arg10[%c0_13, %c17, %c0_14] : memref<16x18x24xf32, #tpu.memory_space<vmem>>, vector<16x1x24xf32>
    tpu.vector_store %arg10[%c0_13, %c17, %c0_14], %10 {strides = array<i32>} : memref<16x18x24xf32, #tpu.memory_space<vmem>>, vector<16x1x24xf32>,
    %c0_15 = arith.constant 0 : index
    %c0_16 = arith.constant 0 : index
    %13 = vector.load %arg9[%c0_15, %c0_16] : memref<256x24xf32, #tpu.memory_space<vmem>>, vector<16x24xf32>
    %c0_17 = arith.constant 0 : index
    %c1 = arith.constant 1 : index
    %c0_18 = arith.constant 0 : index
    %14 = vector.load %arg10[%c0_17, %c1, %c0_18] : memref<16x18x24xf32, #tpu.memory_space<vmem>>, vector<1x16x24xf32>
    %15 = vector.shape_cast %14 : vector<1x16x24xf32> to vector<16x24xf32>
    %16 = vector.shape_cast %13 : vector<16x24xf32> to vector<1x16x24xf32>
    tpu.vector_store %arg10[%c0_17, %c1, %c0_18], %16 {strides = array<i32>} : memref<16x18x24xf32, #tpu.memory_space<vmem>>, vector<1x16x24xf32>,
    %c16 = arith.constant 16 : index
    %c0_19 = arith.constant 0 : index
    %17 = vector.load %arg9[%c16, %c0_19] : memref<256x24xf32, #tpu.memory_space<vmem>>, vector<16x24xf32>
    %c1_20 = arith.constant 1 : index
    %c1_21 = arith.constant 1 : index
    %c0_22 = arith.constant 0 : index
    %18 = vector.load %arg10[%c1_20, %c1_21, %c0_22] : memref<16x18x24xf32, #tpu.memory_space<vmem>>, vector<1x16x24xf32>
    %19 = vector.shape_cast %18 : vector<1x16x24xf32> to vector<16x24xf32>
    %20 = vector.shape_cast %17 : vector<16x24xf32> to vector<1x16x24xf32>
    tpu.vector_store %arg10[%c1_20, %c1_21, %c0_22], %20 {strides = array<i32>} : memref<16x18x24xf32, #tpu.memory_space<vmem>>, vector<1x16x24xf32>,
    %c32 = arith.constant 32 : index
    %c0_23 = arith.constant 0 : index
    %21 = vector.load %arg9[%c32, %c0_23] : memref<256x24xf32, #tpu.memory_space<vmem>>, vector<16x24xf32>
    %c2 = arith.constant 2 : index
    %c1_24 = arith.constant 1 : index
    %c0_25 = arith.constant 0 : index
    %22 = vector.load %arg10[%c2, %c1_24, %c0_25] : memref<16x18x24xf32, #tpu.memory_space<vmem>>, vector<1x16x24xf32>
    %23 = vector.shape_cast %22 : vector<1x16x24xf32> to vector<16x24xf32>
    %24 = vector.shape_cast %21 : vector<16x24xf32> to vector<1x16x24xf32>
    tpu.vector_store %arg10[%c2, %c1_24, %c0_25], %24 {strides = array<i32>} : memref<16x18x24xf32, #tpu.memory_space<vmem>>, vector<1x16x24xf32>,
    %c48 = arith.constant 48 : index
    %c0_26 = arith.constant 0 : index
    %25 = vector.load %arg9[%c48, %c0_26] : memref<256x24xf32, #tpu.memory_space<vmem>>, vector<16x24xf32>
    %c3 = arith.constant 3 : index
    %c1_27 = arith.constant 1 : index
    %c0_28 = arith.constant 0 : index
    %26 = vector.load %arg10[%c3, %c1_27, %c0_28] : memref<16x18x24xf32, #tpu.memory_space<vmem>>, vector<1x16x24xf32>
    %27 = vector.shape_cast %26 : vector<1x16x24xf32> to vector<16x24xf32>
    %28 = vector.shape_cast %25 : vector<16x24xf32> to vector<1x16x24xf32>
    tpu.vector_store %arg10[%c3, %c1_27, %c0_28], %28 {strides = array<i32>} : memref<16x18x24xf32, #tpu.memory_space<vmem>>, vector<1x16x24xf32>,
    %c64 = arith.constant 64 : index
    %c0_29 = arith.constant 0 : index
    %29 = vector.load %arg9[%c64, %c0_29] : memref<256x24xf32, #tpu.memory_space<vmem>>, vector<16x24xf32>
    %c4 = arith.constant 4 : index
    %c1_30 = arith.constant 1 : index
    %c0_31 = arith.constant 0 : index
    %30 = vector.load %arg10[%c4, %c1_30, %c0_31] : memref<16x18x24xf32, #tpu.memory_space<vmem>>, vector<1x16x24xf32>
    %31 = vector.shape_cast %30 : vector<1x16x24xf32> to vector<16x24xf32>
    %32 = vector.shape_cast %29 : vector<16x24xf32> to vector<1x16x24xf32>
    tpu.vector_store %arg10[%c4, %c1_30, %c0_31], %32 {strides = array<i32>} : memref<16x18x24xf32, #tpu.memory_space<vmem>>, vector<1x16x24xf32>,
    %c80 = arith.constant 80 : index
    %c0_32 = arith.constant 0 : index
    %33 = vector.load %arg9[%c80, %c0_32] : memref<256x24xf32, #tpu.memory_space<vmem>>, vector<16x24xf32>
    %c5 = arith.constant 5 : index
    %c1_33 = arith.constant 1 : index
    %c0_34 = arith.constant 0 : index
    %34 = vector.load %arg10[%c5, %c1_33, %c0_34] : memref<16x18x24xf32, #tpu.memory_space<vmem>>, vector<1x16x24xf32>
    %35 = vector.shape_cast %34 : vector<1x16x24xf32> to vector<16x24xf32>
    %36 = vector.shape_cast %33 : vector<16x24xf32> to vector<1x16x24xf32>
    tpu.vector_store %arg10[%c5, %c1_33, %c0_34], %36 {strides = array<i32>} : memref<16x18x24xf32, #tpu.memory_space<vmem>>, vector<1x16x24xf32>,
    %c96 = arith.constant 96 : index
    %c0_35 = arith.constant 0 : index
    %37 = vector.load %arg9[%c96, %c0_35] : memref<256x24xf32, #tpu.memory_space<vmem>>, vector<16x24xf32>
    %c6 = arith.constant 6 : index
    %c1_36 = arith.constant 1 : index
    %c0_37 = arith.constant 0 : index
    %38 = vector.load %arg10[%c6, %c1_36, %c0_37] : memref<16x18x24xf32, #tpu.memory_space<vmem>>, vector<1x16x24xf32>
    %39 = vector.shape_cast %38 : vector<1x16x24xf32> to vector<16x24xf32>
    %40 = vector.shape_cast %37 : vector<16x24xf32> to vector<1x16x24xf32>
    tpu.vector_store %arg10[%c6, %c1_36, %c0_37], %40 {strides = array<i32>} : memref<16x18x24xf32, #tpu.memory_space<vmem>>, vector<1x16x24xf32>,
    %c112 = arith.constant 112 : index
    %c0_38 = arith.constant 0 : index
    %41 = vector.load %arg9[%c112, %c0_38] : memref<256x24xf32, #tpu.memory_space<vmem>>, vector<16x24xf32>
    %c7 = arith.constant 7 : index
    %c1_39 = arith.constant 1 : index
    %c0_40 = arith.constant 0 : index
    %42 = vector.load %arg10[%c7, %c1_39, %c0_40] : memref<16x18x24xf32, #tpu.memory_space<vmem>>, vector<1x16x24xf32>
    %43 = vector.shape_cast %42 : vector<1x16x24xf32> to vector<16x24xf32>
    %44 = vector.shape_cast %41 : vector<16x24xf32> to vector<1x16x24xf32>
    tpu.vector_store %arg10[%c7, %c1_39, %c0_40], %44 {strides = array<i32>} : memref<16x18x24xf32, #tpu.memory_space<vmem>>, vector<1x16x24xf32>,
    %c128 = arith.constant 128 : index
    %c0_41 = arith.constant 0 : index
    %45 = vector.load %arg9[%c128, %c0_41] : memref<256x24xf32, #tpu.memory_space<vmem>>, vector<16x24xf32>
    %c8 = arith.constant 8 : index
    %c1_42 = arith.constant 1 : index
    %c0_43 = arith.constant 0 : index
    %46 = vector.load %arg10[%c8, %c1_42, %c0_43] : memref<16x18x24xf32, #tpu.memory_space<vmem>>, vector<1x16x24xf32>
    %47 = vector.shape_cast %46 : vector<1x16x24xf32> to vector<16x24xf32>
    %48 = vector.shape_cast %45 : vector<16x24xf32> to vector<1x16x24xf32>
    tpu.vector_store %arg10[%c8, %c1_42, %c0_43], %48 {strides = array<i32>} : memref<16x18x24xf32, #tpu.memory_space<vmem>>, vector<1x16x24xf32>,
    %c144 = arith.constant 144 : index
    %c0_44 = arith.constant 0 : index
    %49 = vector.load %arg9[%c144, %c0_44] : memref<256x24xf32, #tpu.memory_space<vmem>>, vector<16x24xf32>
    %c9 = arith.constant 9 : index
    %c1_45 = arith.constant 1 : index
    %c0_46 = arith.constant 0 : index
    %50 = vector.load %arg10[%c9, %c1_45, %c0_46] : memref<16x18x24xf32, #tpu.memory_space<vmem>>, vector<1x16x24xf32>
    %51 = vector.shape_cast %50 : vector<1x16x24xf32> to vector<16x24xf32>
    %52 = vector.shape_cast %49 : vector<16x24xf32> to vector<1x16x24xf32>
    tpu.vector_store %arg10[%c9, %c1_45, %c0_46], %52 {strides = array<i32>} : memref<16x18x24xf32, #tpu.memory_space<vmem>>, vector<1x16x24xf32>,
    %c160 = arith.constant 160 : index
    %c0_47 = arith.constant 0 : index
    %53 = vector.load %arg9[%c160, %c0_47] : memref<256x24xf32, #tpu.memory_space<vmem>>, vector<16x24xf32>
    %c10 = arith.constant 10 : index
    %c1_48 = arith.constant 1 : index
    %c0_49 = arith.constant 0 : index
    %54 = vector.load %arg10[%c10, %c1_48, %c0_49] : memref<16x18x24xf32, #tpu.memory_space<vmem>>, vector<1x16x24xf32>
    %55 = vector.shape_cast %54 : vector<1x16x24xf32> to vector<16x24xf32>
    %56 = vector.shape_cast %53 : vector<16x24xf32> to vector<1x16x24xf32>
    tpu.vector_store %arg10[%c10, %c1_48, %c0_49], %56 {strides = array<i32>} : memref<16x18x24xf32, #tpu.memory_space<vmem>>, vector<1x16x24xf32>,
    %c176 = arith.constant 176 : index
    %c0_50 = arith.constant 0 : index
    %57 = vector.load %arg9[%c176, %c0_50] : memref<256x24xf32, #tpu.memory_space<vmem>>, vector<16x24xf32>
    %c11 = arith.constant 11 : index
    %c1_51 = arith.constant 1 : index
    %c0_52 = arith.constant 0 : index
    %58 = vector.load %arg10[%c11, %c1_51, %c0_52] : memref<16x18x24xf32, #tpu.memory_space<vmem>>, vector<1x16x24xf32>
    %59 = vector.shape_cast %58 : vector<1x16x24xf32> to vector<16x24xf32>
    %60 = vector.shape_cast %57 : vector<16x24xf32> to vector<1x16x24xf32>
    tpu.vector_store %arg10[%c11, %c1_51, %c0_52], %60 {strides = array<i32>} : memref<16x18x24xf32, #tpu.memory_space<vmem>>, vector<1x16x24xf32>,
    %c192 = arith.constant 192 : index
    %c0_53 = arith.constant 0 : index
    %61 = vector.load %arg9[%c192, %c0_53] : memref<256x24xf32, #tpu.memory_space<vmem>>, vector<16x24xf32>
    %c12 = arith.constant 12 : index
    %c1_54 = arith.constant 1 : index
    %c0_55 = arith.constant 0 : index
    %62 = vector.load %arg10[%c12, %c1_54, %c0_55] : memref<16x18x24xf32, #tpu.memory_space<vmem>>, vector<1x16x24xf32>
    %63 = vector.shape_cast %62 : vector<1x16x24xf32> to vector<16x24xf32>
    %64 = vector.shape_cast %61 : vector<16x24xf32> to vector<1x16x24xf32>
    tpu.vector_store %arg10[%c12, %c1_54, %c0_55], %64 {strides = array<i32>} : memref<16x18x24xf32, #tpu.memory_space<vmem>>, vector<1x16x24xf32>,
    %c208 = arith.constant 208 : index
    %c0_56 = arith.constant 0 : index
    %65 = vector.load %arg9[%c208, %c0_56] : memref<256x24xf32, #tpu.memory_space<vmem>>, vector<16x24xf32>
    %c13 = arith.constant 13 : index
    %c1_57 = arith.constant 1 : index
    %c0_58 = arith.constant 0 : index
    %66 = vector.load %arg10[%c13, %c1_57, %c0_58] : memref<16x18x24xf32, #tpu.memory_space<vmem>>, vector<1x16x24xf32>
    %67 = vector.shape_cast %66 : vector<1x16x24xf32> to vector<16x24xf32>
    %68 = vector.shape_cast %65 : vector<16x24xf32> to vector<1x16x24xf32>
    tpu.vector_store %arg10[%c13, %c1_57, %c0_58], %68 {strides = array<i32>} : memref<16x18x24xf32, #tpu.memory_space<vmem>>, vector<1x16x24xf32>,
    %c224 = arith.constant 224 : index
    %c0_59 = arith.constant 0 : index
    %69 = vector.load %arg9[%c224, %c0_59] : memref<256x24xf32, #tpu.memory_space<vmem>>, vector<16x24xf32>
    %c14 = arith.constant 14 : index
    %c1_60 = arith.constant 1 : index
    %c0_61 = arith.constant 0 : index
    %70 = vector.load %arg10[%c14, %c1_60, %c0_61] : memref<16x18x24xf32, #tpu.memory_space<vmem>>, vector<1x16x24xf32>
    %71 = vector.shape_cast %70 : vector<1x16x24xf32> to vector<16x24xf32>
    %72 = vector.shape_cast %69 : vector<16x24xf32> to vector<1x16x24xf32>
    tpu.vector_store %arg10[%c14, %c1_60, %c0_61], %72 {strides = array<i32>} : memref<16x18x24xf32, #tpu.memory_space<vmem>>, vector<1x16x24xf32>,
    %c240 = arith.constant 240 : index
    %c0_62 = arith.constant 0 : index
    %73 = vector.load %arg9[%c240, %c0_62] : memref<256x24xf32, #tpu.memory_space<vmem>>, vector<16x24xf32>
    %c15 = arith.constant 15 : index
    %c1_63 = arith.constant 1 : index
    %c0_64 = arith.constant 0 : index
    %74 = vector.load %arg10[%c15, %c1_63, %c0_64] : memref<16x18x24xf32, #tpu.memory_space<vmem>>, vector<1x16x24xf32>
    %75 = vector.shape_cast %74 : vector<1x16x24xf32> to vector<16x24xf32>
    %76 = vector.shape_cast %73 : vector<16x24xf32> to vector<1x16x24xf32>
    tpu.vector_store %arg10[%c15, %c1_63, %c0_64], %76 {strides = array<i32>} : memref<16x18x24xf32, #tpu.memory_space<vmem>>, vector<1x16x24xf32>,
    %c0_65 = arith.constant 0 : index
    %c0_66 = arith.constant 0 : index
    %77 = vector.load %arg5[%c0_65, %c0_66] : memref<1x24xf32, #tpu.memory_space<vmem>>, vector<1x24xf32>
    %c0_67 = arith.constant 0 : index
    %c0_68 = arith.constant 0 : index
    %c0_69 = arith.constant 0 : index
    %78 = vector.load %arg10[%c0_67, %c0_68, %c0_69] : memref<16x18x24xf32, #tpu.memory_space<vmem>>, vector<1x18x24xf32>
    %79 = vector.shape_cast %78 : vector<1x18x24xf32> to vector<18x24xf32>
    %80 = vector.extract_strided_slice %79 {offsets = [0, 0], sizes = [16, 24], strides = [1, 1]} : vector<18x24xf32> to vector<16x24xf32>
    %c3_70 = arith.constant 3 : index
    %c0_71 = arith.constant 0 : index
    %81 = vector.load %arg4[%c3_70, %c0_71] : memref<9x24xf32, #tpu.memory_space<vmem>>, vector<1x24xf32>
    %82 = vector.broadcast %81 : vector<1x24xf32> to vector<16x24xf32>
    %83 = arith.mulf %80, %82 : vector<16x24xf32>
    %84 = vector.extract_strided_slice %79 {offsets = [1, 0], sizes = [16, 24], strides = [1, 1]} : vector<18x24xf32> to vector<16x24xf32>
    %c4_72 = arith.constant 4 : index
    %c0_73 = arith.constant 0 : index
    %85 = vector.load %arg4[%c4_72, %c0_73] : memref<9x24xf32, #tpu.memory_space<vmem>>, vector<1x24xf32>
    %86 = vector.broadcast %85 : vector<1x24xf32> to vector<16x24xf32>
    %87 = arith.mulf %84, %86 : vector<16x24xf32>
    %88 = arith.addf %83, %87 : vector<16x24xf32>
    %89 = vector.extract_strided_slice %79 {offsets = [2, 0], sizes = [16, 24], strides = [1, 1]} : vector<18x24xf32> to vector<16x24xf32>
    %c5_74 = arith.constant 5 : index
    %c0_75 = arith.constant 0 : index
    %90 = vector.load %arg4[%c5_74, %c0_75] : memref<9x24xf32, #tpu.memory_space<vmem>>, vector<1x24xf32>
    %91 = vector.broadcast %90 : vector<1x24xf32> to vector<16x24xf32>
    %92 = arith.mulf %89, %91 : vector<16x24xf32>
    %93 = arith.addf %88, %92 : vector<16x24xf32>
    %c1_76 = arith.constant 1 : index
    %c0_77 = arith.constant 0 : index
    %c0_78 = arith.constant 0 : index
    %94 = vector.load %arg10[%c1_76, %c0_77, %c0_78] : memref<16x18x24xf32, #tpu.memory_space<vmem>>, vector<1x18x24xf32>
    %95 = vector.shape_cast %94 : vector<1x18x24xf32> to vector<18x24xf32>
    %96 = vector.extract_strided_slice %95 {offsets = [0, 0], sizes = [16, 24], strides = [1, 1]} : vector<18x24xf32> to vector<16x24xf32>
    %c6_79 = arith.constant 6 : index
    %c0_80 = arith.constant 0 : index
    %97 = vector.load %arg4[%c6_79, %c0_80] : memref<9x24xf32, #tpu.memory_space<vmem>>, vector<1x24xf32>
    %98 = vector.broadcast %97 : vector<1x24xf32> to vector<16x24xf32>
    %99 = arith.mulf %96, %98 : vector<16x24xf32>
    %100 = arith.addf %93, %99 : vector<16x24xf32>
    %101 = vector.extract_strided_slice %95 {offsets = [1, 0], sizes = [16, 24], strides = [1, 1]} : vector<18x24xf32> to vector<16x24xf32>
    %c7_81 = arith.constant 7 : index
    %c0_82 = arith.constant 0 : index
    %102 = vector.load %arg4[%c7_81, %c0_82] : memref<9x24xf32, #tpu.memory_space<vmem>>, vector<1x24xf32>
    %103 = vector.broadcast %102 : vector<1x24xf32> to vector<16x24xf32>
    %104 = arith.mulf %101, %103 : vector<16x24xf32>
    %105 = arith.addf %100, %104 : vector<16x24xf32>
    %106 = vector.extract_strided_slice %95 {offsets = [2, 0], sizes = [16, 24], strides = [1, 1]} : vector<18x24xf32> to vector<16x24xf32>
    %c8_83 = arith.constant 8 : index
    %c0_84 = arith.constant 0 : index
    %107 = vector.load %arg4[%c8_83, %c0_84] : memref<9x24xf32, #tpu.memory_space<vmem>>, vector<1x24xf32>
    %108 = vector.broadcast %107 : vector<1x24xf32> to vector<16x24xf32>
    %109 = arith.mulf %106, %108 : vector<16x24xf32>
    %110 = arith.addf %105, %109 : vector<16x24xf32>
    %111 = vector.broadcast %77 : vector<1x24xf32> to vector<16x24xf32>
    %112 = arith.addf %110, %111 : vector<16x24xf32>
    %cst_85 = arith.constant 0.000000e+00 : f32
    %113 = vector.broadcast %cst_85 : f32 to vector<16x24xf32>
    %114 = arith.maximumf %112, %113 : vector<16x24xf32>
    %115 = arith.truncf %114 : vector<16x24xf32> to vector<16x24xbf16>
    %c0_86 = arith.constant 0 : index
    %c0_87 = arith.constant 0 : index
    %116 = vector.load %arg11[%c0_86, %c0_87] : memref<256x24xbf16, #tpu.memory_space<vmem>>, vector<16x24xbf16>
    tpu.vector_store %arg11[%c0_86, %c0_87], %115 {strides = array<i32>} : memref<256x24xbf16, #tpu.memory_space<vmem>>, vector<16x24xbf16>,
    %c0_88 = arith.constant 0 : index
    %c0_89 = arith.constant 0 : index
    %c0_90 = arith.constant 0 : index
    %117 = vector.load %arg10[%c0_88, %c0_89, %c0_90] : memref<16x18x24xf32, #tpu.memory_space<vmem>>, vector<1x18x24xf32>
    %118 = vector.shape_cast %117 : vector<1x18x24xf32> to vector<18x24xf32>
    %119 = vector.extract_strided_slice %118 {offsets = [0, 0], sizes = [16, 24], strides = [1, 1]} : vector<18x24xf32> to vector<16x24xf32>
    %c0_91 = arith.constant 0 : index
    %c0_92 = arith.constant 0 : index
    %120 = vector.load %arg4[%c0_91, %c0_92] : memref<9x24xf32, #tpu.memory_space<vmem>>, vector<1x24xf32>
    %121 = vector.broadcast %120 : vector<1x24xf32> to vector<16x24xf32>
    %122 = arith.mulf %119, %121 : vector<16x24xf32>
    %123 = vector.extract_strided_slice %118 {offsets = [1, 0], sizes = [16, 24], strides = [1, 1]} : vector<18x24xf32> to vector<16x24xf32>
    %c1_93 = arith.constant 1 : index
    %c0_94 = arith.constant 0 : index
    %124 = vector.load %arg4[%c1_93, %c0_94] : memref<9x24xf32, #tpu.memory_space<vmem>>, vector<1x24xf32>
    %125 = vector.broadcast %124 : vector<1x24xf32> to vector<16x24xf32>
    %126 = arith.mulf %123, %125 : vector<16x24xf32>
    %127 = arith.addf %122, %126 : vector<16x24xf32>
    %128 = vector.extract_strided_slice %118 {offsets = [2, 0], sizes = [16, 24], strides = [1, 1]} : vector<18x24xf32> to vector<16x24xf32>
    %c2_95 = arith.constant 2 : index
    %c0_96 = arith.constant 0 : index
    %129 = vector.load %arg4[%c2_95, %c0_96] : memref<9x24xf32, #tpu.memory_space<vmem>>, vector<1x24xf32>
    %130 = vector.broadcast %129 : vector<1x24xf32> to vector<16x24xf32>
    %131 = arith.mulf %128, %130 : vector<16x24xf32>
    %132 = arith.addf %127, %131 : vector<16x24xf32>
    %c1_97 = arith.constant 1 : index
    %c0_98 = arith.constant 0 : index
    %c0_99 = arith.constant 0 : index
    %133 = vector.load %arg10[%c1_97, %c0_98, %c0_99] : memref<16x18x24xf32, #tpu.memory_space<vmem>>, vector<1x18x24xf32>
    %134 = vector.shape_cast %133 : vector<1x18x24xf32> to vector<18x24xf32>
    %135 = vector.extract_strided_slice %134 {offsets = [0, 0], sizes = [16, 24], strides = [1, 1]} : vector<18x24xf32> to vector<16x24xf32>
    %c3_100 = arith.constant 3 : index
    %c0_101 = arith.constant 0 : index
    %136 = vector.load %arg4[%c3_100, %c0_101] : memref<9x24xf32, #tpu.memory_space<vmem>>, vector<1x24xf32>
    %137 = vector.broadcast %136 : vector<1x24xf32> to vector<16x24xf32>
    %138 = arith.mulf %135, %137 : vector<16x24xf32>
    %139 = arith.addf %132, %138 : vector<16x24xf32>
    %140 = vector.extract_strided_slice %134 {offsets = [1, 0], sizes = [16, 24], strides = [1, 1]} : vector<18x24xf32> to vector<16x24xf32>
    %c4_102 = arith.constant 4 : index
    %c0_103 = arith.constant 0 : index
    %141 = vector.load %arg4[%c4_102, %c0_103] : memref<9x24xf32, #tpu.memory_space<vmem>>, vector<1x24xf32>
    %142 = vector.broadcast %141 : vector<1x24xf32> to vector<16x24xf32>
    %143 = arith.mulf %140, %142 : vector<16x24xf32>
    %144 = arith.addf %139, %143 : vector<16x24xf32>
    %145 = vector.extract_strided_slice %134 {offsets = [2, 0], sizes = [16, 24], strides = [1, 1]} : vector<18x24xf32> to vector<16x24xf32>
    %c5_104 = arith.constant 5 : index
    %c0_105 = arith.constant 0 : index
    %146 = vector.load %arg4[%c5_104, %c0_105] : memref<9x24xf32, #tpu.memory_space<vmem>>, vector<1x24xf32>
    %147 = vector.broadcast %146 : vector<1x24xf32> to vector<16x24xf32>
    %148 = arith.mulf %145, %147 : vector<16x24xf32>
    %149 = arith.addf %144, %148 : vector<16x24xf32>
    %c2_106 = arith.constant 2 : index
    %c0_107 = arith.constant 0 : index
    %c0_108 = arith.constant 0 : index
    %150 = vector.load %arg10[%c2_106, %c0_107, %c0_108] : memref<16x18x24xf32, #tpu.memory_space<vmem>>, vector<1x18x24xf32>
    %151 = vector.shape_cast %150 : vector<1x18x24xf32> to vector<18x24xf32>
    %152 = vector.extract_strided_slice %151 {offsets = [0, 0], sizes = [16, 24], strides = [1, 1]} : vector<18x24xf32> to vector<16x24xf32>
    %c6_109 = arith.constant 6 : index
    %c0_110 = arith.constant 0 : index
    %153 = vector.load %arg4[%c6_109, %c0_110] : memref<9x24xf32, #tpu.memory_space<vmem>>, vector<1x24xf32>
    %154 = vector.broadcast %153 : vector<1x24xf32> to vector<16x24xf32>
    %155 = arith.mulf %152, %154 : vector<16x24xf32>
    %156 = arith.addf %149, %155 : vector<16x24xf32>
    %157 = vector.extract_strided_slice %151 {offsets = [1, 0], sizes = [16, 24], strides = [1, 1]} : vector<18x24xf32> to vector<16x24xf32>
    %c7_111 = arith.constant 7 : index
    %c0_112 = arith.constant 0 : index
    %158 = vector.load %arg4[%c7_111, %c0_112] : memref<9x24xf32, #tpu.memory_space<vmem>>, vector<1x24xf32>
    %159 = vector.broadcast %158 : vector<1x24xf32> to vector<16x24xf32>
    %160 = arith.mulf %157, %159 : vector<16x24xf32>
    %161 = arith.addf %156, %160 : vector<16x24xf32>
    %162 = vector.extract_strided_slice %151 {offsets = [2, 0], sizes = [16, 24], strides = [1, 1]} : vector<18x24xf32> to vector<16x24xf32>
    %c8_113 = arith.constant 8 : index
    %c0_114 = arith.constant 0 : index
    %163 = vector.load %arg4[%c8_113, %c0_114] : memref<9x24xf32, #tpu.memory_space<vmem>>, vector<1x24xf32>
    %164 = vector.broadcast %163 : vector<1x24xf32> to vector<16x24xf32>
    %165 = arith.mulf %162, %164 : vector<16x24xf32>
    %166 = arith.addf %161, %165 : vector<16x24xf32>
    %167 = vector.broadcast %77 : vector<1x24xf32> to vector<16x24xf32>
    %168 = arith.addf %166, %167 : vector<16x24xf32>
    %cst_115 = arith.constant 0.000000e+00 : f32
    %169 = vector.broadcast %cst_115 : f32 to vector<16x24xf32>
    %170 = arith.maximumf %168, %169 : vector<16x24xf32>
    %171 = arith.truncf %170 : vector<16x24xf32> to vector<16x24xbf16>
    %c16_116 = arith.constant 16 : index
    %c0_117 = arith.constant 0 : index
    %172 = vector.load %arg11[%c16_116, %c0_117] : memref<256x24xbf16, #tpu.memory_space<vmem>>, vector<16x24xbf16>
    tpu.vector_store %arg11[%c16_116, %c0_117], %171 {strides = array<i32>} : memref<256x24xbf16, #tpu.memory_space<vmem>>, vector<16x24xbf16>,
    %c1_118 = arith.constant 1 : index
    %c0_119 = arith.constant 0 : index
    %c0_120 = arith.constant 0 : index
    %173 = vector.load %arg10[%c1_118, %c0_119, %c0_120] : memref<16x18x24xf32, #tpu.memory_space<vmem>>, vector<1x18x24xf32>
    %174 = vector.shape_cast %173 : vector<1x18x24xf32> to vector<18x24xf32>
    %175 = vector.extract_strided_slice %174 {offsets = [0, 0], sizes = [16, 24], strides = [1, 1]} : vector<18x24xf32> to vector<16x24xf32>
    %c0_121 = arith.constant 0 : index
    %c0_122 = arith.constant 0 : index
    %176 = vector.load %arg4[%c0_121, %c0_122] : memref<9x24xf32, #tpu.memory_space<vmem>>, vector<1x24xf32>
    %177 = vector.broadcast %176 : vector<1x24xf32> to vector<16x24xf32>
    %178 = arith.mulf %175, %177 : vector<16x24xf32>
    %179 = vector.extract_strided_slice %174 {offsets = [1, 0], sizes = [16, 24], strides = [1, 1]} : vector<18x24xf32> to vector<16x24xf32>
    %c1_123 = arith.constant 1 : index
    %c0_124 = arith.constant 0 : index
    %180 = vector.load %arg4[%c1_123, %c0_124] : memref<9x24xf32, #tpu.memory_space<vmem>>, vector<1x24xf32>
    %181 = vector.broadcast %180 : vector<1x24xf32> to vector<16x24xf32>
    %182 = arith.mulf %179, %181 : vector<16x24xf32>
    %183 = arith.addf %178, %182 : vector<16x24xf32>
    %184 = vector.extract_strided_slice %174 {offsets = [2, 0], sizes = [16, 24], strides = [1, 1]} : vector<18x24xf32> to vector<16x24xf32>
    %c2_125 = arith.constant 2 : index
    %c0_126 = arith.constant 0 : index
    %185 = vector.load %arg4[%c2_125, %c0_126] : memref<9x24xf32, #tpu.memory_space<vmem>>, vector<1x24xf32>
    %186 = vector.broadcast %185 : vector<1x24xf32> to vector<16x24xf32>
    %187 = arith.mulf %184, %186 : vector<16x24xf32>
    %188 = arith.addf %183, %187 : vector<16x24xf32>
    %c2_127 = arith.constant 2 : index
    %c0_128 = arith.constant 0 : index
    %c0_129 = arith.constant 0 : index
    %189 = vector.load %arg10[%c2_127, %c0_128, %c0_129] : memref<16x18x24xf32, #tpu.memory_space<vmem>>, vector<1x18x24xf32>
    %190 = vector.shape_cast %189 : vector<1x18x24xf32> to vector<18x24xf32>
    %191 = vector.extract_strided_slice %190 {offsets = [0, 0], sizes = [16, 24], strides = [1, 1]} : vector<18x24xf32> to vector<16x24xf32>
    %c3_130 = arith.constant 3 : index
    %c0_131 = arith.constant 0 : index
    %192 = vector.load %arg4[%c3_130, %c0_131] : memref<9x24xf32, #tpu.memory_space<vmem>>, vector<1x24xf32>
    %193 = vector.broadcast %192 : vector<1x24xf32> to vector<16x24xf32>
    %194 = arith.mulf %191, %193 : vector<16x24xf32>
    %195 = arith.addf %188, %194 : vector<16x24xf32>
    %196 = vector.extract_strided_slice %190 {offsets = [1, 0], sizes = [16, 24], strides = [1, 1]} : vector<18x24xf32> to vector<16x24xf32>
    %c4_132 = arith.constant 4 : index
    %c0_133 = arith.constant 0 : index
    %197 = vector.load %arg4[%c4_132, %c0_133] : memref<9x24xf32, #tpu.memory_space<vmem>>, vector<1x24xf32>
    %198 = vector.broadcast %197 : vector<1x24xf32> to vector<16x24xf32>
    %199 = arith.mulf %196, %198 : vector<16x24xf32>
    %200 = arith.addf %195, %199 : vector<16x24xf32>
    %201 = vector.extract_strided_slice %190 {offsets = [2, 0], sizes = [16, 24], strides = [1, 1]} : vector<18x24xf32> to vector<16x24xf32>
    %c5_134 = arith.constant 5 : index
    %c0_135 = arith.constant 0 : index
    %202 = vector.load %arg4[%c5_134, %c0_135] : memref<9x24xf32, #tpu.memory_space<vmem>>, vector<1x24xf32>
    %203 = vector.broadcast %202 : vector<1x24xf32> to vector<16x24xf32>
    %204 = arith.mulf %201, %203 : vector<16x24xf32>
    %205 = arith.addf %200, %204 : vector<16x24xf32>
    %c3_136 = arith.constant 3 : index
    %c0_137 = arith.constant 0 : index
    %c0_138 = arith.constant 0 : index
    %206 = vector.load %arg10[%c3_136, %c0_137, %c0_138] : memref<16x18x24xf32, #tpu.memory_space<vmem>>, vector<1x18x24xf32>
    %207 = vector.shape_cast %206 : vector<1x18x24xf32> to vector<18x24xf32>
    %208 = vector.extract_strided_slice %207 {offsets = [0, 0], sizes = [16, 24], strides = [1, 1]} : vector<18x24xf32> to vector<16x24xf32>
    %c6_139 = arith.constant 6 : index
    %c0_140 = arith.constant 0 : index
    %209 = vector.load %arg4[%c6_139, %c0_140] : memref<9x24xf32, #tpu.memory_space<vmem>>, vector<1x24xf32>
    %210 = vector.broadcast %209 : vector<1x24xf32> to vector<16x24xf32>
    %211 = arith.mulf %208, %210 : vector<16x24xf32>
    %212 = arith.addf %205, %211 : vector<16x24xf32>
    %213 = vector.extract_strided_slice %207 {offsets = [1, 0], sizes = [16, 24], strides = [1, 1]} : vector<18x24xf32> to vector<16x24xf32>
    %c7_141 = arith.constant 7 : index
    %c0_142 = arith.constant 0 : index
    %214 = vector.load %arg4[%c7_141, %c0_142] : memref<9x24xf32, #tpu.memory_space<vmem>>, vector<1x24xf32>
    %215 = vector.broadcast %214 : vector<1x24xf32> to vector<16x24xf32>
    %216 = arith.mulf %213, %215 : vector<16x24xf32>
    %217 = arith.addf %212, %216 : vector<16x24xf32>
    %218 = vector.extract_strided_slice %207 {offsets = [2, 0], sizes = [16, 24], strides = [1, 1]} : vector<18x24xf32> to vector<16x24xf32>
    %c8_143 = arith.constant 8 : index
    %c0_144 = arith.constant 0 : index
    %219 = vector.load %arg4[%c8_143, %c0_144] : memref<9x24xf32, #tpu.memory_space<vmem>>, vector<1x24xf32>
    %220 = vector.broadcast %219 : vector<1x24xf32> to vector<16x24xf32>
    %221 = arith.mulf %218, %220 : vector<16x24xf32>
    %222 = arith.addf %217, %221 : vector<16x24xf32>
    %223 = vector.broadcast %77 : vector<1x24xf32> to vector<16x24xf32>
    %224 = arith.addf %222, %223 : vector<16x24xf32>
    %cst_145 = arith.constant 0.000000e+00 : f32
    %225 = vector.broadcast %cst_145 : f32 to vector<16x24xf32>
    %226 = arith.maximumf %224, %225 : vector<16x24xf32>
    %227 = arith.truncf %226 : vector<16x24xf32> to vector<16x24xbf16>
    %c32_146 = arith.constant 32 : index
    %c0_147 = arith.constant 0 : index
    %228 = vector.load %arg11[%c32_146, %c0_147] : memref<256x24xbf16, #tpu.memory_space<vmem>>, vector<16x24xbf16>
    tpu.vector_store %arg11[%c32_146, %c0_147], %227 {strides = array<i32>} : memref<256x24xbf16, #tpu.memory_space<vmem>>, vector<16x24xbf16>,
    %c2_148 = arith.constant 2 : index
    %c0_149 = arith.constant 0 : index
    %c0_150 = arith.constant 0 : index
    %229 = vector.load %arg10[%c2_148, %c0_149, %c0_150] : memref<16x18x24xf32, #tpu.memory_space<vmem>>, vector<1x18x24xf32>
    %230 = vector.shape_cast %229 : vector<1x18x24xf32> to vector<18x24xf32>
    %231 = vector.extract_strided_slice %230 {offsets = [0, 0], sizes = [16, 24], strides = [1, 1]} : vector<18x24xf32> to vector<16x24xf32>
    %c0_151 = arith.constant 0 : index
    %c0_152 = arith.constant 0 : index
    %232 = vector.load %arg4[%c0_151, %c0_152] : memref<9x24xf32, #tpu.memory_space<vmem>>, vector<1x24xf32>
    %233 = vector.broadcast %232 : vector<1x24xf32> to vector<16x24xf32>
    %234 = arith.mulf %231, %233 : vector<16x24xf32>
    %235 = vector.extract_strided_slice %230 {offsets = [1, 0], sizes = [16, 24], strides = [1, 1]} : vector<18x24xf32> to vector<16x24xf32>
    %c1_153 = arith.constant 1 : index
    %c0_154 = arith.constant 0 : index
    %236 = vector.load %arg4[%c1_153, %c0_154] : memref<9x24xf32, #tpu.memory_space<vmem>>, vector<1x24xf32>
    %237 = vector.broadcast %236 : vector<1x24xf32> to vector<16x24xf32>
    %238 = arith.mulf %235, %237 : vector<16x24xf32>
    %239 = arith.addf %234, %238 : vector<16x24xf32>
    %240 = vector.extract_strided_slice %230 {offsets = [2, 0], sizes = [16, 24], strides = [1, 1]} : vector<18x24xf32> to vector<16x24xf32>
    %c2_155 = arith.constant 2 : index
    %c0_156 = arith.constant 0 : index
    %241 = vector.load %arg4[%c2_155, %c0_156] : memref<9x24xf32, #tpu.memory_space<vmem>>, vector<1x24xf32>
    %242 = vector.broadcast %241 : vector<1x24xf32> to vector<16x24xf32>
    %243 = arith.mulf %240, %242 : vector<16x24xf32>
    %244 = arith.addf %239, %243 : vector<16x24xf32>
    %c3_157 = arith.constant 3 : index
    %c0_158 = arith.constant 0 : index
    %c0_159 = arith.constant 0 : index
    %245 = vector.load %arg10[%c3_157, %c0_158, %c0_159] : memref<16x18x24xf32, #tpu.memory_space<vmem>>, vector<1x18x24xf32>
    %246 = vector.shape_cast %245 : vector<1x18x24xf32> to vector<18x24xf32>
    %247 = vector.extract_strided_slice %246 {offsets = [0, 0], sizes = [16, 24], strides = [1, 1]} : vector<18x24xf32> to vector<16x24xf32>
    %c3_160 = arith.constant 3 : index
    %c0_161 = arith.constant 0 : index
    %248 = vector.load %arg4[%c3_160, %c0_161] : memref<9x24xf32, #tpu.memory_space<vmem>>, vector<1x24xf32>
    %249 = vector.broadcast %248 : vector<1x24xf32> to vector<16x24xf32>
    %250 = arith.mulf %247, %249 : vector<16x24xf32>
    %251 = arith.addf %244, %250 : vector<16x24xf32>
    %252 = vector.extract_strided_slice %246 {offsets = [1, 0], sizes = [16, 24], strides = [1, 1]} : vector<18x24xf32> to vector<16x24xf32>
    %c4_162 = arith.constant 4 : index
    %c0_163 = arith.constant 0 : index
    %253 = vector.load %arg4[%c4_162, %c0_163] : memref<9x24xf32, #tpu.memory_space<vmem>>, vector<1x24xf32>
    %254 = vector.broadcast %253 : vector<1x24xf32> to vector<16x24xf32>
    %255 = arith.mulf %252, %254 : vector<16x24xf32>
    %256 = arith.addf %251, %255 : vector<16x24xf32>
    %257 = vector.extract_strided_slice %246 {offsets = [2, 0], sizes = [16, 24], strides = [1, 1]} : vector<18x24xf32> to vector<16x24xf32>
    %c5_164 = arith.constant 5 : index
    %c0_165 = arith.constant 0 : index
    %258 = vector.load %arg4[%c5_164, %c0_165] : memref<9x24xf32, #tpu.memory_space<vmem>>, vector<1x24xf32>
    %259 = vector.broadcast %258 : vector<1x24xf32> to vector<16x24xf32>
    %260 = arith.mulf %257, %259 : vector<16x24xf32>
    %261 = arith.addf %256, %260 : vector<16x24xf32>
    %c4_166 = arith.constant 4 : index
    %c0_167 = arith.constant 0 : index
    %c0_168 = arith.constant 0 : index
    %262 = vector.load %arg10[%c4_166, %c0_167, %c0_168] : memref<16x18x24xf32, #tpu.memory_space<vmem>>, vector<1x18x24xf32>
    %263 = vector.shape_cast %262 : vector<1x18x24xf32> to vector<18x24xf32>
    %264 = vector.extract_strided_slice %263 {offsets = [0, 0], sizes = [16, 24], strides = [1, 1]} : vector<18x24xf32> to vector<16x24xf32>
    %c6_169 = arith.constant 6 : index
    %c0_170 = arith.constant 0 : index
    %265 = vector.load %arg4[%c6_169, %c0_170] : memref<9x24xf32, #tpu.memory_space<vmem>>, vector<1x24xf32>
    %266 = vector.broadcast %265 : vector<1x24xf32> to vector<16x24xf32>
    %267 = arith.mulf %264, %266 : vector<16x24xf32>
    %268 = arith.addf %261, %267 : vector<16x24xf32>
    %269 = vector.extract_strided_slice %263 {offsets = [1, 0], sizes = [16, 24], strides = [1, 1]} : vector<18x24xf32> to vector<16x24xf32>
    %c7_171 = arith.constant 7 : index
    %c0_172 = arith.constant 0 : index
    %270 = vector.load %arg4[%c7_171, %c0_172] : memref<9x24xf32, #tpu.memory_space<vmem>>, vector<1x24xf32>
    %271 = vector.broadcast %270 : vector<1x24xf32> to vector<16x24xf32>
    %272 = arith.mulf %269, %271 : vector<16x24xf32>
    %273 = arith.addf %268, %272 : vector<16x24xf32>
    %274 = vector.extract_strided_slice %263 {offsets = [2, 0], sizes = [16, 24], strides = [1, 1]} : vector<18x24xf32> to vector<16x24xf32>
    %c8_173 = arith.constant 8 : index
    %c0_174 = arith.constant 0 : index
    %275 = vector.load %arg4[%c8_173, %c0_174] : memref<9x24xf32, #tpu.memory_space<vmem>>, vector<1x24xf32>
    %276 = vector.broadcast %275 : vector<1x24xf32> to vector<16x24xf32>
    %277 = arith.mulf %274, %276 : vector<16x24xf32>
    %278 = arith.addf %273, %277 : vector<16x24xf32>
    %279 = vector.broadcast %77 : vector<1x24xf32> to vector<16x24xf32>
    %280 = arith.addf %278, %279 : vector<16x24xf32>
    %cst_175 = arith.constant 0.000000e+00 : f32
    %281 = vector.broadcast %cst_175 : f32 to vector<16x24xf32>
    %282 = arith.maximumf %280, %281 : vector<16x24xf32>
    %283 = arith.truncf %282 : vector<16x24xf32> to vector<16x24xbf16>
    %c48_176 = arith.constant 48 : index
    %c0_177 = arith.constant 0 : index
    %284 = vector.load %arg11[%c48_176, %c0_177] : memref<256x24xbf16, #tpu.memory_space<vmem>>, vector<16x24xbf16>
    tpu.vector_store %arg11[%c48_176, %c0_177], %283 {strides = array<i32>} : memref<256x24xbf16, #tpu.memory_space<vmem>>, vector<16x24xbf16>,
    %c3_178 = arith.constant 3 : index
    %c0_179 = arith.constant 0 : index
    %c0_180 = arith.constant 0 : index
    %285 = vector.load %arg10[%c3_178, %c0_179, %c0_180] : memref<16x18x24xf32, #tpu.memory_space<vmem>>, vector<1x18x24xf32>
    %286 = vector.shape_cast %285 : vector<1x18x24xf32> to vector<18x24xf32>
    %287 = vector.extract_strided_slice %286 {offsets = [0, 0], sizes = [16, 24], strides = [1, 1]} : vector<18x24xf32> to vector<16x24xf32>
    %c0_181 = arith.constant 0 : index
    %c0_182 = arith.constant 0 : index
    %288 = vector.load %arg4[%c0_181, %c0_182] : memref<9x24xf32, #tpu.memory_space<vmem>>, vector<1x24xf32>
    %289 = vector.broadcast %288 : vector<1x24xf32> to vector<16x24xf32>
    %290 = arith.mulf %287, %289 : vector<16x24xf32>
    %291 = vector.extract_strided_slice %286 {offsets = [1, 0], sizes = [16, 24], strides = [1, 1]} : vector<18x24xf32> to vector<16x24xf32>
    %c1_183 = arith.constant 1 : index
    %c0_184 = arith.constant 0 : index
    %292 = vector.load %arg4[%c1_183, %c0_184] : memref<9x24xf32, #tpu.memory_space<vmem>>, vector<1x24xf32>
    %293 = vector.broadcast %292 : vector<1x24xf32> to vector<16x24xf32>
    %294 = arith.mulf %291, %293 : vector<16x24xf32>
    %295 = arith.addf %290, %294 : vector<16x24xf32>
    %296 = vector.extract_strided_slice %286 {offsets = [2, 0], sizes = [16, 24], strides = [1, 1]} : vector<18x24xf32> to vector<16x24xf32>
    %c2_185 = arith.constant 2 : index
    %c0_186 = arith.constant 0 : index
    %297 = vector.load %arg4[%c2_185, %c0_186] : memref<9x24xf32, #tpu.memory_space<vmem>>, vector<1x24xf32>
    %298 = vector.broadcast %297 : vector<1x24xf32> to vector<16x24xf32>
    %299 = arith.mulf %296, %298 : vector<16x24xf32>
    %300 = arith.addf %295, %299 : vector<16x24xf32>
    %c4_187 = arith.constant 4 : index
    %c0_188 = arith.constant 0 : index
    %c0_189 = arith.constant 0 : index
    %301 = vector.load %arg10[%c4_187, %c0_188, %c0_189] : memref<16x18x24xf32, #tpu.memory_space<vmem>>, vector<1x18x24xf32>
    %302 = vector.shape_cast %301 : vector<1x18x24xf32> to vector<18x24xf32>
    %303 = vector.extract_strided_slice %302 {offsets = [0, 0], sizes = [16, 24], strides = [1, 1]} : vector<18x24xf32> to vector<16x24xf32>
    %c3_190 = arith.constant 3 : index
    %c0_191 = arith.constant 0 : index
    %304 = vector.load %arg4[%c3_190, %c0_191] : memref<9x24xf32, #tpu.memory_space<vmem>>, vector<1x24xf32>
    %305 = vector.broadcast %304 : vector<1x24xf32> to vector<16x24xf32>
    %306 = arith.mulf %303, %305 : vector<16x24xf32>
    %307 = arith.addf %300, %306 : vector<16x24xf32>
    %308 = vector.extract_strided_slice %302 {offsets = [1, 0], sizes = [16, 24], strides = [1, 1]} : vector<18x24xf32> to vector<16x24xf32>
    %c4_192 = arith.constant 4 : index
    %c0_193 = arith.constant 0 : index
    %309 = vector.load %arg4[%c4_192, %c0_193] : memref<9x24xf32, #tpu.memory_space<vmem>>, vector<1x24xf32>
    %310 = vector.broadcast %309 : vector<1x24xf32> to vector<16x24xf32>
    %311 = arith.mulf %308, %310 : vector<16x24xf32>
    %312 = arith.addf %307, %311 : vector<16x24xf32>
    %313 = vector.extract_strided_slice %302 {offsets = [2, 0], sizes = [16, 24], strides = [1, 1]} : vector<18x24xf32> to vector<16x24xf32>
    %c5_194 = arith.constant 5 : index
    %c0_195 = arith.constant 0 : index
    %314 = vector.load %arg4[%c5_194, %c0_195] : memref<9x24xf32, #tpu.memory_space<vmem>>, vector<1x24xf32>
    %315 = vector.broadcast %314 : vector<1x24xf32> to vector<16x24xf32>
    %316 = arith.mulf %313, %315 : vector<16x24xf32>
    %317 = arith.addf %312, %316 : vector<16x24xf32>
    %c5_196 = arith.constant 5 : index
    %c0_197 = arith.constant 0 : index
    %c0_198 = arith.constant 0 : index
    %318 = vector.load %arg10[%c5_196, %c0_197, %c0_198] : memref<16x18x24xf32, #tpu.memory_space<vmem>>, vector<1x18x24xf32>
    %319 = vector.shape_cast %318 : vector<1x18x24xf32> to vector<18x24xf32>
    %320 = vector.extract_strided_slice %319 {offsets = [0, 0], sizes = [16, 24], strides = [1, 1]} : vector<18x24xf32> to vector<16x24xf32>
    %c6_199 = arith.constant 6 : index
    %c0_200 = arith.constant 0 : index
    %321 = vector.load %arg4[%c6_199, %c0_200] : memref<9x24xf32, #tpu.memory_space<vmem>>, vector<1x24xf32>
    %322 = vector.broadcast %321 : vector<1x24xf32> to vector<16x24xf32>
    %323 = arith.mulf %320, %322 : vector<16x24xf32>
    %324 = arith.addf %317, %323 : vector<16x24xf32>
    %325 = vector.extract_strided_slice %319 {offsets = [1, 0], sizes = [16, 24], strides = [1, 1]} : vector<18x24xf32> to vector<16x24xf32>
    %c7_201 = arith.constant 7 : index
    %c0_202 = arith.constant 0 : index
    %326 = vector.load %arg4[%c7_201, %c0_202] : memref<9x24xf32, #tpu.memory_space<vmem>>, vector<1x24xf32>
    %327 = vector.broadcast %326 : vector<1x24xf32> to vector<16x24xf32>
    %328 = arith.mulf %325, %327 : vector<16x24xf32>
    %329 = arith.addf %324, %328 : vector<16x24xf32>
    %330 = vector.extract_strided_slice %319 {offsets = [2, 0], sizes = [16, 24], strides = [1, 1]} : vector<18x24xf32> to vector<16x24xf32>
    %c8_203 = arith.constant 8 : index
    %c0_204 = arith.constant 0 : index
    %331 = vector.load %arg4[%c8_203, %c0_204] : memref<9x24xf32, #tpu.memory_space<vmem>>, vector<1x24xf32>
    %332 = vector.broadcast %331 : vector<1x24xf32> to vector<16x24xf32>
    %333 = arith.mulf %330, %332 : vector<16x24xf32>
    %334 = arith.addf %329, %333 : vector<16x24xf32>
    %335 = vector.broadcast %77 : vector<1x24xf32> to vector<16x24xf32>
    %336 = arith.addf %334, %335 : vector<16x24xf32>
    %cst_205 = arith.constant 0.000000e+00 : f32
    %337 = vector.broadcast %cst_205 : f32 to vector<16x24xf32>
    %338 = arith.maximumf %336, %337 : vector<16x24xf32>
    %339 = arith.truncf %338 : vector<16x24xf32> to vector<16x24xbf16>
    %c64_206 = arith.constant 64 : index
    %c0_207 = arith.constant 0 : index
    %340 = vector.load %arg11[%c64_206, %c0_207] : memref<256x24xbf16, #tpu.memory_space<vmem>>, vector<16x24xbf16>
    tpu.vector_store %arg11[%c64_206, %c0_207], %339 {strides = array<i32>} : memref<256x24xbf16, #tpu.memory_space<vmem>>, vector<16x24xbf16>,
    %c4_208 = arith.constant 4 : index
    %c0_209 = arith.constant 0 : index
    %c0_210 = arith.constant 0 : index
    %341 = vector.load %arg10[%c4_208, %c0_209, %c0_210] : memref<16x18x24xf32, #tpu.memory_space<vmem>>, vector<1x18x24xf32>
    %342 = vector.shape_cast %341 : vector<1x18x24xf32> to vector<18x24xf32>
    %343 = vector.extract_strided_slice %342 {offsets = [0, 0], sizes = [16, 24], strides = [1, 1]} : vector<18x24xf32> to vector<16x24xf32>
    %c0_211 = arith.constant 0 : index
    %c0_212 = arith.constant 0 : index
    %344 = vector.load %arg4[%c0_211, %c0_212] : memref<9x24xf32, #tpu.memory_space<vmem>>, vector<1x24xf32>
    %345 = vector.broadcast %344 : vector<1x24xf32> to vector<16x24xf32>
    %346 = arith.mulf %343, %345 : vector<16x24xf32>
    %347 = vector.extract_strided_slice %342 {offsets = [1, 0], sizes = [16, 24], strides = [1, 1]} : vector<18x24xf32> to vector<16x24xf32>
    %c1_213 = arith.constant 1 : index
    %c0_214 = arith.constant 0 : index
    %348 = vector.load %arg4[%c1_213, %c0_214] : memref<9x24xf32, #tpu.memory_space<vmem>>, vector<1x24xf32>
    %349 = vector.broadcast %348 : vector<1x24xf32> to vector<16x24xf32>
    %350 = arith.mulf %347, %349 : vector<16x24xf32>
    %351 = arith.addf %346, %350 : vector<16x24xf32>
    %352 = vector.extract_strided_slice %342 {offsets = [2, 0], sizes = [16, 24], strides = [1, 1]} : vector<18x24xf32> to vector<16x24xf32>
    %c2_215 = arith.constant 2 : index
    %c0_216 = arith.constant 0 : index
    %353 = vector.load %arg4[%c2_215, %c0_216] : memref<9x24xf32, #tpu.memory_space<vmem>>, vector<1x24xf32>
    %354 = vector.broadcast %353 : vector<1x24xf32> to vector<16x24xf32>
    %355 = arith.mulf %352, %354 : vector<16x24xf32>
    %356 = arith.addf %351, %355 : vector<16x24xf32>
    %c5_217 = arith.constant 5 : index
    %c0_218 = arith.constant 0 : index
    %c0_219 = arith.constant 0 : index
    %357 = vector.load %arg10[%c5_217, %c0_218, %c0_219] : memref<16x18x24xf32, #tpu.memory_space<vmem>>, vector<1x18x24xf32>
    %358 = vector.shape_cast %357 : vector<1x18x24xf32> to vector<18x24xf32>
    %359 = vector.extract_strided_slice %358 {offsets = [0, 0], sizes = [16, 24], strides = [1, 1]} : vector<18x24xf32> to vector<16x24xf32>
    %c3_220 = arith.constant 3 : index
    %c0_221 = arith.constant 0 : index
    %360 = vector.load %arg4[%c3_220, %c0_221] : memref<9x24xf32, #tpu.memory_space<vmem>>, vector<1x24xf32>
    %361 = vector.broadcast %360 : vector<1x24xf32> to vector<16x24xf32>
    %362 = arith.mulf %359, %361 : vector<16x24xf32>
    %363 = arith.addf %356, %362 : vector<16x24xf32>
    %364 = vector.extract_strided_slice %358 {offsets = [1, 0], sizes = [16, 24], strides = [1, 1]} : vector<18x24xf32> to vector<16x24xf32>
    %c4_222 = arith.constant 4 : index
    %c0_223 = arith.constant 0 : index
    %365 = vector.load %arg4[%c4_222, %c0_223] : memref<9x24xf32, #tpu.memory_space<vmem>>, vector<1x24xf32>
    %366 = vector.broadcast %365 : vector<1x24xf32> to vector<16x24xf32>
    %367 = arith.mulf %364, %366 : vector<16x24xf32>
    %368 = arith.addf %363, %367 : vector<16x24xf32>
    %369 = vector.extract_strided_slice %358 {offsets = [2, 0], sizes = [16, 24], strides = [1, 1]} : vector<18x24xf32> to vector<16x24xf32>
    %c5_224 = arith.constant 5 : index
    %c0_225 = arith.constant 0 : index
    %370 = vector.load %arg4[%c5_224, %c0_225] : memref<9x24xf32, #tpu.memory_space<vmem>>, vector<1x24xf32>
    %371 = vector.broadcast %370 : vector<1x24xf32> to vector<16x24xf32>
    %372 = arith.mulf %369, %371 : vector<16x24xf32>
    %373 = arith.addf %368, %372 : vector<16x24xf32>
    %c6_226 = arith.constant 6 : index
    %c0_227 = arith.constant 0 : index
    %c0_228 = arith.constant 0 : index
    %374 = vector.load %arg10[%c6_226, %c0_227, %c0_228] : memref<16x18x24xf32, #tpu.memory_space<vmem>>, vector<1x18x24xf32>
    %375 = vector.shape_cast %374 : vector<1x18x24xf32> to vector<18x24xf32>
    %376 = vector.extract_strided_slice %375 {offsets = [0, 0], sizes = [16, 24], strides = [1, 1]} : vector<18x24xf32> to vector<16x24xf32>
    %c6_229 = arith.constant 6 : index
    %c0_230 = arith.constant 0 : index
    %377 = vector.load %arg4[%c6_229, %c0_230] : memref<9x24xf32, #tpu.memory_space<vmem>>, vector<1x24xf32>
    %378 = vector.broadcast %377 : vector<1x24xf32> to vector<16x24xf32>
    %379 = arith.mulf %376, %378 : vector<16x24xf32>
    %380 = arith.addf %373, %379 : vector<16x24xf32>
    %381 = vector.extract_strided_slice %375 {offsets = [1, 0], sizes = [16, 24], strides = [1, 1]} : vector<18x24xf32> to vector<16x24xf32>
    %c7_231 = arith.constant 7 : index
    %c0_232 = arith.constant 0 : index
    %382 = vector.load %arg4[%c7_231, %c0_232] : memref<9x24xf32, #tpu.memory_space<vmem>>, vector<1x24xf32>
    %383 = vector.broadcast %382 : vector<1x24xf32> to vector<16x24xf32>
    %384 = arith.mulf %381, %383 : vector<16x24xf32>
    %385 = arith.addf %380, %384 : vector<16x24xf32>
    %386 = vector.extract_strided_slice %375 {offsets = [2, 0], sizes = [16, 24], strides = [1, 1]} : vector<18x24xf32> to vector<16x24xf32>
    %c8_233 = arith.constant 8 : index
    %c0_234 = arith.constant 0 : index
    %387 = vector.load %arg4[%c8_233, %c0_234] : memref<9x24xf32, #tpu.memory_space<vmem>>, vector<1x24xf32>
    %388 = vector.broadcast %387 : vector<1x24xf32> to vector<16x24xf32>
    %389 = arith.mulf %386, %388 : vector<16x24xf32>
    %390 = arith.addf %385, %389 : vector<16x24xf32>
    %391 = vector.broadcast %77 : vector<1x24xf32> to vector<16x24xf32>
    %392 = arith.addf %390, %391 : vector<16x24xf32>
    %cst_235 = arith.constant 0.000000e+00 : f32
    %393 = vector.broadcast %cst_235 : f32 to vector<16x24xf32>
    %394 = arith.maximumf %392, %393 : vector<16x24xf32>
    %395 = arith.truncf %394 : vector<16x24xf32> to vector<16x24xbf16>
    %c80_236 = arith.constant 80 : index
    %c0_237 = arith.constant 0 : index
    %396 = vector.load %arg11[%c80_236, %c0_237] : memref<256x24xbf16, #tpu.memory_space<vmem>>, vector<16x24xbf16>
    tpu.vector_store %arg11[%c80_236, %c0_237], %395 {strides = array<i32>} : memref<256x24xbf16, #tpu.memory_space<vmem>>, vector<16x24xbf16>,
    %c5_238 = arith.constant 5 : index
    %c0_239 = arith.constant 0 : index
    %c0_240 = arith.constant 0 : index
    %397 = vector.load %arg10[%c5_238, %c0_239, %c0_240] : memref<16x18x24xf32, #tpu.memory_space<vmem>>, vector<1x18x24xf32>
    %398 = vector.shape_cast %397 : vector<1x18x24xf32> to vector<18x24xf32>
    %399 = vector.extract_strided_slice %398 {offsets = [0, 0], sizes = [16, 24], strides = [1, 1]} : vector<18x24xf32> to vector<16x24xf32>
    %c0_241 = arith.constant 0 : index
    %c0_242 = arith.constant 0 : index
    %400 = vector.load %arg4[%c0_241, %c0_242] : memref<9x24xf32, #tpu.memory_space<vmem>>, vector<1x24xf32>
    %401 = vector.broadcast %400 : vector<1x24xf32> to vector<16x24xf32>
    %402 = arith.mulf %399, %401 : vector<16x24xf32>
    %403 = vector.extract_strided_slice %398 {offsets = [1, 0], sizes = [16, 24], strides = [1, 1]} : vector<18x24xf32> to vector<16x24xf32>
    %c1_243 = arith.constant 1 : index
    %c0_244 = arith.constant 0 : index
    %404 = vector.load %arg4[%c1_243, %c0_244] : memref<9x24xf32, #tpu.memory_space<vmem>>, vector<1x24xf32>
    %405 = vector.broadcast %404 : vector<1x24xf32> to vector<16x24xf32>
    %406 = arith.mulf %403, %405 : vector<16x24xf32>
    %407 = arith.addf %402, %406 : vector<16x24xf32>
    %408 = vector.extract_strided_slice %398 {offsets = [2, 0], sizes = [16, 24], strides = [1, 1]} : vector<18x24xf32> to vector<16x24xf32>
    %c2_245 = arith.constant 2 : index
    %c0_246 = arith.constant 0 : index
    %409 = vector.load %arg4[%c2_245, %c0_246] : memref<9x24xf32, #tpu.memory_space<vmem>>, vector<1x24xf32>
    %410 = vector.broadcast %409 : vector<1x24xf32> to vector<16x24xf32>
    %411 = arith.mulf %408, %410 : vector<16x24xf32>
    %412 = arith.addf %407, %411 : vector<16x24xf32>
    %c6_247 = arith.constant 6 : index
    %c0_248 = arith.constant 0 : index
    %c0_249 = arith.constant 0 : index
    %413 = vector.load %arg10[%c6_247, %c0_248, %c0_249] : memref<16x18x24xf32, #tpu.memory_space<vmem>>, vector<1x18x24xf32>
    %414 = vector.shape_cast %413 : vector<1x18x24xf32> to vector<18x24xf32>
    %415 = vector.extract_strided_slice %414 {offsets = [0, 0], sizes = [16, 24], strides = [1, 1]} : vector<18x24xf32> to vector<16x24xf32>
    %c3_250 = arith.constant 3 : index
    %c0_251 = arith.constant 0 : index
    %416 = vector.load %arg4[%c3_250, %c0_251] : memref<9x24xf32, #tpu.memory_space<vmem>>, vector<1x24xf32>
    %417 = vector.broadcast %416 : vector<1x24xf32> to vector<16x24xf32>
    %418 = arith.mulf %415, %417 : vector<16x24xf32>
    %419 = arith.addf %412, %418 : vector<16x24xf32>
    %420 = vector.extract_strided_slice %414 {offsets = [1, 0], sizes = [16, 24], strides = [1, 1]} : vector<18x24xf32> to vector<16x24xf32>
    %c4_252 = arith.constant 4 : index
    %c0_253 = arith.constant 0 : index
    %421 = vector.load %arg4[%c4_252, %c0_253] : memref<9x24xf32, #tpu.memory_space<vmem>>, vector<1x24xf32>
    %422 = vector.broadcast %421 : vector<1x24xf32> to vector<16x24xf32>
    %423 = arith.mulf %420, %422 : vector<16x24xf32>
    %424 = arith.addf %419, %423 : vector<16x24xf32>
    %425 = vector.extract_strided_slice %414 {offsets = [2, 0], sizes = [16, 24], strides = [1, 1]} : vector<18x24xf32> to vector<16x24xf32>
    %c5_254 = arith.constant 5 : index
    %c0_255 = arith.constant 0 : index
    %426 = vector.load %arg4[%c5_254, %c0_255] : memref<9x24xf32, #tpu.memory_space<vmem>>, vector<1x24xf32>
    %427 = vector.broadcast %426 : vector<1x24xf32> to vector<16x24xf32>
    %428 = arith.mulf %425, %427 : vector<16x24xf32>
    %429 = arith.addf %424, %428 : vector<16x24xf32>
    %c7_256 = arith.constant 7 : index
    %c0_257 = arith.constant 0 : index
    %c0_258 = arith.constant 0 : index
    %430 = vector.load %arg10[%c7_256, %c0_257, %c0_258] : memref<16x18x24xf32, #tpu.memory_space<vmem>>, vector<1x18x24xf32>
    %431 = vector.shape_cast %430 : vector<1x18x24xf32> to vector<18x24xf32>
    %432 = vector.extract_strided_slice %431 {offsets = [0, 0], sizes = [16, 24], strides = [1, 1]} : vector<18x24xf32> to vector<16x24xf32>
    %c6_259 = arith.constant 6 : index
    %c0_260 = arith.constant 0 : index
    %433 = vector.load %arg4[%c6_259, %c0_260] : memref<9x24xf32, #tpu.memory_space<vmem>>, vector<1x24xf32>
    %434 = vector.broadcast %433 : vector<1x24xf32> to vector<16x24xf32>
    %435 = arith.mulf %432, %434 : vector<16x24xf32>
    %436 = arith.addf %429, %435 : vector<16x24xf32>
    %437 = vector.extract_strided_slice %431 {offsets = [1, 0], sizes = [16, 24], strides = [1, 1]} : vector<18x24xf32> to vector<16x24xf32>
    %c7_261 = arith.constant 7 : index
    %c0_262 = arith.constant 0 : index
    %438 = vector.load %arg4[%c7_261, %c0_262] : memref<9x24xf32, #tpu.memory_space<vmem>>, vector<1x24xf32>
    %439 = vector.broadcast %438 : vector<1x24xf32> to vector<16x24xf32>
    %440 = arith.mulf %437, %439 : vector<16x24xf32>
    %441 = arith.addf %436, %440 : vector<16x24xf32>
    %442 = vector.extract_strided_slice %431 {offsets = [2, 0], sizes = [16, 24], strides = [1, 1]} : vector<18x24xf32> to vector<16x24xf32>
    %c8_263 = arith.constant 8 : index
    %c0_264 = arith.constant 0 : index
    %443 = vector.load %arg4[%c8_263, %c0_264] : memref<9x24xf32, #tpu.memory_space<vmem>>, vector<1x24xf32>
    %444 = vector.broadcast %443 : vector<1x24xf32> to vector<16x24xf32>
    %445 = arith.mulf %442, %444 : vector<16x24xf32>
    %446 = arith.addf %441, %445 : vector<16x24xf32>
    %447 = vector.broadcast %77 : vector<1x24xf32> to vector<16x24xf32>
    %448 = arith.addf %446, %447 : vector<16x24xf32>
    %cst_265 = arith.constant 0.000000e+00 : f32
    %449 = vector.broadcast %cst_265 : f32 to vector<16x24xf32>
    %450 = arith.maximumf %448, %449 : vector<16x24xf32>
    %451 = arith.truncf %450 : vector<16x24xf32> to vector<16x24xbf16>
    %c96_266 = arith.constant 96 : index
    %c0_267 = arith.constant 0 : index
    %452 = vector.load %arg11[%c96_266, %c0_267] : memref<256x24xbf16, #tpu.memory_space<vmem>>, vector<16x24xbf16>
    tpu.vector_store %arg11[%c96_266, %c0_267], %451 {strides = array<i32>} : memref<256x24xbf16, #tpu.memory_space<vmem>>, vector<16x24xbf16>,
    %c6_268 = arith.constant 6 : index
    %c0_269 = arith.constant 0 : index
    %c0_270 = arith.constant 0 : index
    %453 = vector.load %arg10[%c6_268, %c0_269, %c0_270] : memref<16x18x24xf32, #tpu.memory_space<vmem>>, vector<1x18x24xf32>
    %454 = vector.shape_cast %453 : vector<1x18x24xf32> to vector<18x24xf32>
    %455 = vector.extract_strided_slice %454 {offsets = [0, 0], sizes = [16, 24], strides = [1, 1]} : vector<18x24xf32> to vector<16x24xf32>
    %c0_271 = arith.constant 0 : index
    %c0_272 = arith.constant 0 : index
    %456 = vector.load %arg4[%c0_271, %c0_272] : memref<9x24xf32, #tpu.memory_space<vmem>>, vector<1x24xf32>
    %457 = vector.broadcast %456 : vector<1x24xf32> to vector<16x24xf32>
    %458 = arith.mulf %455, %457 : vector<16x24xf32>
    %459 = vector.extract_strided_slice %454 {offsets = [1, 0], sizes = [16, 24], strides = [1, 1]} : vector<18x24xf32> to vector<16x24xf32>
    %c1_273 = arith.constant 1 : index
    %c0_274 = arith.constant 0 : index
    %460 = vector.load %arg4[%c1_273, %c0_274] : memref<9x24xf32, #tpu.memory_space<vmem>>, vector<1x24xf32>
    %461 = vector.broadcast %460 : vector<1x24xf32> to vector<16x24xf32>
    %462 = arith.mulf %459, %461 : vector<16x24xf32>
    %463 = arith.addf %458, %462 : vector<16x24xf32>
    %464 = vector.extract_strided_slice %454 {offsets = [2, 0], sizes = [16, 24], strides = [1, 1]} : vector<18x24xf32> to vector<16x24xf32>
    %c2_275 = arith.constant 2 : index
    %c0_276 = arith.constant 0 : index
    %465 = vector.load %arg4[%c2_275, %c0_276] : memref<9x24xf32, #tpu.memory_space<vmem>>, vector<1x24xf32>
    %466 = vector.broadcast %465 : vector<1x24xf32> to vector<16x24xf32>
    %467 = arith.mulf %464, %466 : vector<16x24xf32>
    %468 = arith.addf %463, %467 : vector<16x24xf32>
    %c7_277 = arith.constant 7 : index
    %c0_278 = arith.constant 0 : index
    %c0_279 = arith.constant 0 : index
    %469 = vector.load %arg10[%c7_277, %c0_278, %c0_279] : memref<16x18x24xf32, #tpu.memory_space<vmem>>, vector<1x18x24xf32>
    %470 = vector.shape_cast %469 : vector<1x18x24xf32> to vector<18x24xf32>
    %471 = vector.extract_strided_slice %470 {offsets = [0, 0], sizes = [16, 24], strides = [1, 1]} : vector<18x24xf32> to vector<16x24xf32>
    %c3_280 = arith.constant 3 : index
    %c0_281 = arith.constant 0 : index
    %472 = vector.load %arg4[%c3_280, %c0_281] : memref<9x24xf32, #tpu.memory_space<vmem>>, vector<1x24xf32>
    %473 = vector.broadcast %472 : vector<1x24xf32> to vector<16x24xf32>
    %474 = arith.mulf %471, %473 : vector<16x24xf32>
    %475 = arith.addf %468, %474 : vector<16x24xf32>
    %476 = vector.extract_strided_slice %470 {offsets = [1, 0], sizes = [16, 24], strides = [1, 1]} : vector<18x24xf32> to vector<16x24xf32>
    %c4_282 = arith.constant 4 : index
    %c0_283 = arith.constant 0 : index
    %477 = vector.load %arg4[%c4_282, %c0_283] : memref<9x24xf32, #tpu.memory_space<vmem>>, vector<1x24xf32>
    %478 = vector.broadcast %477 : vector<1x24xf32> to vector<16x24xf32>
    %479 = arith.mulf %476, %478 : vector<16x24xf32>
    %480 = arith.addf %475, %479 : vector<16x24xf32>
    %481 = vector.extract_strided_slice %470 {offsets = [2, 0], sizes = [16, 24], strides = [1, 1]} : vector<18x24xf32> to vector<16x24xf32>
    %c5_284 = arith.constant 5 : index
    %c0_285 = arith.constant 0 : index
    %482 = vector.load %arg4[%c5_284, %c0_285] : memref<9x24xf32, #tpu.memory_space<vmem>>, vector<1x24xf32>
    %483 = vector.broadcast %482 : vector<1x24xf32> to vector<16x24xf32>
    %484 = arith.mulf %481, %483 : vector<16x24xf32>
    %485 = arith.addf %480, %484 : vector<16x24xf32>
    %c8_286 = arith.constant 8 : index
    %c0_287 = arith.constant 0 : index
    %c0_288 = arith.constant 0 : index
    %486 = vector.load %arg10[%c8_286, %c0_287, %c0_288] : memref<16x18x24xf32, #tpu.memory_space<vmem>>, vector<1x18x24xf32>
    %487 = vector.shape_cast %486 : vector<1x18x24xf32> to vector<18x24xf32>
    %488 = vector.extract_strided_slice %487 {offsets = [0, 0], sizes = [16, 24], strides = [1, 1]} : vector<18x24xf32> to vector<16x24xf32>
    %c6_289 = arith.constant 6 : index
    %c0_290 = arith.constant 0 : index
    %489 = vector.load %arg4[%c6_289, %c0_290] : memref<9x24xf32, #tpu.memory_space<vmem>>, vector<1x24xf32>
    %490 = vector.broadcast %489 : vector<1x24xf32> to vector<16x24xf32>
    %491 = arith.mulf %488, %490 : vector<16x24xf32>
    %492 = arith.addf %485, %491 : vector<16x24xf32>
    %493 = vector.extract_strided_slice %487 {offsets = [1, 0], sizes = [16, 24], strides = [1, 1]} : vector<18x24xf32> to vector<16x24xf32>
    %c7_291 = arith.constant 7 : index
    %c0_292 = arith.constant 0 : index
    %494 = vector.load %arg4[%c7_291, %c0_292] : memref<9x24xf32, #tpu.memory_space<vmem>>, vector<1x24xf32>
    %495 = vector.broadcast %494 : vector<1x24xf32> to vector<16x24xf32>
    %496 = arith.mulf %493, %495 : vector<16x24xf32>
    %497 = arith.addf %492, %496 : vector<16x24xf32>
    %498 = vector.extract_strided_slice %487 {offsets = [2, 0], sizes = [16, 24], strides = [1, 1]} : vector<18x24xf32> to vector<16x24xf32>
    %c8_293 = arith.constant 8 : index
    %c0_294 = arith.constant 0 : index
    %499 = vector.load %arg4[%c8_293, %c0_294] : memref<9x24xf32, #tpu.memory_space<vmem>>, vector<1x24xf32>
    %500 = vector.broadcast %499 : vector<1x24xf32> to vector<16x24xf32>
    %501 = arith.mulf %498, %500 : vector<16x24xf32>
    %502 = arith.addf %497, %501 : vector<16x24xf32>
    %503 = vector.broadcast %77 : vector<1x24xf32> to vector<16x24xf32>
    %504 = arith.addf %502, %503 : vector<16x24xf32>
    %cst_295 = arith.constant 0.000000e+00 : f32
    %505 = vector.broadcast %cst_295 : f32 to vector<16x24xf32>
    %506 = arith.maximumf %504, %505 : vector<16x24xf32>
    %507 = arith.truncf %506 : vector<16x24xf32> to vector<16x24xbf16>
    %c112_296 = arith.constant 112 : index
    %c0_297 = arith.constant 0 : index
    %508 = vector.load %arg11[%c112_296, %c0_297] : memref<256x24xbf16, #tpu.memory_space<vmem>>, vector<16x24xbf16>
    tpu.vector_store %arg11[%c112_296, %c0_297], %507 {strides = array<i32>} : memref<256x24xbf16, #tpu.memory_space<vmem>>, vector<16x24xbf16>,
    %c7_298 = arith.constant 7 : index
    %c0_299 = arith.constant 0 : index
    %c0_300 = arith.constant 0 : index
    %509 = vector.load %arg10[%c7_298, %c0_299, %c0_300] : memref<16x18x24xf32, #tpu.memory_space<vmem>>, vector<1x18x24xf32>
    %510 = vector.shape_cast %509 : vector<1x18x24xf32> to vector<18x24xf32>
    %511 = vector.extract_strided_slice %510 {offsets = [0, 0], sizes = [16, 24], strides = [1, 1]} : vector<18x24xf32> to vector<16x24xf32>
    %c0_301 = arith.constant 0 : index
    %c0_302 = arith.constant 0 : index
    %512 = vector.load %arg4[%c0_301, %c0_302] : memref<9x24xf32, #tpu.memory_space<vmem>>, vector<1x24xf32>
    %513 = vector.broadcast %512 : vector<1x24xf32> to vector<16x24xf32>
    %514 = arith.mulf %511, %513 : vector<16x24xf32>
    %515 = vector.extract_strided_slice %510 {offsets = [1, 0], sizes = [16, 24], strides = [1, 1]} : vector<18x24xf32> to vector<16x24xf32>
    %c1_303 = arith.constant 1 : index
    %c0_304 = arith.constant 0 : index
    %516 = vector.load %arg4[%c1_303, %c0_304] : memref<9x24xf32, #tpu.memory_space<vmem>>, vector<1x24xf32>
    %517 = vector.broadcast %516 : vector<1x24xf32> to vector<16x24xf32>
    %518 = arith.mulf %515, %517 : vector<16x24xf32>
    %519 = arith.addf %514, %518 : vector<16x24xf32>
    %520 = vector.extract_strided_slice %510 {offsets = [2, 0], sizes = [16, 24], strides = [1, 1]} : vector<18x24xf32> to vector<16x24xf32>
    %c2_305 = arith.constant 2 : index
    %c0_306 = arith.constant 0 : index
    %521 = vector.load %arg4[%c2_305, %c0_306] : memref<9x24xf32, #tpu.memory_space<vmem>>, vector<1x24xf32>
    %522 = vector.broadcast %521 : vector<1x24xf32> to vector<16x24xf32>
    %523 = arith.mulf %520, %522 : vector<16x24xf32>
    %524 = arith.addf %519, %523 : vector<16x24xf32>
    %c8_307 = arith.constant 8 : index
    %c0_308 = arith.constant 0 : index
    %c0_309 = arith.constant 0 : index
    %525 = vector.load %arg10[%c8_307, %c0_308, %c0_309] : memref<16x18x24xf32, #tpu.memory_space<vmem>>, vector<1x18x24xf32>
    %526 = vector.shape_cast %525 : vector<1x18x24xf32> to vector<18x24xf32>
    %527 = vector.extract_strided_slice %526 {offsets = [0, 0], sizes = [16, 24], strides = [1, 1]} : vector<18x24xf32> to vector<16x24xf32>
    %c3_310 = arith.constant 3 : index
    %c0_311 = arith.constant 0 : index
    %528 = vector.load %arg4[%c3_310, %c0_311] : memref<9x24xf32, #tpu.memory_space<vmem>>, vector<1x24xf32>
    %529 = vector.broadcast %528 : vector<1x24xf32> to vector<16x24xf32>
    %530 = arith.mulf %527, %529 : vector<16x24xf32>
    %531 = arith.addf %524, %530 : vector<16x24xf32>
    %532 = vector.extract_strided_slice %526 {offsets = [1, 0], sizes = [16, 24], strides = [1, 1]} : vector<18x24xf32> to vector<16x24xf32>
    %c4_312 = arith.constant 4 : index
    %c0_313 = arith.constant 0 : index
    %533 = vector.load %arg4[%c4_312, %c0_313] : memref<9x24xf32, #tpu.memory_space<vmem>>, vector<1x24xf32>
    %534 = vector.broadcast %533 : vector<1x24xf32> to vector<16x24xf32>
    %535 = arith.mulf %532, %534 : vector<16x24xf32>
    %536 = arith.addf %531, %535 : vector<16x24xf32>
    %537 = vector.extract_strided_slice %526 {offsets = [2, 0], sizes = [16, 24], strides = [1, 1]} : vector<18x24xf32> to vector<16x24xf32>
    %c5_314 = arith.constant 5 : index
    %c0_315 = arith.constant 0 : index
    %538 = vector.load %arg4[%c5_314, %c0_315] : memref<9x24xf32, #tpu.memory_space<vmem>>, vector<1x24xf32>
    %539 = vector.broadcast %538 : vector<1x24xf32> to vector<16x24xf32>
    %540 = arith.mulf %537, %539 : vector<16x24xf32>
    %541 = arith.addf %536, %540 : vector<16x24xf32>
    %c9_316 = arith.constant 9 : index
    %c0_317 = arith.constant 0 : index
    %c0_318 = arith.constant 0 : index
    %542 = vector.load %arg10[%c9_316, %c0_317, %c0_318] : memref<16x18x24xf32, #tpu.memory_space<vmem>>, vector<1x18x24xf32>
    %543 = vector.shape_cast %542 : vector<1x18x24xf32> to vector<18x24xf32>
    %544 = vector.extract_strided_slice %543 {offsets = [0, 0], sizes = [16, 24], strides = [1, 1]} : vector<18x24xf32> to vector<16x24xf32>
    %c6_319 = arith.constant 6 : index
    %c0_320 = arith.constant 0 : index
    %545 = vector.load %arg4[%c6_319, %c0_320] : memref<9x24xf32, #tpu.memory_space<vmem>>, vector<1x24xf32>
    %546 = vector.broadcast %545 : vector<1x24xf32> to vector<16x24xf32>
    %547 = arith.mulf %544, %546 : vector<16x24xf32>
    %548 = arith.addf %541, %547 : vector<16x24xf32>
    %549 = vector.extract_strided_slice %543 {offsets = [1, 0], sizes = [16, 24], strides = [1, 1]} : vector<18x24xf32> to vector<16x24xf32>
    %c7_321 = arith.constant 7 : index
    %c0_322 = arith.constant 0 : index
    %550 = vector.load %arg4[%c7_321, %c0_322] : memref<9x24xf32, #tpu.memory_space<vmem>>, vector<1x24xf32>
    %551 = vector.broadcast %550 : vector<1x24xf32> to vector<16x24xf32>
    %552 = arith.mulf %549, %551 : vector<16x24xf32>
    %553 = arith.addf %548, %552 : vector<16x24xf32>
    %554 = vector.extract_strided_slice %543 {offsets = [2, 0], sizes = [16, 24], strides = [1, 1]} : vector<18x24xf32> to vector<16x24xf32>
    %c8_323 = arith.constant 8 : index
    %c0_324 = arith.constant 0 : index
    %555 = vector.load %arg4[%c8_323, %c0_324] : memref<9x24xf32, #tpu.memory_space<vmem>>, vector<1x24xf32>
    %556 = vector.broadcast %555 : vector<1x24xf32> to vector<16x24xf32>
    %557 = arith.mulf %554, %556 : vector<16x24xf32>
    %558 = arith.addf %553, %557 : vector<16x24xf32>
    %559 = vector.broadcast %77 : vector<1x24xf32> to vector<16x24xf32>
    %560 = arith.addf %558, %559 : vector<16x24xf32>
    %cst_325 = arith.constant 0.000000e+00 : f32
    %561 = vector.broadcast %cst_325 : f32 to vector<16x24xf32>
    %562 = arith.maximumf %560, %561 : vector<16x24xf32>
    %563 = arith.truncf %562 : vector<16x24xf32> to vector<16x24xbf16>
    %c128_326 = arith.constant 128 : index
    %c0_327 = arith.constant 0 : index
    %564 = vector.load %arg11[%c128_326, %c0_327] : memref<256x24xbf16, #tpu.memory_space<vmem>>, vector<16x24xbf16>
    tpu.vector_store %arg11[%c128_326, %c0_327], %563 {strides = array<i32>} : memref<256x24xbf16, #tpu.memory_space<vmem>>, vector<16x24xbf16>,
    %c8_328 = arith.constant 8 : index
    %c0_329 = arith.constant 0 : index
    %c0_330 = arith.constant 0 : index
    %565 = vector.load %arg10[%c8_328, %c0_329, %c0_330] : memref<16x18x24xf32, #tpu.memory_space<vmem>>, vector<1x18x24xf32>
    %566 = vector.shape_cast %565 : vector<1x18x24xf32> to vector<18x24xf32>
    %567 = vector.extract_strided_slice %566 {offsets = [0, 0], sizes = [16, 24], strides = [1, 1]} : vector<18x24xf32> to vector<16x24xf32>
    %c0_331 = arith.constant 0 : index
    %c0_332 = arith.constant 0 : index
    %568 = vector.load %arg4[%c0_331, %c0_332] : memref<9x24xf32, #tpu.memory_space<vmem>>, vector<1x24xf32>
    %569 = vector.broadcast %568 : vector<1x24xf32> to vector<16x24xf32>
    %570 = arith.mulf %567, %569 : vector<16x24xf32>
    %571 = vector.extract_strided_slice %566 {offsets = [1, 0], sizes = [16, 24], strides = [1, 1]} : vector<18x24xf32> to vector<16x24xf32>
    %c1_333 = arith.constant 1 : index
    %c0_334 = arith.constant 0 : index
    %572 = vector.load %arg4[%c1_333, %c0_334] : memref<9x24xf32, #tpu.memory_space<vmem>>, vector<1x24xf32>
    %573 = vector.broadcast %572 : vector<1x24xf32> to vector<16x24xf32>
    %574 = arith.mulf %571, %573 : vector<16x24xf32>
    %575 = arith.addf %570, %574 : vector<16x24xf32>
    %576 = vector.extract_strided_slice %566 {offsets = [2, 0], sizes = [16, 24], strides = [1, 1]} : vector<18x24xf32> to vector<16x24xf32>
    %c2_335 = arith.constant 2 : index
    %c0_336 = arith.constant 0 : index
    %577 = vector.load %arg4[%c2_335, %c0_336] : memref<9x24xf32, #tpu.memory_space<vmem>>, vector<1x24xf32>
    %578 = vector.broadcast %577 : vector<1x24xf32> to vector<16x24xf32>
    %579 = arith.mulf %576, %578 : vector<16x24xf32>
    %580 = arith.addf %575, %579 : vector<16x24xf32>
    %c9_337 = arith.constant 9 : index
    %c0_338 = arith.constant 0 : index
    %c0_339 = arith.constant 0 : index
    %581 = vector.load %arg10[%c9_337, %c0_338, %c0_339] : memref<16x18x24xf32, #tpu.memory_space<vmem>>, vector<1x18x24xf32>
    %582 = vector.shape_cast %581 : vector<1x18x24xf32> to vector<18x24xf32>
    %583 = vector.extract_strided_slice %582 {offsets = [0, 0], sizes = [16, 24], strides = [1, 1]} : vector<18x24xf32> to vector<16x24xf32>
    %c3_340 = arith.constant 3 : index
    %c0_341 = arith.constant 0 : index
    %584 = vector.load %arg4[%c3_340, %c0_341] : memref<9x24xf32, #tpu.memory_space<vmem>>, vector<1x24xf32>
    %585 = vector.broadcast %584 : vector<1x24xf32> to vector<16x24xf32>
    %586 = arith.mulf %583, %585 : vector<16x24xf32>
    %587 = arith.addf %580, %586 : vector<16x24xf32>
    %588 = vector.extract_strided_slice %582 {offsets = [1, 0], sizes = [16, 24], strides = [1, 1]} : vector<18x24xf32> to vector<16x24xf32>
    %c4_342 = arith.constant 4 : index
    %c0_343 = arith.constant 0 : index
    %589 = vector.load %arg4[%c4_342, %c0_343] : memref<9x24xf32, #tpu.memory_space<vmem>>, vector<1x24xf32>
    %590 = vector.broadcast %589 : vector<1x24xf32> to vector<16x24xf32>
    %591 = arith.mulf %588, %590 : vector<16x24xf32>
    %592 = arith.addf %587, %591 : vector<16x24xf32>
    %593 = vector.extract_strided_slice %582 {offsets = [2, 0], sizes = [16, 24], strides = [1, 1]} : vector<18x24xf32> to vector<16x24xf32>
    %c5_344 = arith.constant 5 : index
    %c0_345 = arith.constant 0 : index
    %594 = vector.load %arg4[%c5_344, %c0_345] : memref<9x24xf32, #tpu.memory_space<vmem>>, vector<1x24xf32>
    %595 = vector.broadcast %594 : vector<1x24xf32> to vector<16x24xf32>
    %596 = arith.mulf %593, %595 : vector<16x24xf32>
    %597 = arith.addf %592, %596 : vector<16x24xf32>
    %c10_346 = arith.constant 10 : index
    %c0_347 = arith.constant 0 : index
    %c0_348 = arith.constant 0 : index
    %598 = vector.load %arg10[%c10_346, %c0_347, %c0_348] : memref<16x18x24xf32, #tpu.memory_space<vmem>>, vector<1x18x24xf32>
    %599 = vector.shape_cast %598 : vector<1x18x24xf32> to vector<18x24xf32>
    %600 = vector.extract_strided_slice %599 {offsets = [0, 0], sizes = [16, 24], strides = [1, 1]} : vector<18x24xf32> to vector<16x24xf32>
    %c6_349 = arith.constant 6 : index
    %c0_350 = arith.constant 0 : index
    %601 = vector.load %arg4[%c6_349, %c0_350] : memref<9x24xf32, #tpu.memory_space<vmem>>, vector<1x24xf32>
    %602 = vector.broadcast %601 : vector<1x24xf32> to vector<16x24xf32>
    %603 = arith.mulf %600, %602 : vector<16x24xf32>
    %604 = arith.addf %597, %603 : vector<16x24xf32>
    %605 = vector.extract_strided_slice %599 {offsets = [1, 0], sizes = [16, 24], strides = [1, 1]} : vector<18x24xf32> to vector<16x24xf32>
    %c7_351 = arith.constant 7 : index
    %c0_352 = arith.constant 0 : index
    %606 = vector.load %arg4[%c7_351, %c0_352] : memref<9x24xf32, #tpu.memory_space<vmem>>, vector<1x24xf32>
    %607 = vector.broadcast %606 : vector<1x24xf32> to vector<16x24xf32>
    %608 = arith.mulf %605, %607 : vector<16x24xf32>
    %609 = arith.addf %604, %608 : vector<16x24xf32>
    %610 = vector.extract_strided_slice %599 {offsets = [2, 0], sizes = [16, 24], strides = [1, 1]} : vector<18x24xf32> to vector<16x24xf32>
    %c8_353 = arith.constant 8 : index
    %c0_354 = arith.constant 0 : index
    %611 = vector.load %arg4[%c8_353, %c0_354] : memref<9x24xf32, #tpu.memory_space<vmem>>, vector<1x24xf32>
    %612 = vector.broadcast %611 : vector<1x24xf32> to vector<16x24xf32>
    %613 = arith.mulf %610, %612 : vector<16x24xf32>
    %614 = arith.addf %609, %613 : vector<16x24xf32>
    %615 = vector.broadcast %77 : vector<1x24xf32> to vector<16x24xf32>
    %616 = arith.addf %614, %615 : vector<16x24xf32>
    %cst_355 = arith.constant 0.000000e+00 : f32
    %617 = vector.broadcast %cst_355 : f32 to vector<16x24xf32>
    %618 = arith.maximumf %616, %617 : vector<16x24xf32>
    %619 = arith.truncf %618 : vector<16x24xf32> to vector<16x24xbf16>
    %c144_356 = arith.constant 144 : index
    %c0_357 = arith.constant 0 : index
    %620 = vector.load %arg11[%c144_356, %c0_357] : memref<256x24xbf16, #tpu.memory_space<vmem>>, vector<16x24xbf16>
    tpu.vector_store %arg11[%c144_356, %c0_357], %619 {strides = array<i32>} : memref<256x24xbf16, #tpu.memory_space<vmem>>, vector<16x24xbf16>,
    %c9_358 = arith.constant 9 : index
    %c0_359 = arith.constant 0 : index
    %c0_360 = arith.constant 0 : index
    %621 = vector.load %arg10[%c9_358, %c0_359, %c0_360] : memref<16x18x24xf32, #tpu.memory_space<vmem>>, vector<1x18x24xf32>
    %622 = vector.shape_cast %621 : vector<1x18x24xf32> to vector<18x24xf32>
    %623 = vector.extract_strided_slice %622 {offsets = [0, 0], sizes = [16, 24], strides = [1, 1]} : vector<18x24xf32> to vector<16x24xf32>
    %c0_361 = arith.constant 0 : index
    %c0_362 = arith.constant 0 : index
    %624 = vector.load %arg4[%c0_361, %c0_362] : memref<9x24xf32, #tpu.memory_space<vmem>>, vector<1x24xf32>
    %625 = vector.broadcast %624 : vector<1x24xf32> to vector<16x24xf32>
    %626 = arith.mulf %623, %625 : vector<16x24xf32>
    %627 = vector.extract_strided_slice %622 {offsets = [1, 0], sizes = [16, 24], strides = [1, 1]} : vector<18x24xf32> to vector<16x24xf32>
    %c1_363 = arith.constant 1 : index
    %c0_364 = arith.constant 0 : index
    %628 = vector.load %arg4[%c1_363, %c0_364] : memref<9x24xf32, #tpu.memory_space<vmem>>, vector<1x24xf32>
    %629 = vector.broadcast %628 : vector<1x24xf32> to vector<16x24xf32>
    %630 = arith.mulf %627, %629 : vector<16x24xf32>
    %631 = arith.addf %626, %630 : vector<16x24xf32>
    %632 = vector.extract_strided_slice %622 {offsets = [2, 0], sizes = [16, 24], strides = [1, 1]} : vector<18x24xf32> to vector<16x24xf32>
    %c2_365 = arith.constant 2 : index
    %c0_366 = arith.constant 0 : index
    %633 = vector.load %arg4[%c2_365, %c0_366] : memref<9x24xf32, #tpu.memory_space<vmem>>, vector<1x24xf32>
    %634 = vector.broadcast %633 : vector<1x24xf32> to vector<16x24xf32>
    %635 = arith.mulf %632, %634 : vector<16x24xf32>
    %636 = arith.addf %631, %635 : vector<16x24xf32>
    %c10_367 = arith.constant 10 : index
    %c0_368 = arith.constant 0 : index
    %c0_369 = arith.constant 0 : index
    %637 = vector.load %arg10[%c10_367, %c0_368, %c0_369] : memref<16x18x24xf32, #tpu.memory_space<vmem>>, vector<1x18x24xf32>
    %638 = vector.shape_cast %637 : vector<1x18x24xf32> to vector<18x24xf32>
    %639 = vector.extract_strided_slice %638 {offsets = [0, 0], sizes = [16, 24], strides = [1, 1]} : vector<18x24xf32> to vector<16x24xf32>
    %c3_370 = arith.constant 3 : index
    %c0_371 = arith.constant 0 : index
    %640 = vector.load %arg4[%c3_370, %c0_371] : memref<9x24xf32, #tpu.memory_space<vmem>>, vector<1x24xf32>
    %641 = vector.broadcast %640 : vector<1x24xf32> to vector<16x24xf32>
    %642 = arith.mulf %639, %641 : vector<16x24xf32>
    %643 = arith.addf %636, %642 : vector<16x24xf32>
    %644 = vector.extract_strided_slice %638 {offsets = [1, 0], sizes = [16, 24], strides = [1, 1]} : vector<18x24xf32> to vector<16x24xf32>
    %c4_372 = arith.constant 4 : index
    %c0_373 = arith.constant 0 : index
    %645 = vector.load %arg4[%c4_372, %c0_373] : memref<9x24xf32, #tpu.memory_space<vmem>>, vector<1x24xf32>
    %646 = vector.broadcast %645 : vector<1x24xf32> to vector<16x24xf32>
    %647 = arith.mulf %644, %646 : vector<16x24xf32>
    %648 = arith.addf %643, %647 : vector<16x24xf32>
    %649 = vector.extract_strided_slice %638 {offsets = [2, 0], sizes = [16, 24], strides = [1, 1]} : vector<18x24xf32> to vector<16x24xf32>
    %c5_374 = arith.constant 5 : index
    %c0_375 = arith.constant 0 : index
    %650 = vector.load %arg4[%c5_374, %c0_375] : memref<9x24xf32, #tpu.memory_space<vmem>>, vector<1x24xf32>
    %651 = vector.broadcast %650 : vector<1x24xf32> to vector<16x24xf32>
    %652 = arith.mulf %649, %651 : vector<16x24xf32>
    %653 = arith.addf %648, %652 : vector<16x24xf32>
    %c11_376 = arith.constant 11 : index
    %c0_377 = arith.constant 0 : index
    %c0_378 = arith.constant 0 : index
    %654 = vector.load %arg10[%c11_376, %c0_377, %c0_378] : memref<16x18x24xf32, #tpu.memory_space<vmem>>, vector<1x18x24xf32>
    %655 = vector.shape_cast %654 : vector<1x18x24xf32> to vector<18x24xf32>
    %656 = vector.extract_strided_slice %655 {offsets = [0, 0], sizes = [16, 24], strides = [1, 1]} : vector<18x24xf32> to vector<16x24xf32>
    %c6_379 = arith.constant 6 : index
    %c0_380 = arith.constant 0 : index
    %657 = vector.load %arg4[%c6_379, %c0_380] : memref<9x24xf32, #tpu.memory_space<vmem>>, vector<1x24xf32>
    %658 = vector.broadcast %657 : vector<1x24xf32> to vector<16x24xf32>
    %659 = arith.mulf %656, %658 : vector<16x24xf32>
    %660 = arith.addf %653, %659 : vector<16x24xf32>
    %661 = vector.extract_strided_slice %655 {offsets = [1, 0], sizes = [16, 24], strides = [1, 1]} : vector<18x24xf32> to vector<16x24xf32>
    %c7_381 = arith.constant 7 : index
    %c0_382 = arith.constant 0 : index
    %662 = vector.load %arg4[%c7_381, %c0_382] : memref<9x24xf32, #tpu.memory_space<vmem>>, vector<1x24xf32>
    %663 = vector.broadcast %662 : vector<1x24xf32> to vector<16x24xf32>
    %664 = arith.mulf %661, %663 : vector<16x24xf32>
    %665 = arith.addf %660, %664 : vector<16x24xf32>
    %666 = vector.extract_strided_slice %655 {offsets = [2, 0], sizes = [16, 24], strides = [1, 1]} : vector<18x24xf32> to vector<16x24xf32>
    %c8_383 = arith.constant 8 : index
    %c0_384 = arith.constant 0 : index
    %667 = vector.load %arg4[%c8_383, %c0_384] : memref<9x24xf32, #tpu.memory_space<vmem>>, vector<1x24xf32>
    %668 = vector.broadcast %667 : vector<1x24xf32> to vector<16x24xf32>
    %669 = arith.mulf %666, %668 : vector<16x24xf32>
    %670 = arith.addf %665, %669 : vector<16x24xf32>
    %671 = vector.broadcast %77 : vector<1x24xf32> to vector<16x24xf32>
    %672 = arith.addf %670, %671 : vector<16x24xf32>
    %cst_385 = arith.constant 0.000000e+00 : f32
    %673 = vector.broadcast %cst_385 : f32 to vector<16x24xf32>
    %674 = arith.maximumf %672, %673 : vector<16x24xf32>
    %675 = arith.truncf %674 : vector<16x24xf32> to vector<16x24xbf16>
    %c160_386 = arith.constant 160 : index
    %c0_387 = arith.constant 0 : index
    %676 = vector.load %arg11[%c160_386, %c0_387] : memref<256x24xbf16, #tpu.memory_space<vmem>>, vector<16x24xbf16>
    tpu.vector_store %arg11[%c160_386, %c0_387], %675 {strides = array<i32>} : memref<256x24xbf16, #tpu.memory_space<vmem>>, vector<16x24xbf16>,
    %c10_388 = arith.constant 10 : index
    %c0_389 = arith.constant 0 : index
    %c0_390 = arith.constant 0 : index
    %677 = vector.load %arg10[%c10_388, %c0_389, %c0_390] : memref<16x18x24xf32, #tpu.memory_space<vmem>>, vector<1x18x24xf32>
    %678 = vector.shape_cast %677 : vector<1x18x24xf32> to vector<18x24xf32>
    %679 = vector.extract_strided_slice %678 {offsets = [0, 0], sizes = [16, 24], strides = [1, 1]} : vector<18x24xf32> to vector<16x24xf32>
    %c0_391 = arith.constant 0 : index
    %c0_392 = arith.constant 0 : index
    %680 = vector.load %arg4[%c0_391, %c0_392] : memref<9x24xf32, #tpu.memory_space<vmem>>, vector<1x24xf32>
    %681 = vector.broadcast %680 : vector<1x24xf32> to vector<16x24xf32>
    %682 = arith.mulf %679, %681 : vector<16x24xf32>
    %683 = vector.extract_strided_slice %678 {offsets = [1, 0], sizes = [16, 24], strides = [1, 1]} : vector<18x24xf32> to vector<16x24xf32>
    %c1_393 = arith.constant 1 : index
    %c0_394 = arith.constant 0 : index
    %684 = vector.load %arg4[%c1_393, %c0_394] : memref<9x24xf32, #tpu.memory_space<vmem>>, vector<1x24xf32>
    %685 = vector.broadcast %684 : vector<1x24xf32> to vector<16x24xf32>
    %686 = arith.mulf %683, %685 : vector<16x24xf32>
    %687 = arith.addf %682, %686 : vector<16x24xf32>
    %688 = vector.extract_strided_slice %678 {offsets = [2, 0], sizes = [16, 24], strides = [1, 1]} : vector<18x24xf32> to vector<16x24xf32>
    %c2_395 = arith.constant 2 : index
    %c0_396 = arith.constant 0 : index
    %689 = vector.load %arg4[%c2_395, %c0_396] : memref<9x24xf32, #tpu.memory_space<vmem>>, vector<1x24xf32>
    %690 = vector.broadcast %689 : vector<1x24xf32> to vector<16x24xf32>
    %691 = arith.mulf %688, %690 : vector<16x24xf32>
    %692 = arith.addf %687, %691 : vector<16x24xf32>
    %c11_397 = arith.constant 11 : index
    %c0_398 = arith.constant 0 : index
    %c0_399 = arith.constant 0 : index
    %693 = vector.load %arg10[%c11_397, %c0_398, %c0_399] : memref<16x18x24xf32, #tpu.memory_space<vmem>>, vector<1x18x24xf32>
    %694 = vector.shape_cast %693 : vector<1x18x24xf32> to vector<18x24xf32>
    %695 = vector.extract_strided_slice %694 {offsets = [0, 0], sizes = [16, 24], strides = [1, 1]} : vector<18x24xf32> to vector<16x24xf32>
    %c3_400 = arith.constant 3 : index
    %c0_401 = arith.constant 0 : index
    %696 = vector.load %arg4[%c3_400, %c0_401] : memref<9x24xf32, #tpu.memory_space<vmem>>, vector<1x24xf32>
    %697 = vector.broadcast %696 : vector<1x24xf32> to vector<16x24xf32>
    %698 = arith.mulf %695, %697 : vector<16x24xf32>
    %699 = arith.addf %692, %698 : vector<16x24xf32>
    %700 = vector.extract_strided_slice %694 {offsets = [1, 0], sizes = [16, 24], strides = [1, 1]} : vector<18x24xf32> to vector<16x24xf32>
    %c4_402 = arith.constant 4 : index
    %c0_403 = arith.constant 0 : index
    %701 = vector.load %arg4[%c4_402, %c0_403] : memref<9x24xf32, #tpu.memory_space<vmem>>, vector<1x24xf32>
    %702 = vector.broadcast %701 : vector<1x24xf32> to vector<16x24xf32>
    %703 = arith.mulf %700, %702 : vector<16x24xf32>
    %704 = arith.addf %699, %703 : vector<16x24xf32>
    %705 = vector.extract_strided_slice %694 {offsets = [2, 0], sizes = [16, 24], strides = [1, 1]} : vector<18x24xf32> to vector<16x24xf32>
    %c5_404 = arith.constant 5 : index
    %c0_405 = arith.constant 0 : index
    %706 = vector.load %arg4[%c5_404, %c0_405] : memref<9x24xf32, #tpu.memory_space<vmem>>, vector<1x24xf32>
    %707 = vector.broadcast %706 : vector<1x24xf32> to vector<16x24xf32>
    %708 = arith.mulf %705, %707 : vector<16x24xf32>
    %709 = arith.addf %704, %708 : vector<16x24xf32>
    %c12_406 = arith.constant 12 : index
    %c0_407 = arith.constant 0 : index
    %c0_408 = arith.constant 0 : index
    %710 = vector.load %arg10[%c12_406, %c0_407, %c0_408] : memref<16x18x24xf32, #tpu.memory_space<vmem>>, vector<1x18x24xf32>
    %711 = vector.shape_cast %710 : vector<1x18x24xf32> to vector<18x24xf32>
    %712 = vector.extract_strided_slice %711 {offsets = [0, 0], sizes = [16, 24], strides = [1, 1]} : vector<18x24xf32> to vector<16x24xf32>
    %c6_409 = arith.constant 6 : index
    %c0_410 = arith.constant 0 : index
    %713 = vector.load %arg4[%c6_409, %c0_410] : memref<9x24xf32, #tpu.memory_space<vmem>>, vector<1x24xf32>
    %714 = vector.broadcast %713 : vector<1x24xf32> to vector<16x24xf32>
    %715 = arith.mulf %712, %714 : vector<16x24xf32>
    %716 = arith.addf %709, %715 : vector<16x24xf32>
    %717 = vector.extract_strided_slice %711 {offsets = [1, 0], sizes = [16, 24], strides = [1, 1]} : vector<18x24xf32> to vector<16x24xf32>
    %c7_411 = arith.constant 7 : index
    %c0_412 = arith.constant 0 : index
    %718 = vector.load %arg4[%c7_411, %c0_412] : memref<9x24xf32, #tpu.memory_space<vmem>>, vector<1x24xf32>
    %719 = vector.broadcast %718 : vector<1x24xf32> to vector<16x24xf32>
    %720 = arith.mulf %717, %719 : vector<16x24xf32>
    %721 = arith.addf %716, %720 : vector<16x24xf32>
    %722 = vector.extract_strided_slice %711 {offsets = [2, 0], sizes = [16, 24], strides = [1, 1]} : vector<18x24xf32> to vector<16x24xf32>
    %c8_413 = arith.constant 8 : index
    %c0_414 = arith.constant 0 : index
    %723 = vector.load %arg4[%c8_413, %c0_414] : memref<9x24xf32, #tpu.memory_space<vmem>>, vector<1x24xf32>
    %724 = vector.broadcast %723 : vector<1x24xf32> to vector<16x24xf32>
    %725 = arith.mulf %722, %724 : vector<16x24xf32>
    %726 = arith.addf %721, %725 : vector<16x24xf32>
    %727 = vector.broadcast %77 : vector<1x24xf32> to vector<16x24xf32>
    %728 = arith.addf %726, %727 : vector<16x24xf32>
    %cst_415 = arith.constant 0.000000e+00 : f32
    %729 = vector.broadcast %cst_415 : f32 to vector<16x24xf32>
    %730 = arith.maximumf %728, %729 : vector<16x24xf32>
    %731 = arith.truncf %730 : vector<16x24xf32> to vector<16x24xbf16>
    %c176_416 = arith.constant 176 : index
    %c0_417 = arith.constant 0 : index
    %732 = vector.load %arg11[%c176_416, %c0_417] : memref<256x24xbf16, #tpu.memory_space<vmem>>, vector<16x24xbf16>
    tpu.vector_store %arg11[%c176_416, %c0_417], %731 {strides = array<i32>} : memref<256x24xbf16, #tpu.memory_space<vmem>>, vector<16x24xbf16>,
    %c11_418 = arith.constant 11 : index
    %c0_419 = arith.constant 0 : index
    %c0_420 = arith.constant 0 : index
    %733 = vector.load %arg10[%c11_418, %c0_419, %c0_420] : memref<16x18x24xf32, #tpu.memory_space<vmem>>, vector<1x18x24xf32>
    %734 = vector.shape_cast %733 : vector<1x18x24xf32> to vector<18x24xf32>
    %735 = vector.extract_strided_slice %734 {offsets = [0, 0], sizes = [16, 24], strides = [1, 1]} : vector<18x24xf32> to vector<16x24xf32>
    %c0_421 = arith.constant 0 : index
    %c0_422 = arith.constant 0 : index
    %736 = vector.load %arg4[%c0_421, %c0_422] : memref<9x24xf32, #tpu.memory_space<vmem>>, vector<1x24xf32>
    %737 = vector.broadcast %736 : vector<1x24xf32> to vector<16x24xf32>
    %738 = arith.mulf %735, %737 : vector<16x24xf32>
    %739 = vector.extract_strided_slice %734 {offsets = [1, 0], sizes = [16, 24], strides = [1, 1]} : vector<18x24xf32> to vector<16x24xf32>
    %c1_423 = arith.constant 1 : index
    %c0_424 = arith.constant 0 : index
    %740 = vector.load %arg4[%c1_423, %c0_424] : memref<9x24xf32, #tpu.memory_space<vmem>>, vector<1x24xf32>
    %741 = vector.broadcast %740 : vector<1x24xf32> to vector<16x24xf32>
    %742 = arith.mulf %739, %741 : vector<16x24xf32>
    %743 = arith.addf %738, %742 : vector<16x24xf32>
    %744 = vector.extract_strided_slice %734 {offsets = [2, 0], sizes = [16, 24], strides = [1, 1]} : vector<18x24xf32> to vector<16x24xf32>
    %c2_425 = arith.constant 2 : index
    %c0_426 = arith.constant 0 : index
    %745 = vector.load %arg4[%c2_425, %c0_426] : memref<9x24xf32, #tpu.memory_space<vmem>>, vector<1x24xf32>
    %746 = vector.broadcast %745 : vector<1x24xf32> to vector<16x24xf32>
    %747 = arith.mulf %744, %746 : vector<16x24xf32>
    %748 = arith.addf %743, %747 : vector<16x24xf32>
    %c12_427 = arith.constant 12 : index
    %c0_428 = arith.constant 0 : index
    %c0_429 = arith.constant 0 : index
    %749 = vector.load %arg10[%c12_427, %c0_428, %c0_429] : memref<16x18x24xf32, #tpu.memory_space<vmem>>, vector<1x18x24xf32>
    %750 = vector.shape_cast %749 : vector<1x18x24xf32> to vector<18x24xf32>
    %751 = vector.extract_strided_slice %750 {offsets = [0, 0], sizes = [16, 24], strides = [1, 1]} : vector<18x24xf32> to vector<16x24xf32>
    %c3_430 = arith.constant 3 : index
    %c0_431 = arith.constant 0 : index
    %752 = vector.load %arg4[%c3_430, %c0_431] : memref<9x24xf32, #tpu.memory_space<vmem>>, vector<1x24xf32>
    %753 = vector.broadcast %752 : vector<1x24xf32> to vector<16x24xf32>
    %754 = arith.mulf %751, %753 : vector<16x24xf32>
    %755 = arith.addf %748, %754 : vector<16x24xf32>
    %756 = vector.extract_strided_slice %750 {offsets = [1, 0], sizes = [16, 24], strides = [1, 1]} : vector<18x24xf32> to vector<16x24xf32>
    %c4_432 = arith.constant 4 : index
    %c0_433 = arith.constant 0 : index
    %757 = vector.load %arg4[%c4_432, %c0_433] : memref<9x24xf32, #tpu.memory_space<vmem>>, vector<1x24xf32>
    %758 = vector.broadcast %757 : vector<1x24xf32> to vector<16x24xf32>
    %759 = arith.mulf %756, %758 : vector<16x24xf32>
    %760 = arith.addf %755, %759 : vector<16x24xf32>
    %761 = vector.extract_strided_slice %750 {offsets = [2, 0], sizes = [16, 24], strides = [1, 1]} : vector<18x24xf32> to vector<16x24xf32>
    %c5_434 = arith.constant 5 : index
    %c0_435 = arith.constant 0 : index
    %762 = vector.load %arg4[%c5_434, %c0_435] : memref<9x24xf32, #tpu.memory_space<vmem>>, vector<1x24xf32>
    %763 = vector.broadcast %762 : vector<1x24xf32> to vector<16x24xf32>
    %764 = arith.mulf %761, %763 : vector<16x24xf32>
    %765 = arith.addf %760, %764 : vector<16x24xf32>
    %c13_436 = arith.constant 13 : index
    %c0_437 = arith.constant 0 : index
    %c0_438 = arith.constant 0 : index
    %766 = vector.load %arg10[%c13_436, %c0_437, %c0_438] : memref<16x18x24xf32, #tpu.memory_space<vmem>>, vector<1x18x24xf32>
    %767 = vector.shape_cast %766 : vector<1x18x24xf32> to vector<18x24xf32>
    %768 = vector.extract_strided_slice %767 {offsets = [0, 0], sizes = [16, 24], strides = [1, 1]} : vector<18x24xf32> to vector<16x24xf32>
    %c6_439 = arith.constant 6 : index
    %c0_440 = arith.constant 0 : index
    %769 = vector.load %arg4[%c6_439, %c0_440] : memref<9x24xf32, #tpu.memory_space<vmem>>, vector<1x24xf32>
    %770 = vector.broadcast %769 : vector<1x24xf32> to vector<16x24xf32>
    %771 = arith.mulf %768, %770 : vector<16x24xf32>
    %772 = arith.addf %765, %771 : vector<16x24xf32>
    %773 = vector.extract_strided_slice %767 {offsets = [1, 0], sizes = [16, 24], strides = [1, 1]} : vector<18x24xf32> to vector<16x24xf32>
    %c7_441 = arith.constant 7 : index
    %c0_442 = arith.constant 0 : index
    %774 = vector.load %arg4[%c7_441, %c0_442] : memref<9x24xf32, #tpu.memory_space<vmem>>, vector<1x24xf32>
    %775 = vector.broadcast %774 : vector<1x24xf32> to vector<16x24xf32>
    %776 = arith.mulf %773, %775 : vector<16x24xf32>
    %777 = arith.addf %772, %776 : vector<16x24xf32>
    %778 = vector.extract_strided_slice %767 {offsets = [2, 0], sizes = [16, 24], strides = [1, 1]} : vector<18x24xf32> to vector<16x24xf32>
    %c8_443 = arith.constant 8 : index
    %c0_444 = arith.constant 0 : index
    %779 = vector.load %arg4[%c8_443, %c0_444] : memref<9x24xf32, #tpu.memory_space<vmem>>, vector<1x24xf32>
    %780 = vector.broadcast %779 : vector<1x24xf32> to vector<16x24xf32>
    %781 = arith.mulf %778, %780 : vector<16x24xf32>
    %782 = arith.addf %777, %781 : vector<16x24xf32>
    %783 = vector.broadcast %77 : vector<1x24xf32> to vector<16x24xf32>
    %784 = arith.addf %782, %783 : vector<16x24xf32>
    %cst_445 = arith.constant 0.000000e+00 : f32
    %785 = vector.broadcast %cst_445 : f32 to vector<16x24xf32>
    %786 = arith.maximumf %784, %785 : vector<16x24xf32>
    %787 = arith.truncf %786 : vector<16x24xf32> to vector<16x24xbf16>
    %c192_446 = arith.constant 192 : index
    %c0_447 = arith.constant 0 : index
    %788 = vector.load %arg11[%c192_446, %c0_447] : memref<256x24xbf16, #tpu.memory_space<vmem>>, vector<16x24xbf16>
    tpu.vector_store %arg11[%c192_446, %c0_447], %787 {strides = array<i32>} : memref<256x24xbf16, #tpu.memory_space<vmem>>, vector<16x24xbf16>,
    %c12_448 = arith.constant 12 : index
    %c0_449 = arith.constant 0 : index
    %c0_450 = arith.constant 0 : index
    %789 = vector.load %arg10[%c12_448, %c0_449, %c0_450] : memref<16x18x24xf32, #tpu.memory_space<vmem>>, vector<1x18x24xf32>
    %790 = vector.shape_cast %789 : vector<1x18x24xf32> to vector<18x24xf32>
    %791 = vector.extract_strided_slice %790 {offsets = [0, 0], sizes = [16, 24], strides = [1, 1]} : vector<18x24xf32> to vector<16x24xf32>
    %c0_451 = arith.constant 0 : index
    %c0_452 = arith.constant 0 : index
    %792 = vector.load %arg4[%c0_451, %c0_452] : memref<9x24xf32, #tpu.memory_space<vmem>>, vector<1x24xf32>
    %793 = vector.broadcast %792 : vector<1x24xf32> to vector<16x24xf32>
    %794 = arith.mulf %791, %793 : vector<16x24xf32>
    %795 = vector.extract_strided_slice %790 {offsets = [1, 0], sizes = [16, 24], strides = [1, 1]} : vector<18x24xf32> to vector<16x24xf32>
    %c1_453 = arith.constant 1 : index
    %c0_454 = arith.constant 0 : index
    %796 = vector.load %arg4[%c1_453, %c0_454] : memref<9x24xf32, #tpu.memory_space<vmem>>, vector<1x24xf32>
    %797 = vector.broadcast %796 : vector<1x24xf32> to vector<16x24xf32>
    %798 = arith.mulf %795, %797 : vector<16x24xf32>
    %799 = arith.addf %794, %798 : vector<16x24xf32>
    %800 = vector.extract_strided_slice %790 {offsets = [2, 0], sizes = [16, 24], strides = [1, 1]} : vector<18x24xf32> to vector<16x24xf32>
    %c2_455 = arith.constant 2 : index
    %c0_456 = arith.constant 0 : index
    %801 = vector.load %arg4[%c2_455, %c0_456] : memref<9x24xf32, #tpu.memory_space<vmem>>, vector<1x24xf32>
    %802 = vector.broadcast %801 : vector<1x24xf32> to vector<16x24xf32>
    %803 = arith.mulf %800, %802 : vector<16x24xf32>
    %804 = arith.addf %799, %803 : vector<16x24xf32>
    %c13_457 = arith.constant 13 : index
    %c0_458 = arith.constant 0 : index
    %c0_459 = arith.constant 0 : index
    %805 = vector.load %arg10[%c13_457, %c0_458, %c0_459] : memref<16x18x24xf32, #tpu.memory_space<vmem>>, vector<1x18x24xf32>
    %806 = vector.shape_cast %805 : vector<1x18x24xf32> to vector<18x24xf32>
    %807 = vector.extract_strided_slice %806 {offsets = [0, 0], sizes = [16, 24], strides = [1, 1]} : vector<18x24xf32> to vector<16x24xf32>
    %c3_460 = arith.constant 3 : index
    %c0_461 = arith.constant 0 : index
    %808 = vector.load %arg4[%c3_460, %c0_461] : memref<9x24xf32, #tpu.memory_space<vmem>>, vector<1x24xf32>
    %809 = vector.broadcast %808 : vector<1x24xf32> to vector<16x24xf32>
    %810 = arith.mulf %807, %809 : vector<16x24xf32>
    %811 = arith.addf %804, %810 : vector<16x24xf32>
    %812 = vector.extract_strided_slice %806 {offsets = [1, 0], sizes = [16, 24], strides = [1, 1]} : vector<18x24xf32> to vector<16x24xf32>
    %c4_462 = arith.constant 4 : index
    %c0_463 = arith.constant 0 : index
    %813 = vector.load %arg4[%c4_462, %c0_463] : memref<9x24xf32, #tpu.memory_space<vmem>>, vector<1x24xf32>
    %814 = vector.broadcast %813 : vector<1x24xf32> to vector<16x24xf32>
    %815 = arith.mulf %812, %814 : vector<16x24xf32>
    %816 = arith.addf %811, %815 : vector<16x24xf32>
    %817 = vector.extract_strided_slice %806 {offsets = [2, 0], sizes = [16, 24], strides = [1, 1]} : vector<18x24xf32> to vector<16x24xf32>
    %c5_464 = arith.constant 5 : index
    %c0_465 = arith.constant 0 : index
    %818 = vector.load %arg4[%c5_464, %c0_465] : memref<9x24xf32, #tpu.memory_space<vmem>>, vector<1x24xf32>
    %819 = vector.broadcast %818 : vector<1x24xf32> to vector<16x24xf32>
    %820 = arith.mulf %817, %819 : vector<16x24xf32>
    %821 = arith.addf %816, %820 : vector<16x24xf32>
    %c14_466 = arith.constant 14 : index
    %c0_467 = arith.constant 0 : index
    %c0_468 = arith.constant 0 : index
    %822 = vector.load %arg10[%c14_466, %c0_467, %c0_468] : memref<16x18x24xf32, #tpu.memory_space<vmem>>, vector<1x18x24xf32>
    %823 = vector.shape_cast %822 : vector<1x18x24xf32> to vector<18x24xf32>
    %824 = vector.extract_strided_slice %823 {offsets = [0, 0], sizes = [16, 24], strides = [1, 1]} : vector<18x24xf32> to vector<16x24xf32>
    %c6_469 = arith.constant 6 : index
    %c0_470 = arith.constant 0 : index
    %825 = vector.load %arg4[%c6_469, %c0_470] : memref<9x24xf32, #tpu.memory_space<vmem>>, vector<1x24xf32>
    %826 = vector.broadcast %825 : vector<1x24xf32> to vector<16x24xf32>
    %827 = arith.mulf %824, %826 : vector<16x24xf32>
    %828 = arith.addf %821, %827 : vector<16x24xf32>
    %829 = vector.extract_strided_slice %823 {offsets = [1, 0], sizes = [16, 24], strides = [1, 1]} : vector<18x24xf32> to vector<16x24xf32>
    %c7_471 = arith.constant 7 : index
    %c0_472 = arith.constant 0 : index
    %830 = vector.load %arg4[%c7_471, %c0_472] : memref<9x24xf32, #tpu.memory_space<vmem>>, vector<1x24xf32>
    %831 = vector.broadcast %830 : vector<1x24xf32> to vector<16x24xf32>
    %832 = arith.mulf %829, %831 : vector<16x24xf32>
    %833 = arith.addf %828, %832 : vector<16x24xf32>
    %834 = vector.extract_strided_slice %823 {offsets = [2, 0], sizes = [16, 24], strides = [1, 1]} : vector<18x24xf32> to vector<16x24xf32>
    %c8_473 = arith.constant 8 : index
    %c0_474 = arith.constant 0 : index
    %835 = vector.load %arg4[%c8_473, %c0_474] : memref<9x24xf32, #tpu.memory_space<vmem>>, vector<1x24xf32>
    %836 = vector.broadcast %835 : vector<1x24xf32> to vector<16x24xf32>
    %837 = arith.mulf %834, %836 : vector<16x24xf32>
    %838 = arith.addf %833, %837 : vector<16x24xf32>
    %839 = vector.broadcast %77 : vector<1x24xf32> to vector<16x24xf32>
    %840 = arith.addf %838, %839 : vector<16x24xf32>
    %cst_475 = arith.constant 0.000000e+00 : f32
    %841 = vector.broadcast %cst_475 : f32 to vector<16x24xf32>
    %842 = arith.maximumf %840, %841 : vector<16x24xf32>
    %843 = arith.truncf %842 : vector<16x24xf32> to vector<16x24xbf16>
    %c208_476 = arith.constant 208 : index
    %c0_477 = arith.constant 0 : index
    %844 = vector.load %arg11[%c208_476, %c0_477] : memref<256x24xbf16, #tpu.memory_space<vmem>>, vector<16x24xbf16>
    tpu.vector_store %arg11[%c208_476, %c0_477], %843 {strides = array<i32>} : memref<256x24xbf16, #tpu.memory_space<vmem>>, vector<16x24xbf16>,
    %c13_478 = arith.constant 13 : index
    %c0_479 = arith.constant 0 : index
    %c0_480 = arith.constant 0 : index
    %845 = vector.load %arg10[%c13_478, %c0_479, %c0_480] : memref<16x18x24xf32, #tpu.memory_space<vmem>>, vector<1x18x24xf32>
    %846 = vector.shape_cast %845 : vector<1x18x24xf32> to vector<18x24xf32>
    %847 = vector.extract_strided_slice %846 {offsets = [0, 0], sizes = [16, 24], strides = [1, 1]} : vector<18x24xf32> to vector<16x24xf32>
    %c0_481 = arith.constant 0 : index
    %c0_482 = arith.constant 0 : index
    %848 = vector.load %arg4[%c0_481, %c0_482] : memref<9x24xf32, #tpu.memory_space<vmem>>, vector<1x24xf32>
    %849 = vector.broadcast %848 : vector<1x24xf32> to vector<16x24xf32>
    %850 = arith.mulf %847, %849 : vector<16x24xf32>
    %851 = vector.extract_strided_slice %846 {offsets = [1, 0], sizes = [16, 24], strides = [1, 1]} : vector<18x24xf32> to vector<16x24xf32>
    %c1_483 = arith.constant 1 : index
    %c0_484 = arith.constant 0 : index
    %852 = vector.load %arg4[%c1_483, %c0_484] : memref<9x24xf32, #tpu.memory_space<vmem>>, vector<1x24xf32>
    %853 = vector.broadcast %852 : vector<1x24xf32> to vector<16x24xf32>
    %854 = arith.mulf %851, %853 : vector<16x24xf32>
    %855 = arith.addf %850, %854 : vector<16x24xf32>
    %856 = vector.extract_strided_slice %846 {offsets = [2, 0], sizes = [16, 24], strides = [1, 1]} : vector<18x24xf32> to vector<16x24xf32>
    %c2_485 = arith.constant 2 : index
    %c0_486 = arith.constant 0 : index
    %857 = vector.load %arg4[%c2_485, %c0_486] : memref<9x24xf32, #tpu.memory_space<vmem>>, vector<1x24xf32>
    %858 = vector.broadcast %857 : vector<1x24xf32> to vector<16x24xf32>
    %859 = arith.mulf %856, %858 : vector<16x24xf32>
    %860 = arith.addf %855, %859 : vector<16x24xf32>
    %c14_487 = arith.constant 14 : index
    %c0_488 = arith.constant 0 : index
    %c0_489 = arith.constant 0 : index
    %861 = vector.load %arg10[%c14_487, %c0_488, %c0_489] : memref<16x18x24xf32, #tpu.memory_space<vmem>>, vector<1x18x24xf32>
    %862 = vector.shape_cast %861 : vector<1x18x24xf32> to vector<18x24xf32>
    %863 = vector.extract_strided_slice %862 {offsets = [0, 0], sizes = [16, 24], strides = [1, 1]} : vector<18x24xf32> to vector<16x24xf32>
    %c3_490 = arith.constant 3 : index
    %c0_491 = arith.constant 0 : index
    %864 = vector.load %arg4[%c3_490, %c0_491] : memref<9x24xf32, #tpu.memory_space<vmem>>, vector<1x24xf32>
    %865 = vector.broadcast %864 : vector<1x24xf32> to vector<16x24xf32>
    %866 = arith.mulf %863, %865 : vector<16x24xf32>
    %867 = arith.addf %860, %866 : vector<16x24xf32>
    %868 = vector.extract_strided_slice %862 {offsets = [1, 0], sizes = [16, 24], strides = [1, 1]} : vector<18x24xf32> to vector<16x24xf32>
    %c4_492 = arith.constant 4 : index
    %c0_493 = arith.constant 0 : index
    %869 = vector.load %arg4[%c4_492, %c0_493] : memref<9x24xf32, #tpu.memory_space<vmem>>, vector<1x24xf32>
    %870 = vector.broadcast %869 : vector<1x24xf32> to vector<16x24xf32>
    %871 = arith.mulf %868, %870 : vector<16x24xf32>
    %872 = arith.addf %867, %871 : vector<16x24xf32>
    %873 = vector.extract_strided_slice %862 {offsets = [2, 0], sizes = [16, 24], strides = [1, 1]} : vector<18x24xf32> to vector<16x24xf32>
    %c5_494 = arith.constant 5 : index
    %c0_495 = arith.constant 0 : index
    %874 = vector.load %arg4[%c5_494, %c0_495] : memref<9x24xf32, #tpu.memory_space<vmem>>, vector<1x24xf32>
    %875 = vector.broadcast %874 : vector<1x24xf32> to vector<16x24xf32>
    %876 = arith.mulf %873, %875 : vector<16x24xf32>
    %877 = arith.addf %872, %876 : vector<16x24xf32>
    %c15_496 = arith.constant 15 : index
    %c0_497 = arith.constant 0 : index
    %c0_498 = arith.constant 0 : index
    %878 = vector.load %arg10[%c15_496, %c0_497, %c0_498] : memref<16x18x24xf32, #tpu.memory_space<vmem>>, vector<1x18x24xf32>
    %879 = vector.shape_cast %878 : vector<1x18x24xf32> to vector<18x24xf32>
    %880 = vector.extract_strided_slice %879 {offsets = [0, 0], sizes = [16, 24], strides = [1, 1]} : vector<18x24xf32> to vector<16x24xf32>
    %c6_499 = arith.constant 6 : index
    %c0_500 = arith.constant 0 : index
    %881 = vector.load %arg4[%c6_499, %c0_500] : memref<9x24xf32, #tpu.memory_space<vmem>>, vector<1x24xf32>
    %882 = vector.broadcast %881 : vector<1x24xf32> to vector<16x24xf32>
    %883 = arith.mulf %880, %882 : vector<16x24xf32>
    %884 = arith.addf %877, %883 : vector<16x24xf32>
    %885 = vector.extract_strided_slice %879 {offsets = [1, 0], sizes = [16, 24], strides = [1, 1]} : vector<18x24xf32> to vector<16x24xf32>
    %c7_501 = arith.constant 7 : index
    %c0_502 = arith.constant 0 : index
    %886 = vector.load %arg4[%c7_501, %c0_502] : memref<9x24xf32, #tpu.memory_space<vmem>>, vector<1x24xf32>
    %887 = vector.broadcast %886 : vector<1x24xf32> to vector<16x24xf32>
    %888 = arith.mulf %885, %887 : vector<16x24xf32>
    %889 = arith.addf %884, %888 : vector<16x24xf32>
    %890 = vector.extract_strided_slice %879 {offsets = [2, 0], sizes = [16, 24], strides = [1, 1]} : vector<18x24xf32> to vector<16x24xf32>
    %c8_503 = arith.constant 8 : index
    %c0_504 = arith.constant 0 : index
    %891 = vector.load %arg4[%c8_503, %c0_504] : memref<9x24xf32, #tpu.memory_space<vmem>>, vector<1x24xf32>
    %892 = vector.broadcast %891 : vector<1x24xf32> to vector<16x24xf32>
    %893 = arith.mulf %890, %892 : vector<16x24xf32>
    %894 = arith.addf %889, %893 : vector<16x24xf32>
    %895 = vector.broadcast %77 : vector<1x24xf32> to vector<16x24xf32>
    %896 = arith.addf %894, %895 : vector<16x24xf32>
    %cst_505 = arith.constant 0.000000e+00 : f32
    %897 = vector.broadcast %cst_505 : f32 to vector<16x24xf32>
    %898 = arith.maximumf %896, %897 : vector<16x24xf32>
    %899 = arith.truncf %898 : vector<16x24xf32> to vector<16x24xbf16>
    %c224_506 = arith.constant 224 : index
    %c0_507 = arith.constant 0 : index
    %900 = vector.load %arg11[%c224_506, %c0_507] : memref<256x24xbf16, #tpu.memory_space<vmem>>, vector<16x24xbf16>
    tpu.vector_store %arg11[%c224_506, %c0_507], %899 {strides = array<i32>} : memref<256x24xbf16, #tpu.memory_space<vmem>>, vector<16x24xbf16>,
    %c14_508 = arith.constant 14 : index
    %c0_509 = arith.constant 0 : index
    %c0_510 = arith.constant 0 : index
    %901 = vector.load %arg10[%c14_508, %c0_509, %c0_510] : memref<16x18x24xf32, #tpu.memory_space<vmem>>, vector<1x18x24xf32>
    %902 = vector.shape_cast %901 : vector<1x18x24xf32> to vector<18x24xf32>
    %903 = vector.extract_strided_slice %902 {offsets = [0, 0], sizes = [16, 24], strides = [1, 1]} : vector<18x24xf32> to vector<16x24xf32>
    %c0_511 = arith.constant 0 : index
    %c0_512 = arith.constant 0 : index
    %904 = vector.load %arg4[%c0_511, %c0_512] : memref<9x24xf32, #tpu.memory_space<vmem>>, vector<1x24xf32>
    %905 = vector.broadcast %904 : vector<1x24xf32> to vector<16x24xf32>
    %906 = arith.mulf %903, %905 : vector<16x24xf32>
    %907 = vector.extract_strided_slice %902 {offsets = [1, 0], sizes = [16, 24], strides = [1, 1]} : vector<18x24xf32> to vector<16x24xf32>
    %c1_513 = arith.constant 1 : index
    %c0_514 = arith.constant 0 : index
    %908 = vector.load %arg4[%c1_513, %c0_514] : memref<9x24xf32, #tpu.memory_space<vmem>>, vector<1x24xf32>
    %909 = vector.broadcast %908 : vector<1x24xf32> to vector<16x24xf32>
    %910 = arith.mulf %907, %909 : vector<16x24xf32>
    %911 = arith.addf %906, %910 : vector<16x24xf32>
    %912 = vector.extract_strided_slice %902 {offsets = [2, 0], sizes = [16, 24], strides = [1, 1]} : vector<18x24xf32> to vector<16x24xf32>
    %c2_515 = arith.constant 2 : index
    %c0_516 = arith.constant 0 : index
    %913 = vector.load %arg4[%c2_515, %c0_516] : memref<9x24xf32, #tpu.memory_space<vmem>>, vector<1x24xf32>
    %914 = vector.broadcast %913 : vector<1x24xf32> to vector<16x24xf32>
    %915 = arith.mulf %912, %914 : vector<16x24xf32>
    %916 = arith.addf %911, %915 : vector<16x24xf32>
    %c15_517 = arith.constant 15 : index
    %c0_518 = arith.constant 0 : index
    %c0_519 = arith.constant 0 : index
    %917 = vector.load %arg10[%c15_517, %c0_518, %c0_519] : memref<16x18x24xf32, #tpu.memory_space<vmem>>, vector<1x18x24xf32>
    %918 = vector.shape_cast %917 : vector<1x18x24xf32> to vector<18x24xf32>
    %919 = vector.extract_strided_slice %918 {offsets = [0, 0], sizes = [16, 24], strides = [1, 1]} : vector<18x24xf32> to vector<16x24xf32>
    %c3_520 = arith.constant 3 : index
    %c0_521 = arith.constant 0 : index
    %920 = vector.load %arg4[%c3_520, %c0_521] : memref<9x24xf32, #tpu.memory_space<vmem>>, vector<1x24xf32>
    %921 = vector.broadcast %920 : vector<1x24xf32> to vector<16x24xf32>
    %922 = arith.mulf %919, %921 : vector<16x24xf32>
    %923 = arith.addf %916, %922 : vector<16x24xf32>
    %924 = vector.extract_strided_slice %918 {offsets = [1, 0], sizes = [16, 24], strides = [1, 1]} : vector<18x24xf32> to vector<16x24xf32>
    %c4_522 = arith.constant 4 : index
    %c0_523 = arith.constant 0 : index
    %925 = vector.load %arg4[%c4_522, %c0_523] : memref<9x24xf32, #tpu.memory_space<vmem>>, vector<1x24xf32>
    %926 = vector.broadcast %925 : vector<1x24xf32> to vector<16x24xf32>
    %927 = arith.mulf %924, %926 : vector<16x24xf32>
    %928 = arith.addf %923, %927 : vector<16x24xf32>
    %929 = vector.extract_strided_slice %918 {offsets = [2, 0], sizes = [16, 24], strides = [1, 1]} : vector<18x24xf32> to vector<16x24xf32>
    %c5_524 = arith.constant 5 : index
    %c0_525 = arith.constant 0 : index
    %930 = vector.load %arg4[%c5_524, %c0_525] : memref<9x24xf32, #tpu.memory_space<vmem>>, vector<1x24xf32>
    %931 = vector.broadcast %930 : vector<1x24xf32> to vector<16x24xf32>
    %932 = arith.mulf %929, %931 : vector<16x24xf32>
    %933 = arith.addf %928, %932 : vector<16x24xf32>
    %934 = vector.broadcast %77 : vector<1x24xf32> to vector<16x24xf32>
    %935 = arith.addf %933, %934 : vector<16x24xf32>
    %cst_526 = arith.constant 0.000000e+00 : f32
    %936 = vector.broadcast %cst_526 : f32 to vector<16x24xf32>
    %937 = arith.maximumf %935, %936 : vector<16x24xf32>
    %938 = arith.truncf %937 : vector<16x24xf32> to vector<16x24xbf16>
    %c240_527 = arith.constant 240 : index
    %c0_528 = arith.constant 0 : index
    %939 = vector.load %arg11[%c240_527, %c0_528] : memref<256x24xbf16, #tpu.memory_space<vmem>>, vector<16x24xbf16>
    tpu.vector_store %arg11[%c240_527, %c0_528], %938 {strides = array<i32>} : memref<256x24xbf16, #tpu.memory_space<vmem>>, vector<16x24xbf16>,
    %c0_529 = arith.constant 0 : index
    %c0_530 = arith.constant 0 : index
    %940 = vector.load %arg11[%c0_529, %c0_530] : memref<256x24xbf16, #tpu.memory_space<vmem>>, vector<256x24xbf16>
    %c0_531 = arith.constant 0 : index
    %c0_532 = arith.constant 0 : index
    %941 = vector.load %arg6[%c0_531, %c0_532] : memref<24x16xbf16, #tpu.memory_space<vmem>>, vector<24x16xbf16>
    %cst_533 = arith.constant dense<0.000000e+00> : vector<256x16xf32>
    %942 = tpu.matmul %940, %941, %cst_533 {dimension_numbers = #tpu.dot_dimension_numbers<[1], [0], [0], [1], [0, 0, 1, 1], [], []>} : vector<256x24xbf16>, vector<24x16xbf16>, vector<256x16xf32> -> vector<256x16xf32>
    %c0_534 = arith.constant 0 : index
    %c0_535 = arith.constant 0 : index
    %943 = vector.load %arg7[%c0_534, %c0_535] : memref<1x16xf32, #tpu.memory_space<vmem>>, vector<1x16xf32>
    %944 = vector.broadcast %943 : vector<1x16xf32> to vector<256x16xf32>
    %945 = arith.addf %942, %944 : vector<256x16xf32>
    %946 = arith.truncf %945 : vector<256x16xf32> to vector<256x16xbf16>
    %c0_536 = arith.constant 0 : index
    %c0_537 = arith.constant 0 : index
    %c0_538 = arith.constant 0 : index
    %947 = vector.load %arg8[%c0_536, %c0_537, %c0_538] : memref<1x256x16xbf16, #tpu.memory_space<vmem>>, vector<1x256x16xbf16>
    %948 = vector.shape_cast %947 : vector<1x256x16xbf16> to vector<256x16xbf16>
    %949 = vector.shape_cast %946 : vector<256x16xbf16> to vector<1x256x16xbf16>
    tpu.vector_store %arg8[%c0_536, %c0_537, %c0_538], %949 {strides = array<i32>} : memref<1x256x16xbf16, #tpu.memory_space<vmem>>, vector<1x256x16xbf16>,
    return
  }
  func.func @transform_0(%arg0: i32) -> (i32, i32, i32) {
    %c0_i32 = arith.constant 0 : i32
    %c0_i32_0 = arith.constant 0 : i32
    %c0_i32_1 = arith.constant 0 : i32
    return %arg0, %c0_i32, %c0_i32_0 : i32, i32, i32
  }
  func.func @transform_1(%arg0: i32) -> (i32, i32) {
    %c0_i32 = arith.constant 0 : i32
    %c0_i32_0 = arith.constant 0 : i32
    %c0_i32_1 = arith.constant 0 : i32
    return %c0_i32, %c0_i32_0 : i32, i32
  }
  func.func @transform_2(%arg0: i32) -> (i32, i32) {
    %c0_i32 = arith.constant 0 : i32
    %c0_i32_0 = arith.constant 0 : i32
    %c0_i32_1 = arith.constant 0 : i32
    return %c0_i32, %c0_i32_0 : i32, i32
  }
  func.func @transform_3(%arg0: i32) -> (i32, i32) {
    %c0_i32 = arith.constant 0 : i32
    %c0_i32_0 = arith.constant 0 : i32
    %c0_i32_1 = arith.constant 0 : i32
    return %c0_i32, %c0_i32_0 : i32, i32
  }
  func.func @transform_4(%arg0: i32) -> (i32, i32) {
    %c0_i32 = arith.constant 0 : i32
    %c0_i32_0 = arith.constant 0 : i32
    %c0_i32_1 = arith.constant 0 : i32
    return %c0_i32, %c0_i32_0 : i32, i32
  }
  func.func @transform_5(%arg0: i32) -> (i32, i32) {
    %c0_i32 = arith.constant 0 : i32
    %c0_i32_0 = arith.constant 0 : i32
    %c0_i32_1 = arith.constant 0 : i32
    return %c0_i32, %c0_i32_0 : i32, i32
  }
  func.func @transform_6(%arg0: i32) -> (i32, i32) {
    %c0_i32 = arith.constant 0 : i32
    %c0_i32_0 = arith.constant 0 : i32
    %c0_i32_1 = arith.constant 0 : i32
    return %c0_i32, %c0_i32_0 : i32, i32
  }
  func.func @transform_7(%arg0: i32) -> (i32, i32, i32) {
    %c0_i32 = arith.constant 0 : i32
    %c0_i32_0 = arith.constant 0 : i32
    %c0_i32_1 = arith.constant 0 : i32
    return %arg0, %c0_i32, %c0_i32_0 : i32, i32, i32
  }
}

</mosaic_0001>

<llo_original>
// kernel: tpu_custom_call.1
$region0: #{tpu_custom_call.1}
  #allocation0 [shape = 'u32[]', space=smem, size = 0x4, offset = 0x4, fixed_abs, tag = 'smem constant byte address 0x4 - core index']
  #allocation1 [shape = 'u32[144,128]{1,0:T(1,128)}', space=vmem, size = 0x12000, scoped, tag = 'internal scratch']
  #allocation2 [shape = 'f32[256,24]{1,0:T(8,128)}', space=vmem, size = 0x20000, scoped, tag = 'scratch operand']
  #allocation3 [shape = 'f32[16,18,24]{2,1,0:T(8,128)}', space=vmem, size = 0x30000, scoped, tag = 'scratch operand']
  #allocation4 [shape = 'bf16[256,24]{1,0:T(16,128)(2,1)}', space=vmem, size = 0x10000, scoped, tag = 'scratch operand']
  %s0 = inlined_call_operand.vmem [shape: bf16[2,256,27], index: 0, kind: input, shape index: {}]
  %s1 = inlined_call_operand.vmem [shape: bf16[27,24], index: 1, kind: input, shape index: {}]
  %s2 = inlined_call_operand.vmem [shape: f32[1,24], index: 2, kind: input, shape index: {}]
  %s3 = inlined_call_operand.vmem [shape: f32[9,24], index: 3, kind: input, shape index: {}]
  %s4 = inlined_call_operand.vmem [shape: f32[1,24], index: 4, kind: input, shape index: {}]
  %s5 = inlined_call_operand.vmem [shape: bf16[24,16], index: 5, kind: input, shape index: {}]
  %s6 = inlined_call_operand.vmem [shape: f32[1,16], index: 6, kind: input, shape index: {}]
  %s7 = inlined_call_operand.vmem [shape: bf16[2,256,16], index: 7, kind: output, shape index: {}]
  %s8 = sld [smem:[#allocation0]]
  $region61: #{tpu_custom_call.1} parent=0
    _
  %s10 = ssub.s32 1, %s8
  %s11 = scalar_select 0, %s10, %s8
  loop: start=0, step=1, limit=4
  $region2: #{tpu_custom_call.1} parent=0 // loop_pre_header
    _
  $region3: #{tpu_custom_call.1} parent=0 // loop_header
    %s13 = sphi 0, %s17
    %p14 = scmp.ge.s32.totalorder %s13, 4
    %s23 = sphi 0, %s25
    %s26 = sphi 0, %s23
    %s27 = sphi 0, %s26
    %s43 = sphi 0, %s27
    %s47 = sphi 0, %s47
    %s49 = sphi 0, %s47
    %s50 = sphi 0, %s49
    %s64 = sphi 0, %s50
    %s68 = sphi 0, %s68
    %s70 = sphi 0, %s68
    %s71 = sphi 0, %s70
    %s85 = sphi 0, %s71
    %s89 = sphi 0, %s89
    %s91 = sphi 0, %s89
    %s92 = sphi 0, %s91
    %s106 = sphi 0, %s92
    %s110 = sphi 0, %s110
    %s112 = sphi 0, %s110
    %s113 = sphi 0, %s112
    %s127 = sphi 0, %s113
    %s131 = sphi 0, %s131
    %s133 = sphi 0, %s131
    %s134 = sphi 0, %s133
    %s148 = sphi 0, %s134
    %s152 = sphi 0, %s152
    %s154 = sphi 0, %s152
    %s155 = sphi 0, %s154
    %s169 = sphi 0, %s155
    %s175 = sphi 0, %s177
    %s178 = sphi 0, %s175
    %s179 = sphi 0, %s178
    %s195 = sphi 0, %s179
  $region4: #{tpu_custom_call.1} parent=0 // loop_header_branch
    %16 = sbr.rel (%p14) target = $region8
  $region5: #{tpu_custom_call.1} parent=0 // loop_body
    %s18 = ssub.s32 %s13, 1
    %s19 = ssub.s32 %s13, 2
    %s20 = sadd.s32 %s13, 1
    %s21 = ssub.s32 %s13, %s20
    %p22 = scmp.eq.s32.totalorder %s21, 0
    %s24 = sadd.s32 %s23, 1
    %s25 = scalar_select %p22, %s23, %s24
    %p28 = pneg %p22
    %p29 = scmp.eq.s32.totalorder %s13, 1
    %p30 = por %p28, %p29
    %p31 = scmp.ne.s32.totalorder %s23, %s26
    %p32 = scmp.eq.s32.totalorder %s13, 0
    %p33 = por %p31, %p32
    %p34 = scmp.ne.s32.totalorder %s23, %s26
    %p35 = scmp.eq.s32.totalorder %s18, 1
    %p36 = por %p34, %p35
    %p37 = scmp.ne.s32.totalorder %s26, %s27
    %p38 = scmp.eq.s32.totalorder %s18, 0
    %p39 = por %p37, %p38
    %p40 = scmp.ne.s32.totalorder %s26, %s27
    %p41 = scmp.eq.s32.totalorder %s19, 1
    %p42 = por %p40, %p41
    %p44 = scmp.ne.s32.totalorder %s27, %s43
    %p45 = scmp.eq.s32.totalorder %s19, 0
    %p46 = por %p44, %p45
    %s48 = sadd.s32 %s47, 1
    %p51 = scmp.eq.s32.totalorder %s13, 1
    %p52 = scmp.ne.s32.totalorder %s47, %s49
    %p53 = scmp.eq.s32.totalorder %s13, 0
    %p54 = por %p52, %p53
    %p55 = scmp.ne.s32.totalorder %s47, %s49
    %p56 = scmp.eq.s32.totalorder %s18, 1
    %p57 = por %p55, %p56
    %p58 = scmp.ne.s32.totalorder %s49, %s50
    %p59 = scmp.eq.s32.totalorder %s18, 0
    %p60 = por %p58, %p59
    %p61 = scmp.ne.s32.totalorder %s49, %s50
    %p62 = scmp.eq.s32.totalorder %s19, 1
    %p63 = por %p61, %p62
    %p65 = scmp.ne.s32.totalorder %s50, %s64
    %p66 = scmp.eq.s32.totalorder %s19, 0
    %p67 = por %p65, %p66
    %s69 = sadd.s32 %s68, 1
    %p72 = scmp.eq.s32.totalorder %s13, 1
    %p73 = scmp.ne.s32.totalorder %s68, %s70
    %p74 = scmp.eq.s32.totalorder %s13, 0
    %p75 = por %p73, %p74
    %p76 = scmp.ne.s32.totalorder %s68, %s70
    %p77 = scmp.eq.s32.totalorder %s18, 1
    %p78 = por %p76, %p77
    %p79 = scmp.ne.s32.totalorder %s70, %s71
    %p80 = scmp.eq.s32.totalorder %s18, 0
    %p81 = por %p79, %p80
    %p82 = scmp.ne.s32.totalorder %s70, %s71
    %p83 = scmp.eq.s32.totalorder %s19, 1
    %p84 = por %p82, %p83
    %p86 = scmp.ne.s32.totalorder %s71, %s85
    %p87 = scmp.eq.s32.totalorder %s19, 0
    %p88 = por %p86, %p87
    %s90 = sadd.s32 %s89, 1
    %p93 = scmp.eq.s32.totalorder %s13, 1
    %p94 = scmp.ne.s32.totalorder %s89, %s91
    %p95 = scmp.eq.s32.totalorder %s13, 0
    %p96 = por %p94, %p95
    %p97 = scmp.ne.s32.totalorder %s89, %s91
    %p98 = scmp.eq.s32.totalorder %s18, 1
    %p99 = por %p97, %p98
    %p100 = scmp.ne.s32.totalorder %s91, %s92
    %p101 = scmp.eq.s32.totalorder %s18, 0
    %p102 = por %p100, %p101
    %p103 = scmp.ne.s32.totalorder %s91, %s92
    %p104 = scmp.eq.s32.totalorder %s19, 1
    %p105 = por %p103, %p104
    %p107 = scmp.ne.s32.totalorder %s92, %s106
    %p108 = scmp.eq.s32.totalorder %s19, 0
    %p109 = por %p107, %p108
    %s111 = sadd.s32 %s110, 1
    %p114 = scmp.eq.s32.totalorder %s13, 1
    %p115 = scmp.ne.s32.totalorder %s110, %s112
    %p116 = scmp.eq.s32.totalorder %s13, 0
    %p117 = por %p115, %p116
    %p118 = scmp.ne.s32.totalorder %s110, %s112
    %p119 = scmp.eq.s32.totalorder %s18, 1
    %p120 = por %p118, %p119
    %p121 = scmp.ne.s32.totalorder %s112, %s113
    %p122 = scmp.eq.s32.totalorder %s18, 0
    %p123 = por %p121, %p122
    %p124 = scmp.ne.s32.totalorder %s112, %s113
    %p125 = scmp.eq.s32.totalorder %s19, 1
    %p126 = por %p124, %p125
    %p128 = scmp.ne.s32.totalorder %s113, %s127
    %p129 = scmp.eq.s32.totalorder %s19, 0
    %p130 = por %p128, %p129
    %s132 = sadd.s32 %s131, 1
    %p135 = scmp.eq.s32.totalorder %s13, 1
    %p136 = scmp.ne.s32.totalorder %s131, %s133
    %p137 = scmp.eq.s32.totalorder %s13, 0
    %p138 = por %p136, %p137
    %p139 = scmp.ne.s32.totalorder %s131, %s133
    %p140 = scmp.eq.s32.totalorder %s18, 1
    %p141 = por %p139, %p140
    %p142 = scmp.ne.s32.totalorder %s133, %s134
    %p143 = scmp.eq.s32.totalorder %s18, 0
    %p144 = por %p142, %p143
    %p145 = scmp.ne.s32.totalorder %s133, %s134
    %p146 = scmp.eq.s32.totalorder %s19, 1
    %p147 = por %p145, %p146
    %p149 = scmp.ne.s32.totalorder %s134, %s148
    %p150 = scmp.eq.s32.totalorder %s19, 0
    %p151 = por %p149, %p150
    %s153 = sadd.s32 %s152, 1
    %p156 = scmp.eq.s32.totalorder %s13, 1
    %p157 = scmp.ne.s32.totalorder %s152, %s154
    %p158 = scmp.eq.s32.totalorder %s13, 0
    %p159 = por %p157, %p158
    %p160 = scmp.ne.s32.totalorder %s152, %s154
    %p161 = scmp.eq.s32.totalorder %s18, 1
    %p162 = por %p160, %p161
    %p163 = scmp.ne.s32.totalorder %s154, %s155
    %p164 = scmp.eq.s32.totalorder %s18, 0
    %p165 = por %p163, %p164
    %p166 = scmp.ne.s32.totalorder %s154, %s155
    %p167 = scmp.eq.s32.totalorder %s19, 1
    %p168 = por %p166, %p167
    %p170 = scmp.ne.s32.totalorder %s155, %s169
    %p171 = scmp.eq.s32.totalorder %s19, 0
    %p172 = por %p170, %p171
    %s173 = ssub.s32 %s13, %s20
    %p174 = scmp.eq.s32.totalorder %s173, 0
    %s176 = sadd.s32 %s175, 1
    %s177 = scalar_select %p174, %s175, %s176
    %p180 = pneg %p174
    %p181 = scmp.eq.s32.totalorder %s13, 1
    %p182 = por %p180, %p181
    %p183 = scmp.ne.s32.totalorder %s175, %s178
    %p184 = scmp.eq.s32.totalorder %s13, 0
    %p185 = por %p183, %p184
    %p186 = scmp.ne.s32.totalorder %s175, %s178
    %p187 = scmp.eq.s32.totalorder %s18, 1
    %p188 = por %p186, %p187
    %p189 = scmp.ne.s32.totalorder %s178, %s179
    %p190 = scmp.eq.s32.totalorder %s18, 0
    %p191 = por %p189, %p190
    %p192 = scmp.ne.s32.totalorder %s178, %s179
    %p193 = scmp.eq.s32.totalorder %s19, 1
    %p194 = por %p192, %p193
    %p196 = scmp.ne.s32.totalorder %s179, %s195
    %p197 = scmp.eq.s32.totalorder %s19, 0
    %p198 = por %p196, %p197
    %p199 = scmp.le.s32.totalorder 1, %s13
    %p200 = scmp.lt.s32.totalorder %s13, 3
    %p201 = pnand %p199, %p200
    %p202 = pneg %p201
    // Predicated region
    $region9: #{tpu_custom_call.1} parent=5 // pred_check
      _
    $region10: #{tpu_custom_call.1} parent=5 // pred_check_branch
      %204 = sbr.rel (%p201) target = $region12
    $region11: #{tpu_custom_call.1} parent=5 // pred_region
      %s205 = ssub.s32 %s13, 1
      // Predicated region
      $region13: #{tpu_custom_call.1} parent=11 // pred_check
        %p206 = pneg %p60
      $region14: #{tpu_custom_call.1} parent=11 // pred_check_branch
        %208 = sbr.rel (%p206) target = $region16
      $region15: #{tpu_custom_call.1} parent=11 // pred_region
        _
      $region16: #{tpu_custom_call.1} parent=11 // pred_fallthru
        _
      // Predicated region
      $region17: #{tpu_custom_call.1} parent=11 // pred_check
        %p209 = pneg %p81
      $region18: #{tpu_custom_call.1} parent=11 // pred_check_branch
        %211 = sbr.rel (%p209) target = $region20
      $region19: #{tpu_custom_call.1} parent=11 // pred_region
        _
      $region20: #{tpu_custom_call.1} parent=11 // pred_fallthru
        _
      // Predicated region
      $region21: #{tpu_custom_call.1} parent=11 // pred_check
        %p212 = pneg %p102
      $region22: #{tpu_custom_call.1} parent=11 // pred_check_branch
        %214 = sbr.rel (%p212) target = $region24
      $region23: #{tpu_custom_call.1} parent=11 // pred_region
        _
      $region24: #{tpu_custom_call.1} parent=11 // pred_fallthru
        _
      // Predicated region
      $region25: #{tpu_custom_call.1} parent=11 // pred_check
        %p215 = pneg %p123
      $region26: #{tpu_custom_call.1} parent=11 // pred_check_branch
        %217 = sbr.rel (%p215) target = $region28
      $region27: #{tpu_custom_call.1} parent=11 // pred_region
        _
      $region28: #{tpu_custom_call.1} parent=11 // pred_fallthru
        _
      // Predicated region
      $region29: #{tpu_custom_call.1} parent=11 // pred_check
        %p218 = pneg %p144
      $region30: #{tpu_custom_call.1} parent=11 // pred_check_branch
        %220 = sbr.rel (%p218) target = $region32
      $region31: #{tpu_custom_call.1} parent=11 // pred_region
        _
      $region32: #{tpu_custom_call.1} parent=11 // pred_fallthru
        _
      // Predicated region
      $region33: #{tpu_custom_call.1} parent=11 // pred_check
        %p221 = pneg %p165
      $region34: #{tpu_custom_call.1} parent=11 // pred_check_branch
        %223 = sbr.rel (%p221) target = $region36
      $region35: #{tpu_custom_call.1} parent=11 // pred_region
        _
      $region36: #{tpu_custom_call.1} parent=11 // pred_fallthru
        _
    $region12: #{tpu_custom_call.1} parent=5 // pred_fallthru
      _
    %p224 = scmp.lt.s32.totalorder %s13, 2
    // Predicated region
    $region37: #{tpu_custom_call.1} parent=5 // pred_check
      %p225 = pneg %p224
    $region38: #{tpu_custom_call.1} parent=5 // pred_check_branch
      %227 = sbr.rel (%p225) target = $region40
    $region39: #{tpu_custom_call.1} parent=5 // pred_region
      // Predicated region
      $region41: #{tpu_custom_call.1} parent=39 // pred_check
        %p228 = pneg %p33
      $region42: #{tpu_custom_call.1} parent=39 // pred_check_branch
        %230 = sbr.rel (%p228) target = $region44
      $region43: #{tpu_custom_call.1} parent=39 // pred_region
        %p231 = scmp.lt.s32.totalorder %s13, 1
        %s232 = scalar_select %p231, %s13, 1
        %s233 = smul.addr %s232, 32
        %s234 = smul.addr %s233, 4
        %s235 = scalar_lea.vmem %s0, %s234
      $region44: #{tpu_custom_call.1} parent=39 // pred_fallthru
        _
    $region40: #{tpu_custom_call.1} parent=5 // pred_fallthru
      _
    %p236 = scmp.le.s32.totalorder 1, %s13
    %p237 = scmp.lt.s32.totalorder %s13, 3
    %p238 = pnand %p236, %p237
    %p239 = pneg %p238
    // Predicated region
    $region45: #{tpu_custom_call.1} parent=5 // pred_check
      _
    $region46: #{tpu_custom_call.1} parent=5 // pred_check_branch
      %241 = sbr.rel (%p238) target = $region48
    $region47: #{tpu_custom_call.1} parent=5 // pred_region
      %s242 = ssub.s32 %s13, 1
      %p243 = scmp.lt.s32.totalorder %s18, 1
      %s244 = scalar_select %p243, %s18, 1
      %s245 = smul.addr %s244, 32
      %s246 = smul.addr %s245, 4
      %s247 = scalar_lea.vmem %s0, %s246
      %p248 = pneg %p39
      %p249 = pneg %p36
      %p250 = pneg %p60
      %p251 = pneg %p57
      %p252 = pneg %p81
      %p253 = pneg %p78
      %p254 = pneg %p102
      %p255 = pneg %p99
      %p256 = pneg %p123
      %p257 = pneg %p120
      %p258 = pneg %p144
      %p259 = pneg %p141
      %p260 = pneg %p165
      %p261 = pneg %p162
      %p262 = pneg %p191
      %p263 = pneg %p188
      %p264 = scmp.lt.s32.totalorder %s18, 1
      %s265 = scalar_select %p264, %s18, 1
      %s266 = smul.addr %s265, 32
      %s267 = smul.addr %s266, 4
      %s268 = scalar_lea.vmem %s7, %s267
      %p269 = scmp.lt.s32.totalorder %s18, 1
      %s270 = scalar_select %p269, %s18, 1
      %s271 = smul.addr %s270, 32
      %s272 = smul.addr %s271, 4
      %s273 = scalar_lea.vmem %s0, %s272
      %p274 = scmp.lt.s32.totalorder %s18, 1
      %s275 = scalar_select %p274, %s18, 1
      %s276 = smul.addr %s275, 32
      %s277 = smul.addr %s276, 4
      %s278 = scalar_lea.vmem %s7, %s277
      %v280 = vld [vmem:[%s273] sm:$0xf]
      %v281 = vld [vmem:[%s273 + $0x4] sm:$0xf]
      %v282 = vld [vmem:[%s273 + $0x8] sm:$0xf]
      %v283 = vld [vmem:[%s273 + $0xc] sm:$0xf]
      %v284 = vld [vmem:[%s273 + $0x10] sm:$0xf]
      %v285 = vld [vmem:[%s273 + $0x14] sm:$0xf]
      %v286 = vld [vmem:[%s273 + $0x18] sm:$0xf]
      %v287 = vld [vmem:[%s273 + $0x1c] sm:$0xf]
      %v288 = vld [vmem:[%s273 + $0x20] sm:$0xf]
      %v289 = vld [vmem:[%s273 + $0x24] sm:$0xf]
      %v290 = vld [vmem:[%s273 + $0x28] sm:$0xf]
      %v291 = vld [vmem:[%s273 + $0x2c] sm:$0xf]
      %v292 = vld [vmem:[%s273 + $0x30] sm:$0xf]
      %v293 = vld [vmem:[%s273 + $0x34] sm:$0xf]
      %v294 = vld [vmem:[%s273 + $0x38] sm:$0xf]
      %v295 = vld [vmem:[%s273 + $0x3c] sm:$0xf]
      %v296 = vld [vmem:[%s273 + $0x40] sm:$0xf]
      %v297 = vld [vmem:[%s273 + $0x44] sm:$0xf]
      %v298 = vld [vmem:[%s273 + $0x48] sm:$0xf]
      %v299 = vld [vmem:[%s273 + $0x4c] sm:$0xf]
      %v300 = vld [vmem:[%s273 + $0x50] sm:$0xf]
      %v301 = vld [vmem:[%s273 + $0x54] sm:$0xf]
      %v302 = vld [vmem:[%s273 + $0x58] sm:$0xf]
      %v303 = vld [vmem:[%s273 + $0x5c] sm:$0xf]
      %v304 = vld [vmem:[%s273 + $0x60] sm:$0xf]
      %v305 = vld [vmem:[%s273 + $0x64] sm:$0xf]
      %v306 = vld [vmem:[%s273 + $0x68] sm:$0xf]
      %v307 = vld [vmem:[%s273 + $0x6c] sm:$0xf]
      %v308 = vld [vmem:[%s273 + $0x70] sm:$0xf]
      %v309 = vld [vmem:[%s273 + $0x74] sm:$0xf]
      %v310 = vld [vmem:[%s273 + $0x78] sm:$0xf]
      %v311 = vld [vmem:[%s273 + $0x7c] sm:$0xf]
      %v312 = vld [vmem:[%s1] sm:$0xf]
      %v313 = vld [vmem:[%s1 + $0x4] sm:$0xf]
      %v314 = vld [vmem:[%s1 + $0x8] sm:$0xf]
      %v315 = vld [vmem:[%s1 + $0xc] sm:$0x3]
      %v316 = vld [vmem:[%s2] sm:$0x1]
      %v318 = vlaneseq
      %v319 = vshrl.u32 %v318, 7
      %v320 = vsub.s32 0, %v319
      %v321 = vrot.slane %v316, %v320
      %v355 = vunpack.c.l.b16 %v280
      %v356 = vunpack.c.l.b16 %v281
      %v357 = vunpack.c.l.b16 %v282
      %v358 = vunpack.c.l.b16 %v283
      %v359 = vunpack.c.l.b16 %v284
      %v360 = vunpack.c.l.b16 %v285
      %v361 = vunpack.c.l.b16 %v286
      %v362 = vunpack.c.l.b16 %v287
      %v363 = vunpack.c.l.b16 %v288
      %v364 = vunpack.c.l.b16 %v289
      %v365 = vunpack.c.l.b16 %v290
      %v366 = vunpack.c.l.b16 %v291
      %v367 = vunpack.c.l.b16 %v292
      %v368 = vunpack.c.l.b16 %v293
      %v369 = vunpack.c.l.b16 %v294
      %v370 = vunpack.c.l.b16 %v295
      %v371 = vunpack.c.l.b16 %v296
      %v372 = vunpack.c.l.b16 %v297
      %v373 = vunpack.c.l.b16 %v298
      %v374 = vunpack.c.l.b16 %v299
      %v375 = vunpack.c.l.b16 %v300
      %v376 = vunpack.c.l.b16 %v301
      %v377 = vunpack.c.l.b16 %v302
      %v378 = vunpack.c.l.b16 %v303
      %v379 = vunpack.c.l.b16 %v304
      %v380 = vunpack.c.l.b16 %v305
      %v381 = vunpack.c.l.b16 %v306
      %v382 = vunpack.c.l.b16 %v307
      %v383 = vunpack.c.l.b16 %v308
      %v384 = vunpack.c.l.b16 %v309
      %v385 = vunpack.c.l.b16 %v310
      %v386 = vunpack.c.l.b16 %v311
      %v387 = vpack.c.b16 %v356, %v355
      %v388 = vpack.c.b16 %v358, %v357
      %v389 = vpack.c.b16 %v360, %v359
      %v390 = vpack.c.b16 %v362, %v361
      %v391 = vpack.c.b16 %v364, %v363
      %v392 = vpack.c.b16 %v366, %v365
      %v393 = vpack.c.b16 %v368, %v367
      %v394 = vpack.c.b16 %v370, %v369
      %v395 = vpack.c.b16 %v372, %v371
      %v396 = vpack.c.b16 %v374, %v373
      %v397 = vpack.c.b16 %v376, %v375
      %v398 = vpack.c.b16 %v378, %v377
      %v399 = vpack.c.b16 %v380, %v379
      %v400 = vpack.c.b16 %v382, %v381
      %v401 = vpack.c.b16 %v384, %v383
      %v402 = vpack.c.b16 %v386, %v385
      %v407 = vunpack.c.l.b16 %v312
      %v408 = vunpack.c.l.b16 %v313
      %v409 = vunpack.c.l.b16 %v314
      %v410 = vunpack.c.l.b16 %v315
      %v411 = vpack.c.b16 %v408, %v407
      %v412 = vpack.c.b16 %v410, %v409
      %vm414 = vcmask 220160
      %v416 = vsel %vm414, %v387, 0
      %v419 = vsel %vm414, %v388, 0
      %v422 = vsel %vm414, %v389, 0
      %v425 = vsel %vm414, %v390, 0
      %v428 = vsel %vm414, %v391, 0
      %v431 = vsel %vm414, %v392, 0
      %v434 = vsel %vm414, %v393, 0
      %v437 = vsel %vm414, %v394, 0
      %v440 = vsel %vm414, %v395, 0
      %v443 = vsel %vm414, %v396, 0
      %v446 = vsel %vm414, %v397, 0
      %v449 = vsel %vm414, %v398, 0
      %v452 = vsel %vm414, %v399, 0
      %v455 = vsel %vm414, %v400, 0
      %v458 = vsel %vm414, %v401, 0
      %v461 = vsel %vm414, %v402, 0
      %vm463 = vcmask 1044480
      %vm464 = vcmask 1045504
      %v465 = vsel %vm463, 4294967295, 65535
      %v466 = vsel %vm464, %v465, 0
      %v468 = vand.u32 %v412, %v466
      %470 = vmatprep.subr.bf16.mxu0 0
      %471 = vmatpush1.bf16.msra.mxu0 %v411
      %472 = vmatprep.subr.bf16.mxu0 0
      %473 = vmatpush1.bf16.msra.mxu0 %v468
      %474 = vmatprep.subr.bf16.mxu0 0
      %475 = vmatpush1.bf16.msra.mxu0 0
      %476 = vmatprep.subr.bf16.mxu0 0
      %477 = vmatpush1.bf16.msra.mxu0 0
      %478 = vmatprep.subr.bf16.mxu0 0
      %479 = vmatpush1.bf16.msra.mxu0 0
      %480 = vmatprep.subr.bf16.mxu0 0
      %481 = vmatpush1.bf16.msra.mxu0 0
      %482 = vmatprep.subr.bf16.mxu0 0
      %483 = vmatpush1.bf16.msra.mxu0 0
      %484 = vmatprep.subr.bf16.mxu0 0
      %485 = vmatpush1.bf16.msra.mxu0 0
      %486 = vmatprep.subr.bf16.mxu0 0
      %487 = vmatpush1.bf16.msra.mxu0 0
      %488 = vmatprep.subr.bf16.mxu0 0
      %489 = vmatpush1.bf16.msra.mxu0 0
      %490 = vmatprep.subr.bf16.mxu0 0
      %491 = vmatpush1.bf16.msra.mxu0 0
      %492 = vmatprep.subr.bf16.mxu0 0
      %493 = vmatpush1.bf16.msra.mxu0 0
      %494 = vmatprep.subr.bf16.mxu0 0
      %495 = vmatpush1.bf16.msra.mxu0 0
      %496 = vmatprep.subr.bf16.mxu0 0
      %497 = vmatpush1.bf16.msra.mxu0 0
      %498 = vmatprep.subr.bf16.mxu0 0
      %499 = vmatpush1.bf16.msra.mxu0 0
      %500 = vmatprep.subr.bf16.mxu0 0
      %501 = vmatpush1.bf16.msra.mxu0 0
      %502 = vmatprep.mubr.bf16.mxu0 0
      %503 = vmatmul.mubr.bf16.gmra.mrb[0].mxu0 %v416
      %v504 = vpop.f32.mrb[0].mxu0
      %v505 = vadd.f32 %v321, %v504
      %v506 = vpop.f32.mrb[0].mxu0
      %v507 = vpop.f32.mrb[0].mxu0
      %v508 = vadd.f32 %v321, %v507
      %v509 = vpop.f32.mrb[0].mxu0
      %510 = vmatprep.mubr.bf16.mxu0 0
      %511 = vmatmul.mubr.bf16.gmra.mrb[0].mxu0 %v419
      %v512 = vpop.f32.mrb[0].mxu0
      %v513 = vadd.f32 %v321, %v512
      %v514 = vpop.f32.mrb[0].mxu0
      %v515 = vpop.f32.mrb[0].mxu0
      %v516 = vadd.f32 %v321, %v515
      %v517 = vpop.f32.mrb[0].mxu0
      %518 = vmatprep.mubr.bf16.mxu0 0
      %519 = vmatmul.mubr.bf16.gmra.mrb[0].mxu0 %v422
      %v520 = vpop.f32.mrb[0].mxu0
      %v521 = vadd.f32 %v321, %v520
      %v522 = vpop.f32.mrb[0].mxu0
      %v523 = vpop.f32.mrb[0].mxu0
      %v524 = vadd.f32 %v321, %v523
      %v525 = vpop.f32.mrb[0].mxu0
      %526 = vmatprep.mubr.bf16.mxu0 0
      %527 = vmatmul.mubr.bf16.gmra.mrb[0].mxu0 %v425
      %v528 = vpop.f32.mrb[0].mxu0
      %v529 = vadd.f32 %v321, %v528
      %v530 = vpop.f32.mrb[0].mxu0
      %v531 = vpop.f32.mrb[0].mxu0
      %v532 = vadd.f32 %v321, %v531
      %v533 = vpop.f32.mrb[0].mxu0
      %534 = vmatprep.mubr.bf16.mxu0 0
      %535 = vmatmul.mubr.bf16.gmra.mrb[0].mxu0 %v428
      %v536 = vpop.f32.mrb[0].mxu0
      %v537 = vadd.f32 %v321, %v536
      %v538 = vpop.f32.mrb[0].mxu0
      %v539 = vpop.f32.mrb[0].mxu0
      %v540 = vadd.f32 %v321, %v539
      %v541 = vpop.f32.mrb[0].mxu0
      %542 = vmatprep.mubr.bf16.mxu0 0
      %543 = vmatmul.mubr.bf16.gmra.mrb[0].mxu0 %v431
      %v544 = vpop.f32.mrb[0].mxu0
      %v545 = vadd.f32 %v321, %v544
      %v546 = vpop.f32.mrb[0].mxu0
      %v547 = vpop.f32.mrb[0].mxu0
      %v548 = vadd.f32 %v321, %v547
      %v549 = vpop.f32.mrb[0].mxu0
      %550 = vmatprep.mubr.bf16.mxu0 0
      %551 = vmatmul.mubr.bf16.gmra.mrb[0].mxu0 %v434
      %v552 = vpop.f32.mrb[0].mxu0
      %v553 = vadd.f32 %v321, %v552
      %v554 = vpop.f32.mrb[0].mxu0
      %v555 = vpop.f32.mrb[0].mxu0
      %v556 = vadd.f32 %v321, %v555
      %v557 = vpop.f32.mrb[0].mxu0
      %558 = vmatprep.mubr.bf16.mxu0 0
      %559 = vmatmul.mubr.bf16.gmra.mrb[0].mxu0 %v437
      %v560 = vpop.f32.mrb[0].mxu0
      %v561 = vadd.f32 %v321, %v560
      %v562 = vpop.f32.mrb[0].mxu0
      %v563 = vpop.f32.mrb[0].mxu0
      %v564 = vadd.f32 %v321, %v563
      %v565 = vpop.f32.mrb[0].mxu0
      %566 = vmatprep.mubr.bf16.mxu0 0
      %567 = vmatmul.mubr.bf16.gmra.mrb[0].mxu0 %v440
      %v568 = vpop.f32.mrb[0].mxu0
      %v569 = vadd.f32 %v321, %v568
      %v570 = vpop.f32.mrb[0].mxu0
      %v571 = vpop.f32.mrb[0].mxu0
      %v572 = vadd.f32 %v321, %v571
      %v573 = vpop.f32.mrb[0].mxu0
      %574 = vmatprep.mubr.bf16.mxu0 0
      %575 = vmatmul.mubr.bf16.gmra.mrb[0].mxu0 %v443
      %v576 = vpop.f32.mrb[0].mxu0
      %v577 = vadd.f32 %v321, %v576
      %v578 = vpop.f32.mrb[0].mxu0
      %v579 = vpop.f32.mrb[0].mxu0
      %v580 = vadd.f32 %v321, %v579
      %v581 = vpop.f32.mrb[0].mxu0
      %582 = vmatprep.mubr.bf16.mxu0 0
      %583 = vmatmul.mubr.bf16.gmra.mrb[0].mxu0 %v446
      %v584 = vpop.f32.mrb[0].mxu0
      %v585 = vadd.f32 %v321, %v584
      %v586 = vpop.f32.mrb[0].mxu0
      %v587 = vpop.f32.mrb[0].mxu0
      %v588 = vadd.f32 %v321, %v587
      %v589 = vpop.f32.mrb[0].mxu0
      %590 = vmatprep.mubr.bf16.mxu0 0
      %591 = vmatmul.mubr.bf16.gmra.mrb[0].mxu0 %v449
      %v592 = vpop.f32.mrb[0].mxu0
      %v593 = vadd.f32 %v321, %v592
      %v594 = vpop.f32.mrb[0].mxu0
      %v595 = vpop.f32.mrb[0].mxu0
      %v596 = vadd.f32 %v321, %v595
      %v597 = vpop.f32.mrb[0].mxu0
      %598 = vmatprep.mubr.bf16.mxu0 0
      %599 = vmatmul.mubr.bf16.gmra.mrb[0].mxu0 %v452
      %v600 = vpop.f32.mrb[0].mxu0
      %v601 = vadd.f32 %v321, %v600
      %v602 = vpop.f32.mrb[0].mxu0
      %v603 = vpop.f32.mrb[0].mxu0
      %v604 = vadd.f32 %v321, %v603
      %v605 = vpop.f32.mrb[0].mxu0
      %606 = vmatprep.mubr.bf16.mxu0 0
      %607 = vmatmul.mubr.bf16.gmra.mrb[0].mxu0 %v455
      %v608 = vpop.f32.mrb[0].mxu0
      %v609 = vadd.f32 %v321, %v608
      %v610 = vpop.f32.mrb[0].mxu0
      %v611 = vpop.f32.mrb[0].mxu0
      %v612 = vadd.f32 %v321, %v611
      %v613 = vpop.f32.mrb[0].mxu0
      %614 = vmatprep.mubr.bf16.mxu0 0
      %615 = vmatmul.mubr.bf16.gmra.mrb[0].mxu0 %v458
      %v616 = vpop.f32.mrb[0].mxu0
      %v617 = vadd.f32 %v321, %v616
      %v618 = vpop.f32.mrb[0].mxu0
      %v619 = vpop.f32.mrb[0].mxu0
      %v620 = vadd.f32 %v321, %v619
      %v621 = vpop.f32.mrb[0].mxu0
      %622 = vmatprep.mubr.bf16.mxu0 0
      %623 = vmatmul.mubr.bf16.gmra.mrb[0].mxu0 %v461
      %v624 = vpop.f32.mrb[0].mxu0
      %v625 = vadd.f32 %v321, %v624
      %v626 = vpop.f32.mrb[0].mxu0
      %v627 = vpop.f32.mrb[0].mxu0
      %v628 = vadd.f32 %v321, %v627
      %v629 = vpop.f32.mrb[0].mxu0
      %630 = vdwg.mxu0
      %v631 = vmax.f32 %v505, 0.0
      %v632 = vmax.f32 %v508, 0.0
      %v633 = vmax.f32 %v513, 0.0
      %v634 = vmax.f32 %v516, 0.0
      %v635 = vmax.f32 %v521, 0.0
      %v636 = vmax.f32 %v524, 0.0
      %v637 = vmax.f32 %v529, 0.0
      %v638 = vmax.f32 %v532, 0.0
      %v639 = vmax.f32 %v537, 0.0
      %v640 = vmax.f32 %v540, 0.0
      %v641 = vmax.f32 %v545, 0.0
      %v642 = vmax.f32 %v548, 0.0
      %v643 = vmax.f32 %v553, 0.0
      %v644 = vmax.f32 %v556, 0.0
      %v645 = vmax.f32 %v561, 0.0
      %v646 = vmax.f32 %v564, 0.0
      %v647 = vmax.f32 %v569, 0.0
      %v648 = vmax.f32 %v572, 0.0
      %v649 = vmax.f32 %v577, 0.0
      %v650 = vmax.f32 %v580, 0.0
      %v651 = vmax.f32 %v585, 0.0
      %v652 = vmax.f32 %v588, 0.0
      %v653 = vmax.f32 %v593, 0.0
      %v654 = vmax.f32 %v596, 0.0
      %v655 = vmax.f32 %v601, 0.0
      %v656 = vmax.f32 %v604, 0.0
      %v657 = vmax.f32 %v609, 0.0
      %v658 = vmax.f32 %v612, 0.0
      %v659 = vmax.f32 %v617, 0.0
      %v660 = vmax.f32 %v620, 0.0
      %v661 = vmax.f32 %v625, 0.0
      %v662 = vmax.f32 %v628, 0.0
      %vm663 = vcmask 195584
      %664 = vst.msk [vmem:[#allocation2] sm:$0xff] %vm663, %v631
      %665 = vst.msk [vmem:[#allocation2 + $0x8] sm:$0xff] %vm663, %v632
      %666 = vst.msk [vmem:[#allocation2 + $0x10] sm:$0xff] %vm663, %v633
      %667 = vst.msk [vmem:[#allocation2 + $0x18] sm:$0xff] %vm663, %v634
      %668 = vst.msk [vmem:[#allocation2 + $0x20] sm:$0xff] %vm663, %v635
      %669 = vst.msk [vmem:[#allocation2 + $0x28] sm:$0xff] %vm663, %v636
      %670 = vst.msk [vmem:[#allocation2 + $0x30] sm:$0xff] %vm663, %v637
      %671 = vst.msk [vmem:[#allocation2 + $0x38] sm:$0xff] %vm663, %v638
      %672 = vst.msk [vmem:[#allocation2 + $0x40] sm:$0xff] %vm663, %v639
      %673 = vst.msk [vmem:[#allocation2 + $0x48] sm:$0xff] %vm663, %v640
      %674 = vst.msk [vmem:[#allocation2 + $0x50] sm:$0xff] %vm663, %v641
      %675 = vst.msk [vmem:[#allocation2 + $0x58] sm:$0xff] %vm663, %v642
      %676 = vst.msk [vmem:[#allocation2 + $0x60] sm:$0xff] %vm663, %v643
      %677 = vst.msk [vmem:[#allocation2 + $0x68] sm:$0xff] %vm663, %v644
      %678 = vst.msk [vmem:[#allocation2 + $0x70] sm:$0xff] %vm663, %v645
      %679 = vst.msk [vmem:[#allocation2 + $0x78] sm:$0xff] %vm663, %v646
      %680 = vst.msk [vmem:[#allocation2 + $0x80] sm:$0xff] %vm663, %v647
      %681 = vst.msk [vmem:[#allocation2 + $0x88] sm:$0xff] %vm663, %v648
      %682 = vst.msk [vmem:[#allocation2 + $0x90] sm:$0xff] %vm663, %v649
      %683 = vst.msk [vmem:[#allocation2 + $0x98] sm:$0xff] %vm663, %v650
      %684 = vst.msk [vmem:[#allocation2 + $0xa0] sm:$0xff] %vm663, %v651
      %685 = vst.msk [vmem:[#allocation2 + $0xa8] sm:$0xff] %vm663, %v652
      %686 = vst.msk [vmem:[#allocation2 + $0xb0] sm:$0xff] %vm663, %v653
      %687 = vst.msk [vmem:[#allocation2 + $0xb8] sm:$0xff] %vm663, %v654
      %688 = vst.msk [vmem:[#allocation2 + $0xc0] sm:$0xff] %vm663, %v655
      %689 = vst.msk [vmem:[#allocation2 + $0xc8] sm:$0xff] %vm663, %v656
      %690 = vst.msk [vmem:[#allocation2 + $0xd0] sm:$0xff] %vm663, %v657
      %691 = vst.msk [vmem:[#allocation2 + $0xd8] sm:$0xff] %vm663, %v658
      %692 = vst.msk [vmem:[#allocation2 + $0xe0] sm:$0xff] %vm663, %v659
      %693 = vst.msk [vmem:[#allocation2 + $0xe8] sm:$0xff] %vm663, %v660
      %694 = vst.msk [vmem:[#allocation2 + $0xf0] sm:$0xff] %vm663, %v661
      %695 = vst.msk [vmem:[#allocation2 + $0xf8] sm:$0xff] %vm663, %v662
      %vm696 = vcmask 188416
      %697 = vst.msk [vmem:[#allocation3] sm:$0x1] %vm696, 0.0
      %698 = vst.msk [vmem:[#allocation3 + $0x18] sm:$0x1] %vm696, 0.0
      %699 = vst.msk [vmem:[#allocation3 + $0x30] sm:$0x1] %vm696, 0.0
      %700 = vst.msk [vmem:[#allocation3 + $0x48] sm:$0x1] %vm696, 0.0
      %701 = vst.msk [vmem:[#allocation3 + $0x60] sm:$0x1] %vm696, 0.0
      %702 = vst.msk [vmem:[#allocation3 + $0x78] sm:$0x1] %vm696, 0.0
      %703 = vst.msk [vmem:[#allocation3 + $0x90] sm:$0x1] %vm696, 0.0
      %704 = vst.msk [vmem:[#allocation3 + $0xa8] sm:$0x1] %vm696, 0.0
      %705 = vst.msk [vmem:[#allocation3 + $0xc0] sm:$0x1] %vm696, 0.0
      %706 = vst.msk [vmem:[#allocation3 + $0xd8] sm:$0x1] %vm696, 0.0
      %707 = vst.msk [vmem:[#allocation3 + $0xf0] sm:$0x1] %vm696, 0.0
      %708 = vst.msk [vmem:[#allocation3 + $0x108] sm:$0x1] %vm696, 0.0
      %709 = vst.msk [vmem:[#allocation3 + $0x120] sm:$0x1] %vm696, 0.0
      %710 = vst.msk [vmem:[#allocation3 + $0x138] sm:$0x1] %vm696, 0.0
      %711 = vst.msk [vmem:[#allocation3 + $0x150] sm:$0x1] %vm696, 0.0
      %712 = vst.msk [vmem:[#allocation3 + $0x168] sm:$0x1] %vm696, 0.0
      %713 = vst.msk [vmem:[#allocation3 + $0x11] sm:$0x1] %vm696, 0.0
      %714 = vst.msk [vmem:[#allocation3 + $0x29] sm:$0x1] %vm696, 0.0
      %715 = vst.msk [vmem:[#allocation3 + $0x41] sm:$0x1] %vm696, 0.0
      %716 = vst.msk [vmem:[#allocation3 + $0x59] sm:$0x1] %vm696, 0.0
      %717 = vst.msk [vmem:[#allocation3 + $0x71] sm:$0x1] %vm696, 0.0
      %718 = vst.msk [vmem:[#allocation3 + $0x89] sm:$0x1] %vm696, 0.0
      %719 = vst.msk [vmem:[#allocation3 + $0xa1] sm:$0x1] %vm696, 0.0
      %720 = vst.msk [vmem:[#allocation3 + $0xb9] sm:$0x1] %vm696, 0.0
      %721 = vst.msk [vmem:[#allocation3 + $0xd1] sm:$0x1] %vm696, 0.0
      %722 = vst.msk [vmem:[#allocation3 + $0xe9] sm:$0x1] %vm696, 0.0
      %723 = vst.msk [vmem:[#allocation3 + $0x101] sm:$0x1] %vm696, 0.0
      %724 = vst.msk [vmem:[#allocation3 + $0x119] sm:$0x1] %vm696, 0.0
      %725 = vst.msk [vmem:[#allocation3 + $0x131] sm:$0x1] %vm696, 0.0
      %726 = vst.msk [vmem:[#allocation3 + $0x149] sm:$0x1] %vm696, 0.0
      %727 = vst.msk [vmem:[#allocation3 + $0x161] sm:$0x1] %vm696, 0.0
      %728 = vst.msk [vmem:[#allocation3 + $0x179] sm:$0x1] %vm696, 0.0
      %v729 = vld [vmem:[#allocation2] sm:$0xff]
      %v730 = vld [vmem:[#allocation2 + $0x8] sm:$0xff]
      %731 = vst.msk [vmem:[#allocation3 + $0x1] sm:$0xff] %vm663, %v729
      %732 = vst.msk [vmem:[#allocation3 + $0x9] sm:$0xff] %vm663, %v730
      %v733 = vld [vmem:[#allocation2 + $0x10] sm:$0xff]
      %v734 = vld [vmem:[#allocation2 + $0x18] sm:$0xff]
      %s735 = scalar_lea.vmem [#allocation3], 24
      %736 = vst.msk [vmem:[%s735 + $0x1] sm:$0xff] %vm663, %v733
      %737 = vst.msk [vmem:[%s735 + $0x9] sm:$0xff] %vm663, %v734
      %v738 = vld [vmem:[#allocation2 + $0x20] sm:$0xff]
      %v739 = vld [vmem:[#allocation2 + $0x28] sm:$0xff]
      %s740 = scalar_lea.vmem [#allocation3], 48
      %741 = vst.msk [vmem:[%s740 + $0x1] sm:$0xff] %vm663, %v738
      %742 = vst.msk [vmem:[%s740 + $0x9] sm:$0xff] %vm663, %v739
      %v743 = vld [vmem:[#allocation2 + $0x30] sm:$0xff]
      %v744 = vld [vmem:[#allocation2 + $0x38] sm:$0xff]
      %s745 = scalar_lea.vmem [#allocation3], 72
      %746 = vst.msk [vmem:[%s745 + $0x1] sm:$0xff] %vm663, %v743
      %747 = vst.msk [vmem:[%s745 + $0x9] sm:$0xff] %vm663, %v744
      %v748 = vld [vmem:[#allocation2 + $0x40] sm:$0xff]
      %v749 = vld [vmem:[#allocation2 + $0x48] sm:$0xff]
      %s750 = scalar_lea.vmem [#allocation3], 96
      %751 = vst.msk [vmem:[%s750 + $0x1] sm:$0xff] %vm663, %v748
      %752 = vst.msk [vmem:[%s750 + $0x9] sm:$0xff] %vm663, %v749
      %v753 = vld [vmem:[#allocation2 + $0x50] sm:$0xff]
      %v754 = vld [vmem:[#allocation2 + $0x58] sm:$0xff]
      %s755 = scalar_lea.vmem [#allocation3], 120
      %756 = vst.msk [vmem:[%s755 + $0x1] sm:$0xff] %vm663, %v753
      %757 = vst.msk [vmem:[%s755 + $0x9] sm:$0xff] %vm663, %v754
      %v758 = vld [vmem:[#allocation2 + $0x60] sm:$0xff]
      %v759 = vld [vmem:[#allocation2 + $0x68] sm:$0xff]
      %s760 = scalar_lea.vmem [#allocation3], 144
      %761 = vst.msk [vmem:[%s760 + $0x1] sm:$0xff] %vm663, %v758
      %762 = vst.msk [vmem:[%s760 + $0x9] sm:$0xff] %vm663, %v759
      %v763 = vld [vmem:[#allocation2 + $0x70] sm:$0xff]
      %v764 = vld [vmem:[#allocation2 + $0x78] sm:$0xff]
      %s765 = scalar_lea.vmem [#allocation3], 168
      %766 = vst.msk [vmem:[%s765 + $0x1] sm:$0xff] %vm663, %v763
      %767 = vst.msk [vmem:[%s765 + $0x9] sm:$0xff] %vm663, %v764
      %v768 = vld [vmem:[#allocation2 + $0x80] sm:$0xff]
      %v769 = vld [vmem:[#allocation2 + $0x88] sm:$0xff]
      %s770 = scalar_lea.vmem [#allocation3], 192
      %771 = vst.msk [vmem:[%s770 + $0x1] sm:$0xff] %vm663, %v768
      %772 = vst.msk [vmem:[%s770 + $0x9] sm:$0xff] %vm663, %v769
      %v773 = vld [vmem:[#allocation2 + $0x90] sm:$0xff]
      %v774 = vld [vmem:[#allocation2 + $0x98] sm:$0xff]
      %s775 = scalar_lea.vmem [#allocation3], 216
      %776 = vst.msk [vmem:[%s775 + $0x1] sm:$0xff] %vm663, %v773
      %777 = vst.msk [vmem:[%s775 + $0x9] sm:$0xff] %vm663, %v774
      %v778 = vld [vmem:[#allocation2 + $0xa0] sm:$0xff]
      %v779 = vld [vmem:[#allocation2 + $0xa8] sm:$0xff]
      %s780 = scalar_lea.vmem [#allocation3], 240
      %781 = vst.msk [vmem:[%s780 + $0x1] sm:$0xff] %vm663, %v778
      %782 = vst.msk [vmem:[%s780 + $0x9] sm:$0xff] %vm663, %v779
      %v783 = vld [vmem:[#allocation2 + $0xb0] sm:$0xff]
      %v784 = vld [vmem:[#allocation2 + $0xb8] sm:$0xff]
      %s785 = scalar_lea.vmem [#allocation3], 264
      %786 = vst.msk [vmem:[%s785 + $0x1] sm:$0xff] %vm663, %v783
      %787 = vst.msk [vmem:[%s785 + $0x9] sm:$0xff] %vm663, %v784
      %v788 = vld [vmem:[#allocation2 + $0xc0] sm:$0xff]
      %v789 = vld [vmem:[#allocation2 + $0xc8] sm:$0xff]
      %s790 = scalar_lea.vmem [#allocation3], 288
      %791 = vst.msk [vmem:[%s790 + $0x1] sm:$0xff] %vm663, %v788
      %792 = vst.msk [vmem:[%s790 + $0x9] sm:$0xff] %vm663, %v789
      %v793 = vld [vmem:[#allocation2 + $0xd0] sm:$0xff]
      %v794 = vld [vmem:[#allocation2 + $0xd8] sm:$0xff]
      %s795 = scalar_lea.vmem [#allocation3], 312
      %796 = vst.msk [vmem:[%s795 + $0x1] sm:$0xff] %vm663, %v793
      %797 = vst.msk [vmem:[%s795 + $0x9] sm:$0xff] %vm663, %v794
      %v798 = vld [vmem:[#allocation2 + $0xe0] sm:$0xff]
      %v799 = vld [vmem:[#allocation2 + $0xe8] sm:$0xff]
      %s800 = scalar_lea.vmem [#allocation3], 336
      %801 = vst.msk [vmem:[%s800 + $0x1] sm:$0xff] %vm663, %v798
      %802 = vst.msk [vmem:[%s800 + $0x9] sm:$0xff] %vm663, %v799
      %v803 = vld [vmem:[#allocation2 + $0xf0] sm:$0xff]
      %v804 = vld [vmem:[#allocation2 + $0xf8] sm:$0xff]
      %s805 = scalar_lea.vmem [#allocation3], 360
      %806 = vst.msk [vmem:[%s805 + $0x1] sm:$0xff] %vm663, %v803
      %807 = vst.msk [vmem:[%s805 + $0x9] sm:$0xff] %vm663, %v804
      %v808 = vld [vmem:[%s4] sm:$0x1]
      %v809 = vld [vmem:[#allocation3] sm:$0xff]
      %v810 = vld [vmem:[#allocation3 + $0x8] sm:$0xff]
      %v811 = vld [vmem:[#allocation3 + $0x10] sm:$0x3]
      %v812 = vld [vmem:[%s3 + $0x3] sm:$0x1]
      %v813 = vlaneseq
      %v814 = vshrl.u32 %v813, 7
      %v815 = vsub.s32 0, %v814
      %v816 = vrot.slane %v812, %v815
      %v817 = vmul.f32 %v809, %v816
      %v818 = vmul.f32 %v810, %v816
      %v819 = vld [vmem:[%s3 + $0x4] sm:$0x1]
      %v820 = vlaneseq
      %v821 = vshrl.u32 %v820, 7
      %v822 = vsub.s32 0, %v821
      %v823 = vrot.slane %v819, %v822
      %v824 = vmul.f32 %v809, %v823
      %v825 = vmul.f32 %v810, %v823
      %v826 = vmul.f32 %v811, %v823
      %vm830 = vcmask 1046528
      %v831 = vrot.slane %v824, 1
      %v832 = vrot.slane %v825, 1
      %v833 = vsel %vm830, %v831, %v832
      %v834 = vrot.slane %v826, 1
      %v835 = vsel %vm830, %v832, %v834
      %v838 = vadd.f32 %v817, %v833
      %v839 = vadd.f32 %v818, %v835
      %v840 = vld [vmem:[%s3 + $0x5] sm:$0x1]
      %v841 = vlaneseq
      %v842 = vshrl.u32 %v841, 7
      %v843 = vsub.s32 0, %v842
      %v844 = vrot.slane %v840, %v843
      %v845 = vmul.f32 %v809, %v844
      %v846 = vmul.f32 %v810, %v844
      %v847 = vmul.f32 %v811, %v844
      %v851 = vrot.slane %v845, 2
      %v852 = vrot.slane %v846, 2
      %v853 = vsel %vm464, %v851, %v852
      %v854 = vrot.slane %v847, 2
      %v855 = vsel %vm464, %v852, %v854
      %v858 = vadd.f32 %v838, %v853
      %v859 = vadd.f32 %v839, %v855
      %v860 = vld [vmem:[%s735] sm:$0xff]
      %v861 = vld [vmem:[%s735 + $0x8] sm:$0xff]
      %v862 = vld [vmem:[%s735 + $0x10] sm:$0x3]
      %v863 = vld [vmem:[%s3 + $0x6] sm:$0x1]
      %v864 = vlaneseq
      %v865 = vshrl.u32 %v864, 7
      %v866 = vsub.s32 0, %v865
      %v867 = vrot.slane %v863, %v866
      %v868 = vmul.f32 %v860, %v867
      %v869 = vmul.f32 %v861, %v867
      %v870 = vadd.f32 %v858, %v868
      %v871 = vadd.f32 %v859, %v869
      %v872 = vld [vmem:[%s3 + $0x7] sm:$0x1]
      %v873 = vlaneseq
      %v874 = vshrl.u32 %v873, 7
      %v875 = vsub.s32 0, %v874
      %v876 = vrot.slane %v872, %v875
      %v877 = vmul.f32 %v860, %v876
      %v878 = vmul.f32 %v861, %v876
      %v879 = vmul.f32 %v862, %v876
      %v883 = vrot.slane %v877, 1
      %v884 = vrot.slane %v878, 1
      %v885 = vsel %vm830, %v883, %v884
      %v886 = vrot.slane %v879, 1
      %v887 = vsel %vm830, %v884, %v886
      %v890 = vadd.f32 %v870, %v885
      %v891 = vadd.f32 %v871, %v887
      %v892 = vld [vmem:[%s3 + $0x8] sm:$0x1]
      %v893 = vlaneseq
      %v894 = vshrl.u32 %v893, 7
      %v895 = vsub.s32 0, %v894
      %v896 = vrot.slane %v892, %v895
      %v897 = vmul.f32 %v860, %v896
      %v898 = vmul.f32 %v861, %v896
      %v899 = vmul.f32 %v862, %v896
      %v903 = vrot.slane %v897, 2
      %v904 = vrot.slane %v898, 2
      %v905 = vsel %vm464, %v903, %v904
      %v906 = vrot.slane %v899, 2
      %v907 = vsel %vm464, %v904, %v906
      %v910 = vadd.f32 %v890, %v905
      %v911 = vadd.f32 %v891, %v907
      %v913 = vlaneseq
      %v914 = vshrl.u32 %v913, 7
      %v915 = vsub.s32 0, %v914
      %v916 = vrot.slane %v808, %v915
      %v918 = vadd.f32 %v910, %v916
      %v919 = vadd.f32 %v911, %v916
      %v920 = vmax.f32 %v918, 0.0
      %v921 = vmax.f32 %v919, 0.0
      %v922 = vpack.c.bf16 %v921, %v920
      %923 = vst.msk [vmem:[#allocation4] sm:$0xff] %vm663, %v922
      %v924 = vld [vmem:[#allocation3] sm:$0xff]
      %v925 = vld [vmem:[#allocation3 + $0x8] sm:$0xff]
      %v926 = vld [vmem:[#allocation3 + $0x10] sm:$0x3]
      %v927 = vld [vmem:[%s3] sm:$0x1]
      %v928 = vlaneseq
      %v929 = vshrl.u32 %v928, 7
      %v930 = vsub.s32 0, %v929
      %v931 = vrot.slane %v927, %v930
      %v932 = vmul.f32 %v924, %v931
      %v933 = vmul.f32 %v925, %v931
      %v934 = vld [vmem:[%s3 + $0x1] sm:$0x1]
      %v935 = vlaneseq
      %v936 = vshrl.u32 %v935, 7
      %v937 = vsub.s32 0, %v936
      %v938 = vrot.slane %v934, %v937
      %v939 = vmul.f32 %v924, %v938
      %v940 = vmul.f32 %v925, %v938
      %v941 = vmul.f32 %v926, %v938
      %v945 = vrot.slane %v939, 1
      %v946 = vrot.slane %v940, 1
      %v947 = vsel %vm830, %v945, %v946
      %v948 = vrot.slane %v941, 1
      %v949 = vsel %vm830, %v946, %v948
      %v952 = vadd.f32 %v932, %v947
      %v953 = vadd.f32 %v933, %v949
      %v954 = vld [vmem:[%s3 + $0x2] sm:$0x1]
      %v955 = vlaneseq
      %v956 = vshrl.u32 %v955, 7
      %v957 = vsub.s32 0, %v956
      %v958 = vrot.slane %v954, %v957
      %v959 = vmul.f32 %v924, %v958
      %v960 = vmul.f32 %v925, %v958
      %v961 = vmul.f32 %v926, %v958
      %v965 = vrot.slane %v959, 2
      %v966 = vrot.slane %v960, 2
      %v967 = vsel %vm464, %v965, %v966
      %v968 = vrot.slane %v961, 2
      %v969 = vsel %vm464, %v966, %v968
      %v972 = vadd.f32 %v952, %v967
      %v973 = vadd.f32 %v953, %v969
      %v974 = vld [vmem:[%s735] sm:$0xff]
      %v975 = vld [vmem:[%s735 + $0x8] sm:$0xff]
      %v976 = vld [vmem:[%s735 + $0x10] sm:$0x3]
      %v977 = vld [vmem:[%s3 + $0x3] sm:$0x1]
      %v978 = vlaneseq
      %v979 = vshrl.u32 %v978, 7
      %v980 = vsub.s32 0, %v979
      %v981 = vrot.slane %v977, %v980
      %v982 = vmul.f32 %v974, %v981
      %v983 = vmul.f32 %v975, %v981
      %v984 = vadd.f32 %v972, %v982
      %v985 = vadd.f32 %v973, %v983
      %v986 = vld [vmem:[%s3 + $0x4] sm:$0x1]
      %v987 = vlaneseq
      %v988 = vshrl.u32 %v987, 7
      %v989 = vsub.s32 0, %v988
      %v990 = vrot.slane %v986, %v989
      %v991 = vmul.f32 %v974, %v990
      %v992 = vmul.f32 %v975, %v990
      %v993 = vmul.f32 %v976, %v990
      %v997 = vrot.slane %v991, 1
      %v998 = vrot.slane %v992, 1
      %v999 = vsel %vm830, %v997, %v998
      %v1000 = vrot.slane %v993, 1
      %v1001 = vsel %vm830, %v998, %v1000
      %v1004 = vadd.f32 %v984, %v999
      %v1005 = vadd.f32 %v985, %v1001
      %v1006 = vld [vmem:[%s3 + $0x5] sm:$0x1]
      %v1007 = vlaneseq
      %v1008 = vshrl.u32 %v1007, 7
      %v1009 = vsub.s32 0, %v1008
      %v1010 = vrot.slane %v1006, %v1009
      %v1011 = vmul.f32 %v974, %v1010
      %v1012 = vmul.f32 %v975, %v1010
      %v1013 = vmul.f32 %v976, %v1010
      %v1017 = vrot.slane %v1011, 2
      %v1018 = vrot.slane %v1012, 2
      %v1019 = vsel %vm464, %v1017, %v1018
      %v1020 = vrot.slane %v1013, 2
      %v1021 = vsel %vm464, %v1018, %v1020
      %v1024 = vadd.f32 %v1004, %v1019
      %v1025 = vadd.f32 %v1005, %v1021
      %v1026 = vld [vmem:[%s740] sm:$0xff]
      %v1027 = vld [vmem:[%s740 + $0x8] sm:$0xff]
      %v1028 = vld [vmem:[%s740 + $0x10] sm:$0x3]
      %v1029 = vld [vmem:[%s3 + $0x6] sm:$0x1]
      %v1030 = vlaneseq
      %v1031 = vshrl.u32 %v1030, 7
      %v1032 = vsub.s32 0, %v1031
      %v1033 = vrot.slane %v1029, %v1032
      %v1034 = vmul.f32 %v1026, %v1033
      %v1035 = vmul.f32 %v1027, %v1033
      %v1036 = vadd.f32 %v1024, %v1034
      %v1037 = vadd.f32 %v1025, %v1035
      %v1038 = vld [vmem:[%s3 + $0x7] sm:$0x1]
      %v1039 = vlaneseq
      %v1040 = vshrl.u32 %v1039, 7
      %v1041 = vsub.s32 0, %v1040
      %v1042 = vrot.slane %v1038, %v1041
      %v1043 = vmul.f32 %v1026, %v1042
      %v1044 = vmul.f32 %v1027, %v1042
      %v1045 = vmul.f32 %v1028, %v1042
      %v1049 = vrot.slane %v1043, 1
      %v1050 = vrot.slane %v1044, 1
      %v1051 = vsel %vm830, %v1049, %v1050
      %v1052 = vrot.slane %v1045, 1
      %v1053 = vsel %vm830, %v1050, %v1052
      %v1056 = vadd.f32 %v1036, %v1051
      %v1057 = vadd.f32 %v1037, %v1053
      %v1058 = vld [vmem:[%s3 + $0x8] sm:$0x1]
      %v1059 = vlaneseq
      %v1060 = vshrl.u32 %v1059, 7
      %v1061 = vsub.s32 0, %v1060
      %v1062 = vrot.slane %v1058, %v1061
      %v1063 = vmul.f32 %v1026, %v1062
      %v1064 = vmul.f32 %v1027, %v1062
      %v1065 = vmul.f32 %v1028, %v1062
      %v1069 = vrot.slane %v1063, 2
      %v1070 = vrot.slane %v1064, 2
      %v1071 = vsel %vm464, %v1069, %v1070
      %v1072 = vrot.slane %v1065, 2
      %v1073 = vsel %vm464, %v1070, %v1072
      %v1076 = vadd.f32 %v1056, %v1071
      %v1077 = vadd.f32 %v1057, %v1073
      %v1078 = vadd.f32 %v1076, %v916
      %v1079 = vadd.f32 %v1077, %v916
      %v1080 = vmax.f32 %v1078, 0.0
      %v1081 = vmax.f32 %v1079, 0.0
      %v1082 = vpack.c.bf16 %v1081, %v1080
      %1083 = vst.msk [vmem:[#allocation4 + $0x8] sm:$0xff] %vm663, %v1082
      %v1084 = vld [vmem:[%s735] sm:$0xff]
      %v1085 = vld [vmem:[%s735 + $0x8] sm:$0xff]
      %v1086 = vld [vmem:[%s735 + $0x10] sm:$0x3]
      %v1087 = vld [vmem:[%s3] sm:$0x1]
      %v1088 = vlaneseq
      %v1089 = vshrl.u32 %v1088, 7
      %v1090 = vsub.s32 0, %v1089
      %v1091 = vrot.slane %v1087, %v1090
      %v1092 = vmul.f32 %v1084, %v1091
      %v1093 = vmul.f32 %v1085, %v1091
      %v1094 = vld [vmem:[%s3 + $0x1] sm:$0x1]
      %v1095 = vlaneseq
      %v1096 = vshrl.u32 %v1095, 7
      %v1097 = vsub.s32 0, %v1096
      %v1098 = vrot.slane %v1094, %v1097
      %v1099 = vmul.f32 %v1084, %v1098
      %v1100 = vmul.f32 %v1085, %v1098
      %v1101 = vmul.f32 %v1086, %v1098
      %v1105 = vrot.slane %v1099, 1
      %v1106 = vrot.slane %v1100, 1
      %v1107 = vsel %vm830, %v1105, %v1106
      %v1108 = vrot.slane %v1101, 1
      %v1109 = vsel %vm830, %v1106, %v1108
      %v1112 = vadd.f32 %v1092, %v1107
      %v1113 = vadd.f32 %v1093, %v1109
      %v1114 = vld [vmem:[%s3 + $0x2] sm:$0x1]
      %v1115 = vlaneseq
      %v1116 = vshrl.u32 %v1115, 7
      %v1117 = vsub.s32 0, %v1116
      %v1118 = vrot.slane %v1114, %v1117
      %v1119 = vmul.f32 %v1084, %v1118
      %v1120 = vmul.f32 %v1085, %v1118
      %v1121 = vmul.f32 %v1086, %v1118
      %v1125 = vrot.slane %v1119, 2
      %v1126 = vrot.slane %v1120, 2
      %v1127 = vsel %vm464, %v1125, %v1126
      %v1128 = vrot.slane %v1121, 2
      %v1129 = vsel %vm464, %v1126, %v1128
      %v1132 = vadd.f32 %v1112, %v1127
      %v1133 = vadd.f32 %v1113, %v1129
      %v1134 = vld [vmem:[%s740] sm:$0xff]
      %v1135 = vld [vmem:[%s740 + $0x8] sm:$0xff]
      %v1136 = vld [vmem:[%s740 + $0x10] sm:$0x3]
      %v1137 = vld [vmem:[%s3 + $0x3] sm:$0x1]
      %v1138 = vlaneseq
      %v1139 = vshrl.u32 %v1138, 7
      %v1140 = vsub.s32 0, %v1139
      %v1141 = vrot.slane %v1137, %v1140
      %v1142 = vmul.f32 %v1134, %v1141
      %v1143 = vmul.f32 %v1135, %v1141
      %v1144 = vadd.f32 %v1132, %v1142
      %v1145 = vadd.f32 %v1133, %v1143
      %v1146 = vld [vmem:[%s3 + $0x4] sm:$0x1]
      %v1147 = vlaneseq
      %v1148 = vshrl.u32 %v1147, 7
      %v1149 = vsub.s32 0, %v1148
      %v1150 = vrot.slane %v1146, %v1149
      %v1151 = vmul.f32 %v1134, %v1150
      %v1152 = vmul.f32 %v1135, %v1150
      %v1153 = vmul.f32 %v1136, %v1150
      %v1157 = vrot.slane %v1151, 1
      %v1158 = vrot.slane %v1152, 1
      %v1159 = vsel %vm830, %v1157, %v1158
      %v1160 = vrot.slane %v1153, 1
      %v1161 = vsel %vm830, %v1158, %v1160
      %v1164 = vadd.f32 %v1144, %v1159
      %v1165 = vadd.f32 %v1145, %v1161
      %v1166 = vld [vmem:[%s3 + $0x5] sm:$0x1]
      %v1167 = vlaneseq
      %v1168 = vshrl.u32 %v1167, 7
      %v1169 = vsub.s32 0, %v1168
      %v1170 = vrot.slane %v1166, %v1169
      %v1171 = vmul.f32 %v1134, %v1170
      %v1172 = vmul.f32 %v1135, %v1170
      %v1173 = vmul.f32 %v1136, %v1170
      %v1177 = vrot.slane %v1171, 2
      %v1178 = vrot.slane %v1172, 2
      %v1179 = vsel %vm464, %v1177, %v1178
      %v1180 = vrot.slane %v1173, 2
      %v1181 = vsel %vm464, %v1178, %v1180
      %v1184 = vadd.f32 %v1164, %v1179
      %v1185 = vadd.f32 %v1165, %v1181
      %v1186 = vld [vmem:[%s745] sm:$0xff]
      %v1187 = vld [vmem:[%s745 + $0x8] sm:$0xff]
      %v1188 = vld [vmem:[%s745 + $0x10] sm:$0x3]
      %v1189 = vld [vmem:[%s3 + $0x6] sm:$0x1]
      %v1190 = vlaneseq
      %v1191 = vshrl.u32 %v1190, 7
      %v1192 = vsub.s32 0, %v1191
      %v1193 = vrot.slane %v1189, %v1192
      %v1194 = vmul.f32 %v1186, %v1193
      %v1195 = vmul.f32 %v1187, %v1193
      %v1196 = vadd.f32 %v1184, %v1194
      %v1197 = vadd.f32 %v1185, %v1195
      %v1198 = vld [vmem:[%s3 + $0x7] sm:$0x1]
      %v1199 = vlaneseq
      %v1200 = vshrl.u32 %v1199, 7
      %v1201 = vsub.s32 0, %v1200
      %v1202 = vrot.slane %v1198, %v1201
      %v1203 = vmul.f32 %v1186, %v1202
      %v1204 = vmul.f32 %v1187, %v1202
      %v1205 = vmul.f32 %v1188, %v1202
      %v1209 = vrot.slane %v1203, 1
      %v1210 = vrot.slane %v1204, 1
      %v1211 = vsel %vm830, %v1209, %v1210
      %v1212 = vrot.slane %v1205, 1
      %v1213 = vsel %vm830, %v1210, %v1212
      %v1216 = vadd.f32 %v1196, %v1211
      %v1217 = vadd.f32 %v1197, %v1213
      %v1218 = vld [vmem:[%s3 + $0x8] sm:$0x1]
      %v1219 = vlaneseq
      %v1220 = vshrl.u32 %v1219, 7
      %v1221 = vsub.s32 0, %v1220
      %v1222 = vrot.slane %v1218, %v1221
      %v1223 = vmul.f32 %v1186, %v1222
      %v1224 = vmul.f32 %v1187, %v1222
      %v1225 = vmul.f32 %v1188, %v1222
      %v1229 = vrot.slane %v1223, 2
      %v1230 = vrot.slane %v1224, 2
      %v1231 = vsel %vm464, %v1229, %v1230
      %v1232 = vrot.slane %v1225, 2
      %v1233 = vsel %vm464, %v1230, %v1232
      %v1236 = vadd.f32 %v1216, %v1231
      %v1237 = vadd.f32 %v1217, %v1233
      %v1238 = vadd.f32 %v1236, %v916
      %v1239 = vadd.f32 %v1237, %v916
      %v1240 = vmax.f32 %v1238, 0.0
      %v1241 = vmax.f32 %v1239, 0.0
      %v1242 = vpack.c.bf16 %v1241, %v1240
      %1243 = vst.msk [vmem:[#allocation4 + $0x10] sm:$0xff] %vm663, %v1242
      %v1244 = vld [vmem:[%s740] sm:$0xff]
      %v1245 = vld [vmem:[%s740 + $0x8] sm:$0xff]
      %v1246 = vld [vmem:[%s740 + $0x10] sm:$0x3]
      %v1247 = vld [vmem:[%s3] sm:$0x1]
      %v1248 = vlaneseq
      %v1249 = vshrl.u32 %v1248, 7
      %v1250 = vsub.s32 0, %v1249
      %v1251 = vrot.slane %v1247, %v1250
      %v1252 = vmul.f32 %v1244, %v1251
      %v1253 = vmul.f32 %v1245, %v1251
      %v1254 = vld [vmem:[%s3 + $0x1] sm:$0x1]
      %v1255 = vlaneseq
      %v1256 = vshrl.u32 %v1255, 7
      %v1257 = vsub.s32 0, %v1256
      %v1258 = vrot.slane %v1254, %v1257
      %v1259 = vmul.f32 %v1244, %v1258
      %v1260 = vmul.f32 %v1245, %v1258
      %v1261 = vmul.f32 %v1246, %v1258
      %v1265 = vrot.slane %v1259, 1
      %v1266 = vrot.slane %v1260, 1
      %v1267 = vsel %vm830, %v1265, %v1266
      %v1268 = vrot.slane %v1261, 1
      %v1269 = vsel %vm830, %v1266, %v1268
      %v1272 = vadd.f32 %v1252, %v1267
      %v1273 = vadd.f32 %v1253, %v1269
      %v1274 = vld [vmem:[%s3 + $0x2] sm:$0x1]
      %v1275 = vlaneseq
      %v1276 = vshrl.u32 %v1275, 7
      %v1277 = vsub.s32 0, %v1276
      %v1278 = vrot.slane %v1274, %v1277
      %v1279 = vmul.f32 %v1244, %v1278
      %v1280 = vmul.f32 %v1245, %v1278
      %v1281 = vmul.f32 %v1246, %v1278
      %v1285 = vrot.slane %v1279, 2
      %v1286 = vrot.slane %v1280, 2
      %v1287 = vsel %vm464, %v1285, %v1286
      %v1288 = vrot.slane %v1281, 2
      %v1289 = vsel %vm464, %v1286, %v1288
      %v1292 = vadd.f32 %v1272, %v1287
      %v1293 = vadd.f32 %v1273, %v1289
      %v1294 = vld [vmem:[%s745] sm:$0xff]
      %v1295 = vld [vmem:[%s745 + $0x8] sm:$0xff]
      %v1296 = vld [vmem:[%s745 + $0x10] sm:$0x3]
      %v1297 = vld [vmem:[%s3 + $0x3] sm:$0x1]
      %v1298 = vlaneseq
      %v1299 = vshrl.u32 %v1298, 7
      %v1300 = vsub.s32 0, %v1299
      %v1301 = vrot.slane %v1297, %v1300
      %v1302 = vmul.f32 %v1294, %v1301
      %v1303 = vmul.f32 %v1295, %v1301
      %v1304 = vadd.f32 %v1292, %v1302
      %v1305 = vadd.f32 %v1293, %v1303
      %v1306 = vld [vmem:[%s3 + $0x4] sm:$0x1]
      %v1307 = vlaneseq
      %v1308 = vshrl.u32 %v1307, 7
      %v1309 = vsub.s32 0, %v1308
      %v1310 = vrot.slane %v1306, %v1309
      %v1311 = vmul.f32 %v1294, %v1310
      %v1312 = vmul.f32 %v1295, %v1310
      %v1313 = vmul.f32 %v1296, %v1310
      %v1317 = vrot.slane %v1311, 1
      %v1318 = vrot.slane %v1312, 1
      %v1319 = vsel %vm830, %v1317, %v1318
      %v1320 = vrot.slane %v1313, 1
      %v1321 = vsel %vm830, %v1318, %v1320
      %v1324 = vadd.f32 %v1304, %v1319
      %v1325 = vadd.f32 %v1305, %v1321
      %v1326 = vld [vmem:[%s3 + $0x5] sm:$0x1]
      %v1327 = vlaneseq
      %v1328 = vshrl.u32 %v1327, 7
      %v1329 = vsub.s32 0, %v1328
      %v1330 = vrot.slane %v1326, %v1329
      %v1331 = vmul.f32 %v1294, %v1330
      %v1332 = vmul.f32 %v1295, %v1330
      %v1333 = vmul.f32 %v1296, %v1330
      %v1337 = vrot.slane %v1331, 2
      %v1338 = vrot.slane %v1332, 2
      %v1339 = vsel %vm464, %v1337, %v1338
      %v1340 = vrot.slane %v1333, 2
      %v1341 = vsel %vm464, %v1338, %v1340
      %v1344 = vadd.f32 %v1324, %v1339
      %v1345 = vadd.f32 %v1325, %v1341
      %v1346 = vld [vmem:[%s750] sm:$0xff]
      %v1347 = vld [vmem:[%s750 + $0x8] sm:$0xff]
      %v1348 = vld [vmem:[%s750 + $0x10] sm:$0x3]
      %v1349 = vld [vmem:[%s3 + $0x6] sm:$0x1]
      %v1350 = vlaneseq
      %v1351 = vshrl.u32 %v1350, 7
      %v1352 = vsub.s32 0, %v1351
      %v1353 = vrot.slane %v1349, %v1352
      %v1354 = vmul.f32 %v1346, %v1353
      %v1355 = vmul.f32 %v1347, %v1353
      %v1356 = vadd.f32 %v1344, %v1354
      %v1357 = vadd.f32 %v1345, %v1355
      %v1358 = vld [vmem:[%s3 + $0x7] sm:$0x1]
      %v1359 = vlaneseq
      %v1360 = vshrl.u32 %v1359, 7
      %v1361 = vsub.s32 0, %v1360
      %v1362 = vrot.slane %v1358, %v1361
      %v1363 = vmul.f32 %v1346, %v1362
      %v1364 = vmul.f32 %v1347, %v1362
      %v1365 = vmul.f32 %v1348, %v1362
      %v1369 = vrot.slane %v1363, 1
      %v1370 = vrot.slane %v1364, 1
      %v1371 = vsel %vm830, %v1369, %v1370
      %v1372 = vrot.slane %v1365, 1
      %v1373 = vsel %vm830, %v1370, %v1372
      %v1376 = vadd.f32 %v1356, %v1371
      %v1377 = vadd.f32 %v1357, %v1373
      %v1378 = vld [vmem:[%s3 + $0x8] sm:$0x1]
      %v1379 = vlaneseq
      %v1380 = vshrl.u32 %v1379, 7
      %v1381 = vsub.s32 0, %v1380
      %v1382 = vrot.slane %v1378, %v1381
      %v1383 = vmul.f32 %v1346, %v1382
      %v1384 = vmul.f32 %v1347, %v1382
      %v1385 = vmul.f32 %v1348, %v1382
      %v1389 = vrot.slane %v1383, 2
      %v1390 = vrot.slane %v1384, 2
      %v1391 = vsel %vm464, %v1389, %v1390
      %v1392 = vrot.slane %v1385, 2
      %v1393 = vsel %vm464, %v1390, %v1392
      %v1396 = vadd.f32 %v1376, %v1391
      %v1397 = vadd.f32 %v1377, %v1393
      %v1398 = vadd.f32 %v1396, %v916
      %v1399 = vadd.f32 %v1397, %v916
      %v1400 = vmax.f32 %v1398, 0.0
      %v1401 = vmax.f32 %v1399, 0.0
      %v1402 = vpack.c.bf16 %v1401, %v1400
      %1403 = vst.msk [vmem:[#allocation4 + $0x18] sm:$0xff] %vm663, %v1402
      %v1404 = vld [vmem:[%s745] sm:$0xff]
      %v1405 = vld [vmem:[%s745 + $0x8] sm:$0xff]
      %v1406 = vld [vmem:[%s745 + $0x10] sm:$0x3]
      %v1407 = vld [vmem:[%s3] sm:$0x1]
      %v1408 = vlaneseq
      %v1409 = vshrl.u32 %v1408, 7
      %v1410 = vsub.s32 0, %v1409
      %v1411 = vrot.slane %v1407, %v1410
      %v1412 = vmul.f32 %v1404, %v1411
      %v1413 = vmul.f32 %v1405, %v1411
      %v1414 = vld [vmem:[%s3 + $0x1] sm:$0x1]
      %v1415 = vlaneseq
      %v1416 = vshrl.u32 %v1415, 7
      %v1417 = vsub.s32 0, %v1416
      %v1418 = vrot.slane %v1414, %v1417
      %v1419 = vmul.f32 %v1404, %v1418
      %v1420 = vmul.f32 %v1405, %v1418
      %v1421 = vmul.f32 %v1406, %v1418
      %v1425 = vrot.slane %v1419, 1
      %v1426 = vrot.slane %v1420, 1
      %v1427 = vsel %vm830, %v1425, %v1426
      %v1428 = vrot.slane %v1421, 1
      %v1429 = vsel %vm830, %v1426, %v1428
      %v1432 = vadd.f32 %v1412, %v1427
      %v1433 = vadd.f32 %v1413, %v1429
      %v1434 = vld [vmem:[%s3 + $0x2] sm:$0x1]
      %v1435 = vlaneseq
      %v1436 = vshrl.u32 %v1435, 7
      %v1437 = vsub.s32 0, %v1436
      %v1438 = vrot.slane %v1434, %v1437
      %v1439 = vmul.f32 %v1404, %v1438
      %v1440 = vmul.f32 %v1405, %v1438
      %v1441 = vmul.f32 %v1406, %v1438
      %v1445 = vrot.slane %v1439, 2
      %v1446 = vrot.slane %v1440, 2
      %v1447 = vsel %vm464, %v1445, %v1446
      %v1448 = vrot.slane %v1441, 2
      %v1449 = vsel %vm464, %v1446, %v1448
      %v1452 = vadd.f32 %v1432, %v1447
      %v1453 = vadd.f32 %v1433, %v1449
      %v1454 = vld [vmem:[%s750] sm:$0xff]
      %v1455 = vld [vmem:[%s750 + $0x8] sm:$0xff]
      %v1456 = vld [vmem:[%s750 + $0x10] sm:$0x3]
      %v1457 = vld [vmem:[%s3 + $0x3] sm:$0x1]
      %v1458 = vlaneseq
      %v1459 = vshrl.u32 %v1458, 7
      %v1460 = vsub.s32 0, %v1459
      %v1461 = vrot.slane %v1457, %v1460
      %v1462 = vmul.f32 %v1454, %v1461
      %v1463 = vmul.f32 %v1455, %v1461
      %v1464 = vadd.f32 %v1452, %v1462
      %v1465 = vadd.f32 %v1453, %v1463
      %v1466 = vld [vmem:[%s3 + $0x4] sm:$0x1]
      %v1467 = vlaneseq
      %v1468 = vshrl.u32 %v1467, 7
      %v1469 = vsub.s32 0, %v1468
      %v1470 = vrot.slane %v1466, %v1469
      %v1471 = vmul.f32 %v1454, %v1470
      %v1472 = vmul.f32 %v1455, %v1470
      %v1473 = vmul.f32 %v1456, %v1470
      %v1477 = vrot.slane %v1471, 1
      %v1478 = vrot.slane %v1472, 1
      %v1479 = vsel %vm830, %v1477, %v1478
      %v1480 = vrot.slane %v1473, 1
      %v1481 = vsel %vm830, %v1478, %v1480
      %v1484 = vadd.f32 %v1464, %v1479
      %v1485 = vadd.f32 %v1465, %v1481
      %v1486 = vld [vmem:[%s3 + $0x5] sm:$0x1]
      %v1487 = vlaneseq
      %v1488 = vshrl.u32 %v1487, 7
      %v1489 = vsub.s32 0, %v1488
      %v1490 = vrot.slane %v1486, %v1489
      %v1491 = vmul.f32 %v1454, %v1490
      %v1492 = vmul.f32 %v1455, %v1490
      %v1493 = vmul.f32 %v1456, %v1490
      %v1497 = vrot.slane %v1491, 2
      %v1498 = vrot.slane %v1492, 2
      %v1499 = vsel %vm464, %v1497, %v1498
      %v1500 = vrot.slane %v1493, 2
      %v1501 = vsel %vm464, %v1498, %v1500
      %v1504 = vadd.f32 %v1484, %v1499
      %v1505 = vadd.f32 %v1485, %v1501
      %v1506 = vld [vmem:[%s755] sm:$0xff]
      %v1507 = vld [vmem:[%s755 + $0x8] sm:$0xff]
      %v1508 = vld [vmem:[%s755 + $0x10] sm:$0x3]
      %v1509 = vld [vmem:[%s3 + $0x6] sm:$0x1]
      %v1510 = vlaneseq
      %v1511 = vshrl.u32 %v1510, 7
      %v1512 = vsub.s32 0, %v1511
      %v1513 = vrot.slane %v1509, %v1512
      %v1514 = vmul.f32 %v1506, %v1513
      %v1515 = vmul.f32 %v1507, %v1513
      %v1516 = vadd.f32 %v1504, %v1514
      %v1517 = vadd.f32 %v1505, %v1515
      %v1518 = vld [vmem:[%s3 + $0x7] sm:$0x1]
      %v1519 = vlaneseq
      %v1520 = vshrl.u32 %v1519, 7
      %v1521 = vsub.s32 0, %v1520
      %v1522 = vrot.slane %v1518, %v1521
      %v1523 = vmul.f32 %v1506, %v1522
      %v1524 = vmul.f32 %v1507, %v1522
      %v1525 = vmul.f32 %v1508, %v1522
      %v1529 = vrot.slane %v1523, 1
      %v1530 = vrot.slane %v1524, 1
      %v1531 = vsel %vm830, %v1529, %v1530
      %v1532 = vrot.slane %v1525, 1
      %v1533 = vsel %vm830, %v1530, %v1532
      %v1536 = vadd.f32 %v1516, %v1531
      %v1537 = vadd.f32 %v1517, %v1533
      %v1538 = vld [vmem:[%s3 + $0x8] sm:$0x1]
      %v1539 = vlaneseq
      %v1540 = vshrl.u32 %v1539, 7
      %v1541 = vsub.s32 0, %v1540
      %v1542 = vrot.slane %v1538, %v1541
      %v1543 = vmul.f32 %v1506, %v1542
      %v1544 = vmul.f32 %v1507, %v1542
      %v1545 = vmul.f32 %v1508, %v1542
      %v1549 = vrot.slane %v1543, 2
      %v1550 = vrot.slane %v1544, 2
      %v1551 = vsel %vm464, %v1549, %v1550
      %v1552 = vrot.slane %v1545, 2
      %v1553 = vsel %vm464, %v1550, %v1552
      %v1556 = vadd.f32 %v1536, %v1551
      %v1557 = vadd.f32 %v1537, %v1553
      %v1558 = vadd.f32 %v1556, %v916
      %v1559 = vadd.f32 %v1557, %v916
      %v1560 = vmax.f32 %v1558, 0.0
      %v1561 = vmax.f32 %v1559, 0.0
      %v1562 = vpack.c.bf16 %v1561, %v1560
      %1563 = vst.msk [vmem:[#allocation4 + $0x20] sm:$0xff] %vm663, %v1562
      %v1564 = vld [vmem:[%s750] sm:$0xff]
      %v1565 = vld [vmem:[%s750 + $0x8] sm:$0xff]
      %v1566 = vld [vmem:[%s750 + $0x10] sm:$0x3]
      %v1567 = vld [vmem:[%s3] sm:$0x1]
      %v1568 = vlaneseq
      %v1569 = vshrl.u32 %v1568, 7
      %v1570 = vsub.s32 0, %v1569
      %v1571 = vrot.slane %v1567, %v1570
      %v1572 = vmul.f32 %v1564, %v1571
      %v1573 = vmul.f32 %v1565, %v1571
      %v1574 = vld [vmem:[%s3 + $0x1] sm:$0x1]
      %v1575 = vlaneseq
      %v1576 = vshrl.u32 %v1575, 7
      %v1577 = vsub.s32 0, %v1576
      %v1578 = vrot.slane %v1574, %v1577
      %v1579 = vmul.f32 %v1564, %v1578
      %v1580 = vmul.f32 %v1565, %v1578
      %v1581 = vmul.f32 %v1566, %v1578
      %v1585 = vrot.slane %v1579, 1
      %v1586 = vrot.slane %v1580, 1
      %v1587 = vsel %vm830, %v1585, %v1586
      %v1588 = vrot.slane %v1581, 1
      %v1589 = vsel %vm830, %v1586, %v1588
      %v1592 = vadd.f32 %v1572, %v1587
      %v1593 = vadd.f32 %v1573, %v1589
      %v1594 = vld [vmem:[%s3 + $0x2] sm:$0x1]
      %v1595 = vlaneseq
      %v1596 = vshrl.u32 %v1595, 7
      %v1597 = vsub.s32 0, %v1596
      %v1598 = vrot.slane %v1594, %v1597
      %v1599 = vmul.f32 %v1564, %v1598
      %v1600 = vmul.f32 %v1565, %v1598
      %v1601 = vmul.f32 %v1566, %v1598
      %v1605 = vrot.slane %v1599, 2
      %v1606 = vrot.slane %v1600, 2
      %v1607 = vsel %vm464, %v1605, %v1606
      %v1608 = vrot.slane %v1601, 2
      %v1609 = vsel %vm464, %v1606, %v1608
      %v1612 = vadd.f32 %v1592, %v1607
      %v1613 = vadd.f32 %v1593, %v1609
      %v1614 = vld [vmem:[%s755] sm:$0xff]
      %v1615 = vld [vmem:[%s755 + $0x8] sm:$0xff]
      %v1616 = vld [vmem:[%s755 + $0x10] sm:$0x3]
      %v1617 = vld [vmem:[%s3 + $0x3] sm:$0x1]
      %v1618 = vlaneseq
      %v1619 = vshrl.u32 %v1618, 7
      %v1620 = vsub.s32 0, %v1619
      %v1621 = vrot.slane %v1617, %v1620
      %v1622 = vmul.f32 %v1614, %v1621
      %v1623 = vmul.f32 %v1615, %v1621
      %v1624 = vadd.f32 %v1612, %v1622
      %v1625 = vadd.f32 %v1613, %v1623
      %v1626 = vld [vmem:[%s3 + $0x4] sm:$0x1]
      %v1627 = vlaneseq
      %v1628 = vshrl.u32 %v1627, 7
      %v1629 = vsub.s32 0, %v1628
      %v1630 = vrot.slane %v1626, %v1629
      %v1631 = vmul.f32 %v1614, %v1630
      %v1632 = vmul.f32 %v1615, %v1630
      %v1633 = vmul.f32 %v1616, %v1630
      %v1637 = vrot.slane %v1631, 1
      %v1638 = vrot.slane %v1632, 1
      %v1639 = vsel %vm830, %v1637, %v1638
      %v1640 = vrot.slane %v1633, 1
      %v1641 = vsel %vm830, %v1638, %v1640
      %v1644 = vadd.f32 %v1624, %v1639
      %v1645 = vadd.f32 %v1625, %v1641
      %v1646 = vld [vmem:[%s3 + $0x5] sm:$0x1]
      %v1647 = vlaneseq
      %v1648 = vshrl.u32 %v1647, 7
      %v1649 = vsub.s32 0, %v1648
      %v1650 = vrot.slane %v1646, %v1649
      %v1651 = vmul.f32 %v1614, %v1650
      %v1652 = vmul.f32 %v1615, %v1650
      %v1653 = vmul.f32 %v1616, %v1650
      %v1657 = vrot.slane %v1651, 2
      %v1658 = vrot.slane %v1652, 2
      %v1659 = vsel %vm464, %v1657, %v1658
      %v1660 = vrot.slane %v1653, 2
      %v1661 = vsel %vm464, %v1658, %v1660
      %v1664 = vadd.f32 %v1644, %v1659
      %v1665 = vadd.f32 %v1645, %v1661
      %v1666 = vld [vmem:[%s760] sm:$0xff]
      %v1667 = vld [vmem:[%s760 + $0x8] sm:$0xff]
      %v1668 = vld [vmem:[%s760 + $0x10] sm:$0x3]
      %v1669 = vld [vmem:[%s3 + $0x6] sm:$0x1]
      %v1670 = vlaneseq
      %v1671 = vshrl.u32 %v1670, 7
      %v1672 = vsub.s32 0, %v1671
      %v1673 = vrot.slane %v1669, %v1672
      %v1674 = vmul.f32 %v1666, %v1673
      %v1675 = vmul.f32 %v1667, %v1673
      %v1676 = vadd.f32 %v1664, %v1674
      %v1677 = vadd.f32 %v1665, %v1675
      %v1678 = vld [vmem:[%s3 + $0x7] sm:$0x1]
      %v1679 = vlaneseq
      %v1680 = vshrl.u32 %v1679, 7
      %v1681 = vsub.s32 0, %v1680
      %v1682 = vrot.slane %v1678, %v1681
      %v1683 = vmul.f32 %v1666, %v1682
      %v1684 = vmul.f32 %v1667, %v1682
      %v1685 = vmul.f32 %v1668, %v1682
      %v1689 = vrot.slane %v1683, 1
      %v1690 = vrot.slane %v1684, 1
      %v1691 = vsel %vm830, %v1689, %v1690
      %v1692 = vrot.slane %v1685, 1
      %v1693 = vsel %vm830, %v1690, %v1692
      %v1696 = vadd.f32 %v1676, %v1691
      %v1697 = vadd.f32 %v1677, %v1693
      %v1698 = vld [vmem:[%s3 + $0x8] sm:$0x1]
      %v1699 = vlaneseq
      %v1700 = vshrl.u32 %v1699, 7
      %v1701 = vsub.s32 0, %v1700
      %v1702 = vrot.slane %v1698, %v1701
      %v1703 = vmul.f32 %v1666, %v1702
      %v1704 = vmul.f32 %v1667, %v1702
      %v1705 = vmul.f32 %v1668, %v1702
      %v1709 = vrot.slane %v1703, 2
      %v1710 = vrot.slane %v1704, 2
      %v1711 = vsel %vm464, %v1709, %v1710
      %v1712 = vrot.slane %v1705, 2
      %v1713 = vsel %vm464, %v1710, %v1712
      %v1716 = vadd.f32 %v1696, %v1711
      %v1717 = vadd.f32 %v1697, %v1713
      %v1718 = vadd.f32 %v1716, %v916
      %v1719 = vadd.f32 %v1717, %v916
      %v1720 = vmax.f32 %v1718, 0.0
      %v1721 = vmax.f32 %v1719, 0.0
      %v1722 = vpack.c.bf16 %v1721, %v1720
      %1723 = vst.msk [vmem:[#allocation4 + $0x28] sm:$0xff] %vm663, %v1722
      %v1724 = vld [vmem:[%s755] sm:$0xff]
      %v1725 = vld [vmem:[%s755 + $0x8] sm:$0xff]
      %v1726 = vld [vmem:[%s755 + $0x10] sm:$0x3]
      %v1727 = vld [vmem:[%s3] sm:$0x1]
      %v1728 = vlaneseq
      %v1729 = vshrl.u32 %v1728, 7
      %v1730 = vsub.s32 0, %v1729
      %v1731 = vrot.slane %v1727, %v1730
      %v1732 = vmul.f32 %v1724, %v1731
      %v1733 = vmul.f32 %v1725, %v1731
      %v1734 = vld [vmem:[%s3 + $0x1] sm:$0x1]
      %v1735 = vlaneseq
      %v1736 = vshrl.u32 %v1735, 7
      %v1737 = vsub.s32 0, %v1736
      %v1738 = vrot.slane %v1734, %v1737
      %v1739 = vmul.f32 %v1724, %v1738
      %v1740 = vmul.f32 %v1725, %v1738
      %v1741 = vmul.f32 %v1726, %v1738
      %v1745 = vrot.slane %v1739, 1
      %v1746 = vrot.slane %v1740, 1
      %v1747 = vsel %vm830, %v1745, %v1746
      %v1748 = vrot.slane %v1741, 1
      %v1749 = vsel %vm830, %v1746, %v1748
      %v1752 = vadd.f32 %v1732, %v1747
      %v1753 = vadd.f32 %v1733, %v1749
      %v1754 = vld [vmem:[%s3 + $0x2] sm:$0x1]
      %v1755 = vlaneseq
      %v1756 = vshrl.u32 %v1755, 7
      %v1757 = vsub.s32 0, %v1756
      %v1758 = vrot.slane %v1754, %v1757
      %v1759 = vmul.f32 %v1724, %v1758
      %v1760 = vmul.f32 %v1725, %v1758
      %v1761 = vmul.f32 %v1726, %v1758
      %v1765 = vrot.slane %v1759, 2
      %v1766 = vrot.slane %v1760, 2
      %v1767 = vsel %vm464, %v1765, %v1766
      %v1768 = vrot.slane %v1761, 2
      %v1769 = vsel %vm464, %v1766, %v1768
      %v1772 = vadd.f32 %v1752, %v1767
      %v1773 = vadd.f32 %v1753, %v1769
      %v1774 = vld [vmem:[%s760] sm:$0xff]
      %v1775 = vld [vmem:[%s760 + $0x8] sm:$0xff]
      %v1776 = vld [vmem:[%s760 + $0x10] sm:$0x3]
      %v1777 = vld [vmem:[%s3 + $0x3] sm:$0x1]
      %v1778 = vlaneseq
      %v1779 = vshrl.u32 %v1778, 7
      %v1780 = vsub.s32 0, %v1779
      %v1781 = vrot.slane %v1777, %v1780
      %v1782 = vmul.f32 %v1774, %v1781
      %v1783 = vmul.f32 %v1775, %v1781
      %v1784 = vadd.f32 %v1772, %v1782
      %v1785 = vadd.f32 %v1773, %v1783
      %v1786 = vld [vmem:[%s3 + $0x4] sm:$0x1]
      %v1787 = vlaneseq
      %v1788 = vshrl.u32 %v1787, 7
      %v1789 = vsub.s32 0, %v1788
      %v1790 = vrot.slane %v1786, %v1789
      %v1791 = vmul.f32 %v1774, %v1790
      %v1792 = vmul.f32 %v1775, %v1790
      %v1793 = vmul.f32 %v1776, %v1790
      %v1797 = vrot.slane %v1791, 1
      %v1798 = vrot.slane %v1792, 1
      %v1799 = vsel %vm830, %v1797, %v1798
      %v1800 = vrot.slane %v1793, 1
      %v1801 = vsel %vm830, %v1798, %v1800
      %v1804 = vadd.f32 %v1784, %v1799
      %v1805 = vadd.f32 %v1785, %v1801
      %v1806 = vld [vmem:[%s3 + $0x5] sm:$0x1]
      %v1807 = vlaneseq
      %v1808 = vshrl.u32 %v1807, 7
      %v1809 = vsub.s32 0, %v1808
      %v1810 = vrot.slane %v1806, %v1809
      %v1811 = vmul.f32 %v1774, %v1810
      %v1812 = vmul.f32 %v1775, %v1810
      %v1813 = vmul.f32 %v1776, %v1810
      %v1817 = vrot.slane %v1811, 2
      %v1818 = vrot.slane %v1812, 2
      %v1819 = vsel %vm464, %v1817, %v1818
      %v1820 = vrot.slane %v1813, 2
      %v1821 = vsel %vm464, %v1818, %v1820
      %v1824 = vadd.f32 %v1804, %v1819
      %v1825 = vadd.f32 %v1805, %v1821
      %v1826 = vld [vmem:[%s765] sm:$0xff]
      %v1827 = vld [vmem:[%s765 + $0x8] sm:$0xff]
      %v1828 = vld [vmem:[%s765 + $0x10] sm:$0x3]
      %v1829 = vld [vmem:[%s3 + $0x6] sm:$0x1]
      %v1830 = vlaneseq
      %v1831 = vshrl.u32 %v1830, 7
      %v1832 = vsub.s32 0, %v1831
      %v1833 = vrot.slane %v1829, %v1832
      %v1834 = vmul.f32 %v1826, %v1833
      %v1835 = vmul.f32 %v1827, %v1833
      %v1836 = vadd.f32 %v1824, %v1834
      %v1837 = vadd.f32 %v1825, %v1835
      %v1838 = vld [vmem:[%s3 + $0x7] sm:$0x1]
      %v1839 = vlaneseq
      %v1840 = vshrl.u32 %v1839, 7
      %v1841 = vsub.s32 0, %v1840
      %v1842 = vrot.slane %v1838, %v1841
      %v1843 = vmul.f32 %v1826, %v1842
      %v1844 = vmul.f32 %v1827, %v1842
      %v1845 = vmul.f32 %v1828, %v1842
      %v1849 = vrot.slane %v1843, 1
      %v1850 = vrot.slane %v1844, 1
      %v1851 = vsel %vm830, %v1849, %v1850
      %v1852 = vrot.slane %v1845, 1
      %v1853 = vsel %vm830, %v1850, %v1852
      %v1856 = vadd.f32 %v1836, %v1851
      %v1857 = vadd.f32 %v1837, %v1853
      %v1858 = vld [vmem:[%s3 + $0x8] sm:$0x1]
      %v1859 = vlaneseq
      %v1860 = vshrl.u32 %v1859, 7
      %v1861 = vsub.s32 0, %v1860
      %v1862 = vrot.slane %v1858, %v1861
      %v1863 = vmul.f32 %v1826, %v1862
      %v1864 = vmul.f32 %v1827, %v1862
      %v1865 = vmul.f32 %v1828, %v1862
      %v1869 = vrot.slane %v1863, 2
      %v1870 = vrot.slane %v1864, 2
      %v1871 = vsel %vm464, %v1869, %v1870
      %v1872 = vrot.slane %v1865, 2
      %v1873 = vsel %vm464, %v1870, %v1872
      %v1876 = vadd.f32 %v1856, %v1871
      %v1877 = vadd.f32 %v1857, %v1873
      %v1878 = vadd.f32 %v1876, %v916
      %v1879 = vadd.f32 %v1877, %v916
      %v1880 = vmax.f32 %v1878, 0.0
      %v1881 = vmax.f32 %v1879, 0.0
      %v1882 = vpack.c.bf16 %v1881, %v1880
      %1883 = vst.msk [vmem:[#allocation4 + $0x30] sm:$0xff] %vm663, %v1882
      %v1884 = vld [vmem:[%s760] sm:$0xff]
      %v1885 = vld [vmem:[%s760 + $0x8] sm:$0xff]
      %v1886 = vld [vmem:[%s760 + $0x10] sm:$0x3]
      %v1887 = vld [vmem:[%s3] sm:$0x1]
      %v1888 = vlaneseq
      %v1889 = vshrl.u32 %v1888, 7
      %v1890 = vsub.s32 0, %v1889
      %v1891 = vrot.slane %v1887, %v1890
      %v1892 = vmul.f32 %v1884, %v1891
      %v1893 = vmul.f32 %v1885, %v1891
      %v1894 = vld [vmem:[%s3 + $0x1] sm:$0x1]
      %v1895 = vlaneseq
      %v1896 = vshrl.u32 %v1895, 7
      %v1897 = vsub.s32 0, %v1896
      %v1898 = vrot.slane %v1894, %v1897
      %v1899 = vmul.f32 %v1884, %v1898
      %v1900 = vmul.f32 %v1885, %v1898
      %v1901 = vmul.f32 %v1886, %v1898
      %v1905 = vrot.slane %v1899, 1
      %v1906 = vrot.slane %v1900, 1
      %v1907 = vsel %vm830, %v1905, %v1906
      %v1908 = vrot.slane %v1901, 1
      %v1909 = vsel %vm830, %v1906, %v1908
      %v1912 = vadd.f32 %v1892, %v1907
      %v1913 = vadd.f32 %v1893, %v1909
      %v1914 = vld [vmem:[%s3 + $0x2] sm:$0x1]
      %v1915 = vlaneseq
      %v1916 = vshrl.u32 %v1915, 7
      %v1917 = vsub.s32 0, %v1916
      %v1918 = vrot.slane %v1914, %v1917
      %v1919 = vmul.f32 %v1884, %v1918
      %v1920 = vmul.f32 %v1885, %v1918
      %v1921 = vmul.f32 %v1886, %v1918
      %v1925 = vrot.slane %v1919, 2
      %v1926 = vrot.slane %v1920, 2
      %v1927 = vsel %vm464, %v1925, %v1926
      %v1928 = vrot.slane %v1921, 2
      %v1929 = vsel %vm464, %v1926, %v1928
      %v1932 = vadd.f32 %v1912, %v1927
      %v1933 = vadd.f32 %v1913, %v1929
      %v1934 = vld [vmem:[%s765] sm:$0xff]
      %v1935 = vld [vmem:[%s765 + $0x8] sm:$0xff]
      %v1936 = vld [vmem:[%s765 + $0x10] sm:$0x3]
      %v1937 = vld [vmem:[%s3 + $0x3] sm:$0x1]
      %v1938 = vlaneseq
      %v1939 = vshrl.u32 %v1938, 7
      %v1940 = vsub.s32 0, %v1939
      %v1941 = vrot.slane %v1937, %v1940
      %v1942 = vmul.f32 %v1934, %v1941
      %v1943 = vmul.f32 %v1935, %v1941
      %v1944 = vadd.f32 %v1932, %v1942
      %v1945 = vadd.f32 %v1933, %v1943
      %v1946 = vld [vmem:[%s3 + $0x4] sm:$0x1]
      %v1947 = vlaneseq
      %v1948 = vshrl.u32 %v1947, 7
      %v1949 = vsub.s32 0, %v1948
      %v1950 = vrot.slane %v1946, %v1949
      %v1951 = vmul.f32 %v1934, %v1950
      %v1952 = vmul.f32 %v1935, %v1950
      %v1953 = vmul.f32 %v1936, %v1950
      %v1957 = vrot.slane %v1951, 1
      %v1958 = vrot.slane %v1952, 1
      %v1959 = vsel %vm830, %v1957, %v1958
      %v1960 = vrot.slane %v1953, 1
      %v1961 = vsel %vm830, %v1958, %v1960
      %v1964 = vadd.f32 %v1944, %v1959
      %v1965 = vadd.f32 %v1945, %v1961
      %v1966 = vld [vmem:[%s3 + $0x5] sm:$0x1]
      %v1967 = vlaneseq
      %v1968 = vshrl.u32 %v1967, 7
      %v1969 = vsub.s32 0, %v1968
      %v1970 = vrot.slane %v1966, %v1969
      %v1971 = vmul.f32 %v1934, %v1970
      %v1972 = vmul.f32 %v1935, %v1970
      %v1973 = vmul.f32 %v1936, %v1970
      %v1977 = vrot.slane %v1971, 2
      %v1978 = vrot.slane %v1972, 2
      %v1979 = vsel %vm464, %v1977, %v1978
      %v1980 = vrot.slane %v1973, 2
      %v1981 = vsel %vm464, %v1978, %v1980
      %v1984 = vadd.f32 %v1964, %v1979
      %v1985 = vadd.f32 %v1965, %v1981
      %v1986 = vld [vmem:[%s770] sm:$0xff]
      %v1987 = vld [vmem:[%s770 + $0x8] sm:$0xff]
      %v1988 = vld [vmem:[%s770 + $0x10] sm:$0x3]
      %v1989 = vld [vmem:[%s3 + $0x6] sm:$0x1]
      %v1990 = vlaneseq
      %v1991 = vshrl.u32 %v1990, 7
      %v1992 = vsub.s32 0, %v1991
      %v1993 = vrot.slane %v1989, %v1992
      %v1994 = vmul.f32 %v1986, %v1993
      %v1995 = vmul.f32 %v1987, %v1993
      %v1996 = vadd.f32 %v1984, %v1994
      %v1997 = vadd.f32 %v1985, %v1995
      %v1998 = vld [vmem:[%s3 + $0x7] sm:$0x1]
      %v1999 = vlaneseq
      %v2000 = vshrl.u32 %v1999, 7
      %v2001 = vsub.s32 0, %v2000
      %v2002 = vrot.slane %v1998, %v2001
      %v2003 = vmul.f32 %v1986, %v2002
      %v2004 = vmul.f32 %v1987, %v2002
      %v2005 = vmul.f32 %v1988, %v2002
      %v2009 = vrot.slane %v2003, 1
      %v2010 = vrot.slane %v2004, 1
      %v2011 = vsel %vm830, %v2009, %v2010
      %v2012 = vrot.slane %v2005, 1
      %v2013 = vsel %vm830, %v2010, %v2012
      %v2016 = vadd.f32 %v1996, %v2011
      %v2017 = vadd.f32 %v1997, %v2013
      %v2018 = vld [vmem:[%s3 + $0x8] sm:$0x1]
      %v2019 = vlaneseq
      %v2020 = vshrl.u32 %v2019, 7
      %v2021 = vsub.s32 0, %v2020
      %v2022 = vrot.slane %v2018, %v2021
      %v2023 = vmul.f32 %v1986, %v2022
      %v2024 = vmul.f32 %v1987, %v2022
      %v2025 = vmul.f32 %v1988, %v2022
      %v2029 = vrot.slane %v2023, 2
      %v2030 = vrot.slane %v2024, 2
      %v2031 = vsel %vm464, %v2029, %v2030
      %v2032 = vrot.slane %v2025, 2
      %v2033 = vsel %vm464, %v2030, %v2032
      %v2036 = vadd.f32 %v2016, %v2031
      %v2037 = vadd.f32 %v2017, %v2033
      %v2038 = vadd.f32 %v2036, %v916
      %v2039 = vadd.f32 %v2037, %v916
      %v2040 = vmax.f32 %v2038, 0.0
      %v2041 = vmax.f32 %v2039, 0.0
      %v2042 = vpack.c.bf16 %v2041, %v2040
      %2043 = vst.msk [vmem:[#allocation4 + $0x38] sm:$0xff] %vm663, %v2042
      %v2044 = vld [vmem:[%s765] sm:$0xff]
      %v2045 = vld [vmem:[%s765 + $0x8] sm:$0xff]
      %v2046 = vld [vmem:[%s765 + $0x10] sm:$0x3]
      %v2047 = vld [vmem:[%s3] sm:$0x1]
      %v2048 = vlaneseq
      %v2049 = vshrl.u32 %v2048, 7
      %v2050 = vsub.s32 0, %v2049
      %v2051 = vrot.slane %v2047, %v2050
      %v2052 = vmul.f32 %v2044, %v2051
      %v2053 = vmul.f32 %v2045, %v2051
      %v2054 = vld [vmem:[%s3 + $0x1] sm:$0x1]
      %v2055 = vlaneseq
      %v2056 = vshrl.u32 %v2055, 7
      %v2057 = vsub.s32 0, %v2056
      %v2058 = vrot.slane %v2054, %v2057
      %v2059 = vmul.f32 %v2044, %v2058
      %v2060 = vmul.f32 %v2045, %v2058
      %v2061 = vmul.f32 %v2046, %v2058
      %v2065 = vrot.slane %v2059, 1
      %v2066 = vrot.slane %v2060, 1
      %v2067 = vsel %vm830, %v2065, %v2066
      %v2068 = vrot.slane %v2061, 1
      %v2069 = vsel %vm830, %v2066, %v2068
      %v2072 = vadd.f32 %v2052, %v2067
      %v2073 = vadd.f32 %v2053, %v2069
      %v2074 = vld [vmem:[%s3 + $0x2] sm:$0x1]
      %v2075 = vlaneseq
      %v2076 = vshrl.u32 %v2075, 7
      %v2077 = vsub.s32 0, %v2076
      %v2078 = vrot.slane %v2074, %v2077
      %v2079 = vmul.f32 %v2044, %v2078
      %v2080 = vmul.f32 %v2045, %v2078
      %v2081 = vmul.f32 %v2046, %v2078
      %v2085 = vrot.slane %v2079, 2
      %v2086 = vrot.slane %v2080, 2
      %v2087 = vsel %vm464, %v2085, %v2086
      %v2088 = vrot.slane %v2081, 2
      %v2089 = vsel %vm464, %v2086, %v2088
      %v2092 = vadd.f32 %v2072, %v2087
      %v2093 = vadd.f32 %v2073, %v2089
      %v2094 = vld [vmem:[%s770] sm:$0xff]
      %v2095 = vld [vmem:[%s770 + $0x8] sm:$0xff]
      %v2096 = vld [vmem:[%s770 + $0x10] sm:$0x3]
      %v2097 = vld [vmem:[%s3 + $0x3] sm:$0x1]
      %v2098 = vlaneseq
      %v2099 = vshrl.u32 %v2098, 7
      %v2100 = vsub.s32 0, %v2099
      %v2101 = vrot.slane %v2097, %v2100
      %v2102 = vmul.f32 %v2094, %v2101
      %v2103 = vmul.f32 %v2095, %v2101
      %v2104 = vadd.f32 %v2092, %v2102
      %v2105 = vadd.f32 %v2093, %v2103
      %v2106 = vld [vmem:[%s3 + $0x4] sm:$0x1]
      %v2107 = vlaneseq
      %v2108 = vshrl.u32 %v2107, 7
      %v2109 = vsub.s32 0, %v2108
      %v2110 = vrot.slane %v2106, %v2109
      %v2111 = vmul.f32 %v2094, %v2110
      %v2112 = vmul.f32 %v2095, %v2110
      %v2113 = vmul.f32 %v2096, %v2110
      %v2117 = vrot.slane %v2111, 1
      %v2118 = vrot.slane %v2112, 1
      %v2119 = vsel %vm830, %v2117, %v2118
      %v2120 = vrot.slane %v2113, 1
      %v2121 = vsel %vm830, %v2118, %v2120
      %v2124 = vadd.f32 %v2104, %v2119
      %v2125 = vadd.f32 %v2105, %v2121
      %v2126 = vld [vmem:[%s3 + $0x5] sm:$0x1]
      %v2127 = vlaneseq
      %v2128 = vshrl.u32 %v2127, 7
      %v2129 = vsub.s32 0, %v2128
      %v2130 = vrot.slane %v2126, %v2129
      %v2131 = vmul.f32 %v2094, %v2130
      %v2132 = vmul.f32 %v2095, %v2130
      %v2133 = vmul.f32 %v2096, %v2130
      %v2137 = vrot.slane %v2131, 2
      %v2138 = vrot.slane %v2132, 2
      %v2139 = vsel %vm464, %v2137, %v2138
      %v2140 = vrot.slane %v2133, 2
      %v2141 = vsel %vm464, %v2138, %v2140
      %v2144 = vadd.f32 %v2124, %v2139
      %v2145 = vadd.f32 %v2125, %v2141
      %v2146 = vld [vmem:[%s775] sm:$0xff]
      %v2147 = vld [vmem:[%s775 + $0x8] sm:$0xff]
      %v2148 = vld [vmem:[%s775 + $0x10] sm:$0x3]
      %v2149 = vld [vmem:[%s3 + $0x6] sm:$0x1]
      %v2150 = vlaneseq
      %v2151 = vshrl.u32 %v2150, 7
      %v2152 = vsub.s32 0, %v2151
      %v2153 = vrot.slane %v2149, %v2152
      %v2154 = vmul.f32 %v2146, %v2153
      %v2155 = vmul.f32 %v2147, %v2153
      %v2156 = vadd.f32 %v2144, %v2154
      %v2157 = vadd.f32 %v2145, %v2155
      %v2158 = vld [vmem:[%s3 + $0x7] sm:$0x1]
      %v2159 = vlaneseq
      %v2160 = vshrl.u32 %v2159, 7
      %v2161 = vsub.s32 0, %v2160
      %v2162 = vrot.slane %v2158, %v2161
      %v2163 = vmul.f32 %v2146, %v2162
      %v2164 = vmul.f32 %v2147, %v2162
      %v2165 = vmul.f32 %v2148, %v2162
      %v2169 = vrot.slane %v2163, 1
      %v2170 = vrot.slane %v2164, 1
      %v2171 = vsel %vm830, %v2169, %v2170
      %v2172 = vrot.slane %v2165, 1
      %v2173 = vsel %vm830, %v2170, %v2172
      %v2176 = vadd.f32 %v2156, %v2171
      %v2177 = vadd.f32 %v2157, %v2173
      %v2178 = vld [vmem:[%s3 + $0x8] sm:$0x1]
      %v2179 = vlaneseq
      %v2180 = vshrl.u32 %v2179, 7
      %v2181 = vsub.s32 0, %v2180
      %v2182 = vrot.slane %v2178, %v2181
      %v2183 = vmul.f32 %v2146, %v2182
      %v2184 = vmul.f32 %v2147, %v2182
      %v2185 = vmul.f32 %v2148, %v2182
      %v2189 = vrot.slane %v2183, 2
      %v2190 = vrot.slane %v2184, 2
      %v2191 = vsel %vm464, %v2189, %v2190
      %v2192 = vrot.slane %v2185, 2
      %v2193 = vsel %vm464, %v2190, %v2192
      %v2196 = vadd.f32 %v2176, %v2191
      %v2197 = vadd.f32 %v2177, %v2193
      %v2198 = vadd.f32 %v2196, %v916
      %v2199 = vadd.f32 %v2197, %v916
      %v2200 = vmax.f32 %v2198, 0.0
      %v2201 = vmax.f32 %v2199, 0.0
      %v2202 = vpack.c.bf16 %v2201, %v2200
      %2203 = vst.msk [vmem:[#allocation4 + $0x40] sm:$0xff] %vm663, %v2202
      %v2204 = vld [vmem:[%s770] sm:$0xff]
      %v2205 = vld [vmem:[%s770 + $0x8] sm:$0xff]
      %v2206 = vld [vmem:[%s770 + $0x10] sm:$0x3]
      %v2207 = vld [vmem:[%s3] sm:$0x1]
      %v2208 = vlaneseq
      %v2209 = vshrl.u32 %v2208, 7
      %v2210 = vsub.s32 0, %v2209
      %v2211 = vrot.slane %v2207, %v2210
      %v2212 = vmul.f32 %v2204, %v2211
      %v2213 = vmul.f32 %v2205, %v2211
      %v2214 = vld [vmem:[%s3 + $0x1] sm:$0x1]
      %v2215 = vlaneseq
      %v2216 = vshrl.u32 %v2215, 7
      %v2217 = vsub.s32 0, %v2216
      %v2218 = vrot.slane %v2214, %v2217
      %v2219 = vmul.f32 %v2204, %v2218
      %v2220 = vmul.f32 %v2205, %v2218
      %v2221 = vmul.f32 %v2206, %v2218
      %v2225 = vrot.slane %v2219, 1
      %v2226 = vrot.slane %v2220, 1
      %v2227 = vsel %vm830, %v2225, %v2226
      %v2228 = vrot.slane %v2221, 1
      %v2229 = vsel %vm830, %v2226, %v2228
      %v2232 = vadd.f32 %v2212, %v2227
      %v2233 = vadd.f32 %v2213, %v2229
      %v2234 = vld [vmem:[%s3 + $0x2] sm:$0x1]
      %v2235 = vlaneseq
      %v2236 = vshrl.u32 %v2235, 7
      %v2237 = vsub.s32 0, %v2236
      %v2238 = vrot.slane %v2234, %v2237
      %v2239 = vmul.f32 %v2204, %v2238
      %v2240 = vmul.f32 %v2205, %v2238
      %v2241 = vmul.f32 %v2206, %v2238
      %v2245 = vrot.slane %v2239, 2
      %v2246 = vrot.slane %v2240, 2
      %v2247 = vsel %vm464, %v2245, %v2246
      %v2248 = vrot.slane %v2241, 2
      %v2249 = vsel %vm464, %v2246, %v2248
      %v2252 = vadd.f32 %v2232, %v2247
      %v2253 = vadd.f32 %v2233, %v2249
      %v2254 = vld [vmem:[%s775] sm:$0xff]
      %v2255 = vld [vmem:[%s775 + $0x8] sm:$0xff]
      %v2256 = vld [vmem:[%s775 + $0x10] sm:$0x3]
      %v2257 = vld [vmem:[%s3 + $0x3] sm:$0x1]
      %v2258 = vlaneseq
      %v2259 = vshrl.u32 %v2258, 7
      %v2260 = vsub.s32 0, %v2259
      %v2261 = vrot.slane %v2257, %v2260
      %v2262 = vmul.f32 %v2254, %v2261
      %v2263 = vmul.f32 %v2255, %v2261
      %v2264 = vadd.f32 %v2252, %v2262
      %v2265 = vadd.f32 %v2253, %v2263
      %v2266 = vld [vmem:[%s3 + $0x4] sm:$0x1]
      %v2267 = vlaneseq
      %v2268 = vshrl.u32 %v2267, 7
      %v2269 = vsub.s32 0, %v2268
      %v2270 = vrot.slane %v2266, %v2269
      %v2271 = vmul.f32 %v2254, %v2270
      %v2272 = vmul.f32 %v2255, %v2270
      %v2273 = vmul.f32 %v2256, %v2270
      %v2277 = vrot.slane %v2271, 1
      %v2278 = vrot.slane %v2272, 1
      %v2279 = vsel %vm830, %v2277, %v2278
      %v2280 = vrot.slane %v2273, 1
      %v2281 = vsel %vm830, %v2278, %v2280
      %v2284 = vadd.f32 %v2264, %v2279
      %v2285 = vadd.f32 %v2265, %v2281
      %v2286 = vld [vmem:[%s3 + $0x5] sm:$0x1]
      %v2287 = vlaneseq
      %v2288 = vshrl.u32 %v2287, 7
      %v2289 = vsub.s32 0, %v2288
      %v2290 = vrot.slane %v2286, %v2289
      %v2291 = vmul.f32 %v2254, %v2290
      %v2292 = vmul.f32 %v2255, %v2290
      %v2293 = vmul.f32 %v2256, %v2290
      %v2297 = vrot.slane %v2291, 2
      %v2298 = vrot.slane %v2292, 2
      %v2299 = vsel %vm464, %v2297, %v2298
      %v2300 = vrot.slane %v2293, 2
      %v2301 = vsel %vm464, %v2298, %v2300
      %v2304 = vadd.f32 %v2284, %v2299
      %v2305 = vadd.f32 %v2285, %v2301
      %v2306 = vld [vmem:[%s780] sm:$0xff]
      %v2307 = vld [vmem:[%s780 + $0x8] sm:$0xff]
      %v2308 = vld [vmem:[%s780 + $0x10] sm:$0x3]
      %v2309 = vld [vmem:[%s3 + $0x6] sm:$0x1]
      %v2310 = vlaneseq
      %v2311 = vshrl.u32 %v2310, 7
      %v2312 = vsub.s32 0, %v2311
      %v2313 = vrot.slane %v2309, %v2312
      %v2314 = vmul.f32 %v2306, %v2313
      %v2315 = vmul.f32 %v2307, %v2313
      %v2316 = vadd.f32 %v2304, %v2314
      %v2317 = vadd.f32 %v2305, %v2315
      %v2318 = vld [vmem:[%s3 + $0x7] sm:$0x1]
      %v2319 = vlaneseq
      %v2320 = vshrl.u32 %v2319, 7
      %v2321 = vsub.s32 0, %v2320
      %v2322 = vrot.slane %v2318, %v2321
      %v2323 = vmul.f32 %v2306, %v2322
      %v2324 = vmul.f32 %v2307, %v2322
      %v2325 = vmul.f32 %v2308, %v2322
      %v2329 = vrot.slane %v2323, 1
      %v2330 = vrot.slane %v2324, 1
      %v2331 = vsel %vm830, %v2329, %v2330
      %v2332 = vrot.slane %v2325, 1
      %v2333 = vsel %vm830, %v2330, %v2332
      %v2336 = vadd.f32 %v2316, %v2331
      %v2337 = vadd.f32 %v2317, %v2333
      %v2338 = vld [vmem:[%s3 + $0x8] sm:$0x1]
      %v2339 = vlaneseq
      %v2340 = vshrl.u32 %v2339, 7
      %v2341 = vsub.s32 0, %v2340
      %v2342 = vrot.slane %v2338, %v2341
      %v2343 = vmul.f32 %v2306, %v2342
      %v2344 = vmul.f32 %v2307, %v2342
      %v2345 = vmul.f32 %v2308, %v2342
      %v2349 = vrot.slane %v2343, 2
      %v2350 = vrot.slane %v2344, 2
      %v2351 = vsel %vm464, %v2349, %v2350
      %v2352 = vrot.slane %v2345, 2
      %v2353 = vsel %vm464, %v2350, %v2352
      %v2356 = vadd.f32 %v2336, %v2351
      %v2357 = vadd.f32 %v2337, %v2353
      %v2358 = vadd.f32 %v2356, %v916
      %v2359 = vadd.f32 %v2357, %v916
      %v2360 = vmax.f32 %v2358, 0.0
      %v2361 = vmax.f32 %v2359, 0.0
      %v2362 = vpack.c.bf16 %v2361, %v2360
      %2363 = vst.msk [vmem:[#allocation4 + $0x48] sm:$0xff] %vm663, %v2362
      %v2364 = vld [vmem:[%s775] sm:$0xff]
      %v2365 = vld [vmem:[%s775 + $0x8] sm:$0xff]
      %v2366 = vld [vmem:[%s775 + $0x10] sm:$0x3]
      %v2367 = vld [vmem:[%s3] sm:$0x1]
      %v2368 = vlaneseq
      %v2369 = vshrl.u32 %v2368, 7
      %v2370 = vsub.s32 0, %v2369
      %v2371 = vrot.slane %v2367, %v2370
      %v2372 = vmul.f32 %v2364, %v2371
      %v2373 = vmul.f32 %v2365, %v2371
      %v2374 = vld [vmem:[%s3 + $0x1] sm:$0x1]
      %v2375 = vlaneseq
      %v2376 = vshrl.u32 %v2375, 7
      %v2377 = vsub.s32 0, %v2376
      %v2378 = vrot.slane %v2374, %v2377
      %v2379 = vmul.f32 %v2364, %v2378
      %v2380 = vmul.f32 %v2365, %v2378
      %v2381 = vmul.f32 %v2366, %v2378
      %v2385 = vrot.slane %v2379, 1
      %v2386 = vrot.slane %v2380, 1
      %v2387 = vsel %vm830, %v2385, %v2386
      %v2388 = vrot.slane %v2381, 1
      %v2389 = vsel %vm830, %v2386, %v2388
      %v2392 = vadd.f32 %v2372, %v2387
      %v2393 = vadd.f32 %v2373, %v2389
      %v2394 = vld [vmem:[%s3 + $0x2] sm:$0x1]
      %v2395 = vlaneseq
      %v2396 = vshrl.u32 %v2395, 7
      %v2397 = vsub.s32 0, %v2396
      %v2398 = vrot.slane %v2394, %v2397
      %v2399 = vmul.f32 %v2364, %v2398
      %v2400 = vmul.f32 %v2365, %v2398
      %v2401 = vmul.f32 %v2366, %v2398
      %v2405 = vrot.slane %v2399, 2
      %v2406 = vrot.slane %v2400, 2
      %v2407 = vsel %vm464, %v2405, %v2406
      %v2408 = vrot.slane %v2401, 2
      %v2409 = vsel %vm464, %v2406, %v2408
      %v2412 = vadd.f32 %v2392, %v2407
      %v2413 = vadd.f32 %v2393, %v2409
      %v2414 = vld [vmem:[%s780] sm:$0xff]
      %v2415 = vld [vmem:[%s780 + $0x8] sm:$0xff]
      %v2416 = vld [vmem:[%s780 + $0x10] sm:$0x3]
      %v2417 = vld [vmem:[%s3 + $0x3] sm:$0x1]
      %v2418 = vlaneseq
      %v2419 = vshrl.u32 %v2418, 7
      %v2420 = vsub.s32 0, %v2419
      %v2421 = vrot.slane %v2417, %v2420
      %v2422 = vmul.f32 %v2414, %v2421
      %v2423 = vmul.f32 %v2415, %v2421
      %v2424 = vadd.f32 %v2412, %v2422
      %v2425 = vadd.f32 %v2413, %v2423
      %v2426 = vld [vmem:[%s3 + $0x4] sm:$0x1]
      %v2427 = vlaneseq
      %v2428 = vshrl.u32 %v2427, 7
      %v2429 = vsub.s32 0, %v2428
      %v2430 = vrot.slane %v2426, %v2429
      %v2431 = vmul.f32 %v2414, %v2430
      %v2432 = vmul.f32 %v2415, %v2430
      %v2433 = vmul.f32 %v2416, %v2430
      %v2437 = vrot.slane %v2431, 1
      %v2438 = vrot.slane %v2432, 1
      %v2439 = vsel %vm830, %v2437, %v2438
      %v2440 = vrot.slane %v2433, 1
      %v2441 = vsel %vm830, %v2438, %v2440
      %v2444 = vadd.f32 %v2424, %v2439
      %v2445 = vadd.f32 %v2425, %v2441
      %v2446 = vld [vmem:[%s3 + $0x5] sm:$0x1]
      %v2447 = vlaneseq
      %v2448 = vshrl.u32 %v2447, 7
      %v2449 = vsub.s32 0, %v2448
      %v2450 = vrot.slane %v2446, %v2449
      %v2451 = vmul.f32 %v2414, %v2450
      %v2452 = vmul.f32 %v2415, %v2450
      %v2453 = vmul.f32 %v2416, %v2450
      %v2457 = vrot.slane %v2451, 2
      %v2458 = vrot.slane %v2452, 2
      %v2459 = vsel %vm464, %v2457, %v2458
      %v2460 = vrot.slane %v2453, 2
      %v2461 = vsel %vm464, %v2458, %v2460
      %v2464 = vadd.f32 %v2444, %v2459
      %v2465 = vadd.f32 %v2445, %v2461
      %v2466 = vld [vmem:[%s785] sm:$0xff]
      %v2467 = vld [vmem:[%s785 + $0x8] sm:$0xff]
      %v2468 = vld [vmem:[%s785 + $0x10] sm:$0x3]
      %v2469 = vld [vmem:[%s3 + $0x6] sm:$0x1]
      %v2470 = vlaneseq
      %v2471 = vshrl.u32 %v2470, 7
      %v2472 = vsub.s32 0, %v2471
      %v2473 = vrot.slane %v2469, %v2472
      %v2474 = vmul.f32 %v2466, %v2473
      %v2475 = vmul.f32 %v2467, %v2473
      %v2476 = vadd.f32 %v2464, %v2474
      %v2477 = vadd.f32 %v2465, %v2475
      %v2478 = vld [vmem:[%s3 + $0x7] sm:$0x1]
      %v2479 = vlaneseq
      %v2480 = vshrl.u32 %v2479, 7
      %v2481 = vsub.s32 0, %v2480
      %v2482 = vrot.slane %v2478, %v2481
      %v2483 = vmul.f32 %v2466, %v2482
      %v2484 = vmul.f32 %v2467, %v2482
      %v2485 = vmul.f32 %v2468, %v2482
      %v2489 = vrot.slane %v2483, 1
      %v2490 = vrot.slane %v2484, 1
      %v2491 = vsel %vm830, %v2489, %v2490
      %v2492 = vrot.slane %v2485, 1
      %v2493 = vsel %vm830, %v2490, %v2492
      %v2496 = vadd.f32 %v2476, %v2491
      %v2497 = vadd.f32 %v2477, %v2493
      %v2498 = vld [vmem:[%s3 + $0x8] sm:$0x1]
      %v2499 = vlaneseq
      %v2500 = vshrl.u32 %v2499, 7
      %v2501 = vsub.s32 0, %v2500
      %v2502 = vrot.slane %v2498, %v2501
      %v2503 = vmul.f32 %v2466, %v2502
      %v2504 = vmul.f32 %v2467, %v2502
      %v2505 = vmul.f32 %v2468, %v2502
      %v2509 = vrot.slane %v2503, 2
      %v2510 = vrot.slane %v2504, 2
      %v2511 = vsel %vm464, %v2509, %v2510
      %v2512 = vrot.slane %v2505, 2
      %v2513 = vsel %vm464, %v2510, %v2512
      %v2516 = vadd.f32 %v2496, %v2511
      %v2517 = vadd.f32 %v2497, %v2513
      %v2518 = vadd.f32 %v2516, %v916
      %v2519 = vadd.f32 %v2517, %v916
      %v2520 = vmax.f32 %v2518, 0.0
      %v2521 = vmax.f32 %v2519, 0.0
      %v2522 = vpack.c.bf16 %v2521, %v2520
      %2523 = vst.msk [vmem:[#allocation4 + $0x50] sm:$0xff] %vm663, %v2522
      %v2524 = vld [vmem:[%s780] sm:$0xff]
      %v2525 = vld [vmem:[%s780 + $0x8] sm:$0xff]
      %v2526 = vld [vmem:[%s780 + $0x10] sm:$0x3]
      %v2527 = vld [vmem:[%s3] sm:$0x1]
      %v2528 = vlaneseq
      %v2529 = vshrl.u32 %v2528, 7
      %v2530 = vsub.s32 0, %v2529
      %v2531 = vrot.slane %v2527, %v2530
      %v2532 = vmul.f32 %v2524, %v2531
      %v2533 = vmul.f32 %v2525, %v2531
      %v2534 = vld [vmem:[%s3 + $0x1] sm:$0x1]
      %v2535 = vlaneseq
      %v2536 = vshrl.u32 %v2535, 7
      %v2537 = vsub.s32 0, %v2536
      %v2538 = vrot.slane %v2534, %v2537
      %v2539 = vmul.f32 %v2524, %v2538
      %v2540 = vmul.f32 %v2525, %v2538
      %v2541 = vmul.f32 %v2526, %v2538
      %v2545 = vrot.slane %v2539, 1
      %v2546 = vrot.slane %v2540, 1
      %v2547 = vsel %vm830, %v2545, %v2546
      %v2548 = vrot.slane %v2541, 1
      %v2549 = vsel %vm830, %v2546, %v2548
      %v2552 = vadd.f32 %v2532, %v2547
      %v2553 = vadd.f32 %v2533, %v2549
      %v2554 = vld [vmem:[%s3 + $0x2] sm:$0x1]
      %v2555 = vlaneseq
      %v2556 = vshrl.u32 %v2555, 7
      %v2557 = vsub.s32 0, %v2556
      %v2558 = vrot.slane %v2554, %v2557
      %v2559 = vmul.f32 %v2524, %v2558
      %v2560 = vmul.f32 %v2525, %v2558
      %v2561 = vmul.f32 %v2526, %v2558
      %v2565 = vrot.slane %v2559, 2
      %v2566 = vrot.slane %v2560, 2
      %v2567 = vsel %vm464, %v2565, %v2566
      %v2568 = vrot.slane %v2561, 2
      %v2569 = vsel %vm464, %v2566, %v2568
      %v2572 = vadd.f32 %v2552, %v2567
      %v2573 = vadd.f32 %v2553, %v2569
      %v2574 = vld [vmem:[%s785] sm:$0xff]
      %v2575 = vld [vmem:[%s785 + $0x8] sm:$0xff]
      %v2576 = vld [vmem:[%s785 + $0x10] sm:$0x3]
      %v2577 = vld [vmem:[%s3 + $0x3] sm:$0x1]
      %v2578 = vlaneseq
      %v2579 = vshrl.u32 %v2578, 7
      %v2580 = vsub.s32 0, %v2579
      %v2581 = vrot.slane %v2577, %v2580
      %v2582 = vmul.f32 %v2574, %v2581
      %v2583 = vmul.f32 %v2575, %v2581
      %v2584 = vadd.f32 %v2572, %v2582
      %v2585 = vadd.f32 %v2573, %v2583
      %v2586 = vld [vmem:[%s3 + $0x4] sm:$0x1]
      %v2587 = vlaneseq
      %v2588 = vshrl.u32 %v2587, 7
      %v2589 = vsub.s32 0, %v2588
      %v2590 = vrot.slane %v2586, %v2589
      %v2591 = vmul.f32 %v2574, %v2590
      %v2592 = vmul.f32 %v2575, %v2590
      %v2593 = vmul.f32 %v2576, %v2590
      %v2597 = vrot.slane %v2591, 1
      %v2598 = vrot.slane %v2592, 1
      %v2599 = vsel %vm830, %v2597, %v2598
      %v2600 = vrot.slane %v2593, 1
      %v2601 = vsel %vm830, %v2598, %v2600
      %v2604 = vadd.f32 %v2584, %v2599
      %v2605 = vadd.f32 %v2585, %v2601
      %v2606 = vld [vmem:[%s3 + $0x5] sm:$0x1]
      %v2607 = vlaneseq
      %v2608 = vshrl.u32 %v2607, 7
      %v2609 = vsub.s32 0, %v2608
      %v2610 = vrot.slane %v2606, %v2609
      %v2611 = vmul.f32 %v2574, %v2610
      %v2612 = vmul.f32 %v2575, %v2610
      %v2613 = vmul.f32 %v2576, %v2610
      %v2617 = vrot.slane %v2611, 2
      %v2618 = vrot.slane %v2612, 2
      %v2619 = vsel %vm464, %v2617, %v2618
      %v2620 = vrot.slane %v2613, 2
      %v2621 = vsel %vm464, %v2618, %v2620
      %v2624 = vadd.f32 %v2604, %v2619
      %v2625 = vadd.f32 %v2605, %v2621
      %v2626 = vld [vmem:[%s790] sm:$0xff]
      %v2627 = vld [vmem:[%s790 + $0x8] sm:$0xff]
      %v2628 = vld [vmem:[%s790 + $0x10] sm:$0x3]
      %v2629 = vld [vmem:[%s3 + $0x6] sm:$0x1]
      %v2630 = vlaneseq
      %v2631 = vshrl.u32 %v2630, 7
      %v2632 = vsub.s32 0, %v2631
      %v2633 = vrot.slane %v2629, %v2632
      %v2634 = vmul.f32 %v2626, %v2633
      %v2635 = vmul.f32 %v2627, %v2633
      %v2636 = vadd.f32 %v2624, %v2634
      %v2637 = vadd.f32 %v2625, %v2635
      %v2638 = vld [vmem:[%s3 + $0x7] sm:$0x1]
      %v2639 = vlaneseq
      %v2640 = vshrl.u32 %v2639, 7
      %v2641 = vsub.s32 0, %v2640
      %v2642 = vrot.slane %v2638, %v2641
      %v2643 = vmul.f32 %v2626, %v2642
      %v2644 = vmul.f32 %v2627, %v2642
      %v2645 = vmul.f32 %v2628, %v2642
      %v2649 = vrot.slane %v2643, 1
      %v2650 = vrot.slane %v2644, 1
      %v2651 = vsel %vm830, %v2649, %v2650
      %v2652 = vrot.slane %v2645, 1
      %v2653 = vsel %vm830, %v2650, %v2652
      %v2656 = vadd.f32 %v2636, %v2651
      %v2657 = vadd.f32 %v2637, %v2653
      %v2658 = vld [vmem:[%s3 + $0x8] sm:$0x1]
      %v2659 = vlaneseq
      %v2660 = vshrl.u32 %v2659, 7
      %v2661 = vsub.s32 0, %v2660
      %v2662 = vrot.slane %v2658, %v2661
      %v2663 = vmul.f32 %v2626, %v2662
      %v2664 = vmul.f32 %v2627, %v2662
      %v2665 = vmul.f32 %v2628, %v2662
      %v2669 = vrot.slane %v2663, 2
      %v2670 = vrot.slane %v2664, 2
      %v2671 = vsel %vm464, %v2669, %v2670
      %v2672 = vrot.slane %v2665, 2
      %v2673 = vsel %vm464, %v2670, %v2672
      %v2676 = vadd.f32 %v2656, %v2671
      %v2677 = vadd.f32 %v2657, %v2673
      %v2678 = vadd.f32 %v2676, %v916
      %v2679 = vadd.f32 %v2677, %v916
      %v2680 = vmax.f32 %v2678, 0.0
      %v2681 = vmax.f32 %v2679, 0.0
      %v2682 = vpack.c.bf16 %v2681, %v2680
      %2683 = vst.msk [vmem:[#allocation4 + $0x58] sm:$0xff] %vm663, %v2682
      %v2684 = vld [vmem:[%s785] sm:$0xff]
      %v2685 = vld [vmem:[%s785 + $0x8] sm:$0xff]
      %v2686 = vld [vmem:[%s785 + $0x10] sm:$0x3]
      %v2687 = vld [vmem:[%s3] sm:$0x1]
      %v2688 = vlaneseq
      %v2689 = vshrl.u32 %v2688, 7
      %v2690 = vsub.s32 0, %v2689
      %v2691 = vrot.slane %v2687, %v2690
      %v2692 = vmul.f32 %v2684, %v2691
      %v2693 = vmul.f32 %v2685, %v2691
      %v2694 = vld [vmem:[%s3 + $0x1] sm:$0x1]
      %v2695 = vlaneseq
      %v2696 = vshrl.u32 %v2695, 7
      %v2697 = vsub.s32 0, %v2696
      %v2698 = vrot.slane %v2694, %v2697
      %v2699 = vmul.f32 %v2684, %v2698
      %v2700 = vmul.f32 %v2685, %v2698
      %v2701 = vmul.f32 %v2686, %v2698
      %v2705 = vrot.slane %v2699, 1
      %v2706 = vrot.slane %v2700, 1
      %v2707 = vsel %vm830, %v2705, %v2706
      %v2708 = vrot.slane %v2701, 1
      %v2709 = vsel %vm830, %v2706, %v2708
      %v2712 = vadd.f32 %v2692, %v2707
      %v2713 = vadd.f32 %v2693, %v2709
      %v2714 = vld [vmem:[%s3 + $0x2] sm:$0x1]
      %v2715 = vlaneseq
      %v2716 = vshrl.u32 %v2715, 7
      %v2717 = vsub.s32 0, %v2716
      %v2718 = vrot.slane %v2714, %v2717
      %v2719 = vmul.f32 %v2684, %v2718
      %v2720 = vmul.f32 %v2685, %v2718
      %v2721 = vmul.f32 %v2686, %v2718
      %v2725 = vrot.slane %v2719, 2
      %v2726 = vrot.slane %v2720, 2
      %v2727 = vsel %vm464, %v2725, %v2726
      %v2728 = vrot.slane %v2721, 2
      %v2729 = vsel %vm464, %v2726, %v2728
      %v2732 = vadd.f32 %v2712, %v2727
      %v2733 = vadd.f32 %v2713, %v2729
      %v2734 = vld [vmem:[%s790] sm:$0xff]
      %v2735 = vld [vmem:[%s790 + $0x8] sm:$0xff]
      %v2736 = vld [vmem:[%s790 + $0x10] sm:$0x3]
      %v2737 = vld [vmem:[%s3 + $0x3] sm:$0x1]
      %v2738 = vlaneseq
      %v2739 = vshrl.u32 %v2738, 7
      %v2740 = vsub.s32 0, %v2739
      %v2741 = vrot.slane %v2737, %v2740
      %v2742 = vmul.f32 %v2734, %v2741
      %v2743 = vmul.f32 %v2735, %v2741
      %v2744 = vadd.f32 %v2732, %v2742
      %v2745 = vadd.f32 %v2733, %v2743
      %v2746 = vld [vmem:[%s3 + $0x4] sm:$0x1]
      %v2747 = vlaneseq
      %v2748 = vshrl.u32 %v2747, 7
      %v2749 = vsub.s32 0, %v2748
      %v2750 = vrot.slane %v2746, %v2749
      %v2751 = vmul.f32 %v2734, %v2750
      %v2752 = vmul.f32 %v2735, %v2750
      %v2753 = vmul.f32 %v2736, %v2750
      %v2757 = vrot.slane %v2751, 1
      %v2758 = vrot.slane %v2752, 1
      %v2759 = vsel %vm830, %v2757, %v2758
      %v2760 = vrot.slane %v2753, 1
      %v2761 = vsel %vm830, %v2758, %v2760
      %v2764 = vadd.f32 %v2744, %v2759
      %v2765 = vadd.f32 %v2745, %v2761
      %v2766 = vld [vmem:[%s3 + $0x5] sm:$0x1]
      %v2767 = vlaneseq
      %v2768 = vshrl.u32 %v2767, 7
      %v2769 = vsub.s32 0, %v2768
      %v2770 = vrot.slane %v2766, %v2769
      %v2771 = vmul.f32 %v2734, %v2770
      %v2772 = vmul.f32 %v2735, %v2770
      %v2773 = vmul.f32 %v2736, %v2770
      %v2777 = vrot.slane %v2771, 2
      %v2778 = vrot.slane %v2772, 2
      %v2779 = vsel %vm464, %v2777, %v2778
      %v2780 = vrot.slane %v2773, 2
      %v2781 = vsel %vm464, %v2778, %v2780
      %v2784 = vadd.f32 %v2764, %v2779
      %v2785 = vadd.f32 %v2765, %v2781
      %v2786 = vld [vmem:[%s795] sm:$0xff]
      %v2787 = vld [vmem:[%s795 + $0x8] sm:$0xff]
      %v2788 = vld [vmem:[%s795 + $0x10] sm:$0x3]
      %v2789 = vld [vmem:[%s3 + $0x6] sm:$0x1]
      %v2790 = vlaneseq
      %v2791 = vshrl.u32 %v2790, 7
      %v2792 = vsub.s32 0, %v2791
      %v2793 = vrot.slane %v2789, %v2792
      %v2794 = vmul.f32 %v2786, %v2793
      %v2795 = vmul.f32 %v2787, %v2793
      %v2796 = vadd.f32 %v2784, %v2794
      %v2797 = vadd.f32 %v2785, %v2795
      %v2798 = vld [vmem:[%s3 + $0x7] sm:$0x1]
      %v2799 = vlaneseq
      %v2800 = vshrl.u32 %v2799, 7
      %v2801 = vsub.s32 0, %v2800
      %v2802 = vrot.slane %v2798, %v2801
      %v2803 = vmul.f32 %v2786, %v2802
      %v2804 = vmul.f32 %v2787, %v2802
      %v2805 = vmul.f32 %v2788, %v2802
      %v2809 = vrot.slane %v2803, 1
      %v2810 = vrot.slane %v2804, 1
      %v2811 = vsel %vm830, %v2809, %v2810
      %v2812 = vrot.slane %v2805, 1
      %v2813 = vsel %vm830, %v2810, %v2812
      %v2816 = vadd.f32 %v2796, %v2811
      %v2817 = vadd.f32 %v2797, %v2813
      %v2818 = vld [vmem:[%s3 + $0x8] sm:$0x1]
      %v2819 = vlaneseq
      %v2820 = vshrl.u32 %v2819, 7
      %v2821 = vsub.s32 0, %v2820
      %v2822 = vrot.slane %v2818, %v2821
      %v2823 = vmul.f32 %v2786, %v2822
      %v2824 = vmul.f32 %v2787, %v2822
      %v2825 = vmul.f32 %v2788, %v2822
      %v2829 = vrot.slane %v2823, 2
      %v2830 = vrot.slane %v2824, 2
      %v2831 = vsel %vm464, %v2829, %v2830
      %v2832 = vrot.slane %v2825, 2
      %v2833 = vsel %vm464, %v2830, %v2832
      %v2836 = vadd.f32 %v2816, %v2831
      %v2837 = vadd.f32 %v2817, %v2833
      %v2838 = vadd.f32 %v2836, %v916
      %v2839 = vadd.f32 %v2837, %v916
      %v2840 = vmax.f32 %v2838, 0.0
      %v2841 = vmax.f32 %v2839, 0.0
      %v2842 = vpack.c.bf16 %v2841, %v2840
      %2843 = vst.msk [vmem:[#allocation4 + $0x60] sm:$0xff] %vm663, %v2842
      %v2844 = vld [vmem:[%s790] sm:$0xff]
      %v2845 = vld [vmem:[%s790 + $0x8] sm:$0xff]
      %v2846 = vld [vmem:[%s790 + $0x10] sm:$0x3]
      %v2847 = vld [vmem:[%s3] sm:$0x1]
      %v2848 = vlaneseq
      %v2849 = vshrl.u32 %v2848, 7
      %v2850 = vsub.s32 0, %v2849
      %v2851 = vrot.slane %v2847, %v2850
      %v2852 = vmul.f32 %v2844, %v2851
      %v2853 = vmul.f32 %v2845, %v2851
      %v2854 = vld [vmem:[%s3 + $0x1] sm:$0x1]
      %v2855 = vlaneseq
      %v2856 = vshrl.u32 %v2855, 7
      %v2857 = vsub.s32 0, %v2856
      %v2858 = vrot.slane %v2854, %v2857
      %v2859 = vmul.f32 %v2844, %v2858
      %v2860 = vmul.f32 %v2845, %v2858
      %v2861 = vmul.f32 %v2846, %v2858
      %v2865 = vrot.slane %v2859, 1
      %v2866 = vrot.slane %v2860, 1
      %v2867 = vsel %vm830, %v2865, %v2866
      %v2868 = vrot.slane %v2861, 1
      %v2869 = vsel %vm830, %v2866, %v2868
      %v2872 = vadd.f32 %v2852, %v2867
      %v2873 = vadd.f32 %v2853, %v2869
      %v2874 = vld [vmem:[%s3 + $0x2] sm:$0x1]
      %v2875 = vlaneseq
      %v2876 = vshrl.u32 %v2875, 7
      %v2877 = vsub.s32 0, %v2876
      %v2878 = vrot.slane %v2874, %v2877
      %v2879 = vmul.f32 %v2844, %v2878
      %v2880 = vmul.f32 %v2845, %v2878
      %v2881 = vmul.f32 %v2846, %v2878
      %v2885 = vrot.slane %v2879, 2
      %v2886 = vrot.slane %v2880, 2
      %v2887 = vsel %vm464, %v2885, %v2886
      %v2888 = vrot.slane %v2881, 2
      %v2889 = vsel %vm464, %v2886, %v2888
      %v2892 = vadd.f32 %v2872, %v2887
      %v2893 = vadd.f32 %v2873, %v2889
      %v2894 = vld [vmem:[%s795] sm:$0xff]
      %v2895 = vld [vmem:[%s795 + $0x8] sm:$0xff]
      %v2896 = vld [vmem:[%s795 + $0x10] sm:$0x3]
      %v2897 = vld [vmem:[%s3 + $0x3] sm:$0x1]
      %v2898 = vlaneseq
      %v2899 = vshrl.u32 %v2898, 7
      %v2900 = vsub.s32 0, %v2899
      %v2901 = vrot.slane %v2897, %v2900
      %v2902 = vmul.f32 %v2894, %v2901
      %v2903 = vmul.f32 %v2895, %v2901
      %v2904 = vadd.f32 %v2892, %v2902
      %v2905 = vadd.f32 %v2893, %v2903
      %v2906 = vld [vmem:[%s3 + $0x4] sm:$0x1]
      %v2907 = vlaneseq
      %v2908 = vshrl.u32 %v2907, 7
      %v2909 = vsub.s32 0, %v2908
      %v2910 = vrot.slane %v2906, %v2909
      %v2911 = vmul.f32 %v2894, %v2910
      %v2912 = vmul.f32 %v2895, %v2910
      %v2913 = vmul.f32 %v2896, %v2910
      %v2917 = vrot.slane %v2911, 1
      %v2918 = vrot.slane %v2912, 1
      %v2919 = vsel %vm830, %v2917, %v2918
      %v2920 = vrot.slane %v2913, 1
      %v2921 = vsel %vm830, %v2918, %v2920
      %v2924 = vadd.f32 %v2904, %v2919
      %v2925 = vadd.f32 %v2905, %v2921
      %v2926 = vld [vmem:[%s3 + $0x5] sm:$0x1]
      %v2927 = vlaneseq
      %v2928 = vshrl.u32 %v2927, 7
      %v2929 = vsub.s32 0, %v2928
      %v2930 = vrot.slane %v2926, %v2929
      %v2931 = vmul.f32 %v2894, %v2930
      %v2932 = vmul.f32 %v2895, %v2930
      %v2933 = vmul.f32 %v2896, %v2930
      %v2937 = vrot.slane %v2931, 2
      %v2938 = vrot.slane %v2932, 2
      %v2939 = vsel %vm464, %v2937, %v2938
      %v2940 = vrot.slane %v2933, 2
      %v2941 = vsel %vm464, %v2938, %v2940
      %v2944 = vadd.f32 %v2924, %v2939
      %v2945 = vadd.f32 %v2925, %v2941
      %v2946 = vld [vmem:[%s800] sm:$0xff]
      %v2947 = vld [vmem:[%s800 + $0x8] sm:$0xff]
      %v2948 = vld [vmem:[%s800 + $0x10] sm:$0x3]
      %v2949 = vld [vmem:[%s3 + $0x6] sm:$0x1]
      %v2950 = vlaneseq
      %v2951 = vshrl.u32 %v2950, 7
      %v2952 = vsub.s32 0, %v2951
      %v2953 = vrot.slane %v2949, %v2952
      %v2954 = vmul.f32 %v2946, %v2953
      %v2955 = vmul.f32 %v2947, %v2953
      %v2956 = vadd.f32 %v2944, %v2954
      %v2957 = vadd.f32 %v2945, %v2955
      %v2958 = vld [vmem:[%s3 + $0x7] sm:$0x1]
      %v2959 = vlaneseq
      %v2960 = vshrl.u32 %v2959, 7
      %v2961 = vsub.s32 0, %v2960
      %v2962 = vrot.slane %v2958, %v2961
      %v2963 = vmul.f32 %v2946, %v2962
      %v2964 = vmul.f32 %v2947, %v2962
      %v2965 = vmul.f32 %v2948, %v2962
      %v2969 = vrot.slane %v2963, 1
      %v2970 = vrot.slane %v2964, 1
      %v2971 = vsel %vm830, %v2969, %v2970
      %v2972 = vrot.slane %v2965, 1
      %v2973 = vsel %vm830, %v2970, %v2972
      %v2976 = vadd.f32 %v2956, %v2971
      %v2977 = vadd.f32 %v2957, %v2973
      %v2978 = vld [vmem:[%s3 + $0x8] sm:$0x1]
      %v2979 = vlaneseq
      %v2980 = vshrl.u32 %v2979, 7
      %v2981 = vsub.s32 0, %v2980
      %v2982 = vrot.slane %v2978, %v2981
      %v2983 = vmul.f32 %v2946, %v2982
      %v2984 = vmul.f32 %v2947, %v2982
      %v2985 = vmul.f32 %v2948, %v2982
      %v2989 = vrot.slane %v2983, 2
      %v2990 = vrot.slane %v2984, 2
      %v2991 = vsel %vm464, %v2989, %v2990
      %v2992 = vrot.slane %v2985, 2
      %v2993 = vsel %vm464, %v2990, %v2992
      %v2996 = vadd.f32 %v2976, %v2991
      %v2997 = vadd.f32 %v2977, %v2993
      %v2998 = vadd.f32 %v2996, %v916
      %v2999 = vadd.f32 %v2997, %v916
      %v3000 = vmax.f32 %v2998, 0.0
      %v3001 = vmax.f32 %v2999, 0.0
      %v3002 = vpack.c.bf16 %v3001, %v3000
      %3003 = vst.msk [vmem:[#allocation4 + $0x68] sm:$0xff] %vm663, %v3002
      %v3004 = vld [vmem:[%s795] sm:$0xff]
      %v3005 = vld [vmem:[%s795 + $0x8] sm:$0xff]
      %v3006 = vld [vmem:[%s795 + $0x10] sm:$0x3]
      %v3007 = vld [vmem:[%s3] sm:$0x1]
      %v3008 = vlaneseq
      %v3009 = vshrl.u32 %v3008, 7
      %v3010 = vsub.s32 0, %v3009
      %v3011 = vrot.slane %v3007, %v3010
      %v3012 = vmul.f32 %v3004, %v3011
      %v3013 = vmul.f32 %v3005, %v3011
      %v3014 = vld [vmem:[%s3 + $0x1] sm:$0x1]
      %v3015 = vlaneseq
      %v3016 = vshrl.u32 %v3015, 7
      %v3017 = vsub.s32 0, %v3016
      %v3018 = vrot.slane %v3014, %v3017
      %v3019 = vmul.f32 %v3004, %v3018
      %v3020 = vmul.f32 %v3005, %v3018
      %v3021 = vmul.f32 %v3006, %v3018
      %v3025 = vrot.slane %v3019, 1
      %v3026 = vrot.slane %v3020, 1
      %v3027 = vsel %vm830, %v3025, %v3026
      %v3028 = vrot.slane %v3021, 1
      %v3029 = vsel %vm830, %v3026, %v3028
      %v3032 = vadd.f32 %v3012, %v3027
      %v3033 = vadd.f32 %v3013, %v3029
      %v3034 = vld [vmem:[%s3 + $0x2] sm:$0x1]
      %v3035 = vlaneseq
      %v3036 = vshrl.u32 %v3035, 7
      %v3037 = vsub.s32 0, %v3036
      %v3038 = vrot.slane %v3034, %v3037
      %v3039 = vmul.f32 %v3004, %v3038
      %v3040 = vmul.f32 %v3005, %v3038
      %v3041 = vmul.f32 %v3006, %v3038
      %v3045 = vrot.slane %v3039, 2
      %v3046 = vrot.slane %v3040, 2
      %v3047 = vsel %vm464, %v3045, %v3046
      %v3048 = vrot.slane %v3041, 2
      %v3049 = vsel %vm464, %v3046, %v3048
      %v3052 = vadd.f32 %v3032, %v3047
      %v3053 = vadd.f32 %v3033, %v3049
      %v3054 = vld [vmem:[%s800] sm:$0xff]
      %v3055 = vld [vmem:[%s800 + $0x8] sm:$0xff]
      %v3056 = vld [vmem:[%s800 + $0x10] sm:$0x3]
      %v3057 = vld [vmem:[%s3 + $0x3] sm:$0x1]
      %v3058 = vlaneseq
      %v3059 = vshrl.u32 %v3058, 7
      %v3060 = vsub.s32 0, %v3059
      %v3061 = vrot.slane %v3057, %v3060
      %v3062 = vmul.f32 %v3054, %v3061
      %v3063 = vmul.f32 %v3055, %v3061
      %v3064 = vadd.f32 %v3052, %v3062
      %v3065 = vadd.f32 %v3053, %v3063
      %v3066 = vld [vmem:[%s3 + $0x4] sm:$0x1]
      %v3067 = vlaneseq
      %v3068 = vshrl.u32 %v3067, 7
      %v3069 = vsub.s32 0, %v3068
      %v3070 = vrot.slane %v3066, %v3069
      %v3071 = vmul.f32 %v3054, %v3070
      %v3072 = vmul.f32 %v3055, %v3070
      %v3073 = vmul.f32 %v3056, %v3070
      %v3077 = vrot.slane %v3071, 1
      %v3078 = vrot.slane %v3072, 1
      %v3079 = vsel %vm830, %v3077, %v3078
      %v3080 = vrot.slane %v3073, 1
      %v3081 = vsel %vm830, %v3078, %v3080
      %v3084 = vadd.f32 %v3064, %v3079
      %v3085 = vadd.f32 %v3065, %v3081
      %v3086 = vld [vmem:[%s3 + $0x5] sm:$0x1]
      %v3087 = vlaneseq
      %v3088 = vshrl.u32 %v3087, 7
      %v3089 = vsub.s32 0, %v3088
      %v3090 = vrot.slane %v3086, %v3089
      %v3091 = vmul.f32 %v3054, %v3090
      %v3092 = vmul.f32 %v3055, %v3090
      %v3093 = vmul.f32 %v3056, %v3090
      %v3097 = vrot.slane %v3091, 2
      %v3098 = vrot.slane %v3092, 2
      %v3099 = vsel %vm464, %v3097, %v3098
      %v3100 = vrot.slane %v3093, 2
      %v3101 = vsel %vm464, %v3098, %v3100
      %v3104 = vadd.f32 %v3084, %v3099
      %v3105 = vadd.f32 %v3085, %v3101
      %v3106 = vld [vmem:[%s805] sm:$0xff]
      %v3107 = vld [vmem:[%s805 + $0x8] sm:$0xff]
      %v3108 = vld [vmem:[%s805 + $0x10] sm:$0x3]
      %v3109 = vld [vmem:[%s3 + $0x6] sm:$0x1]
      %v3110 = vlaneseq
      %v3111 = vshrl.u32 %v3110, 7
      %v3112 = vsub.s32 0, %v3111
      %v3113 = vrot.slane %v3109, %v3112
      %v3114 = vmul.f32 %v3106, %v3113
      %v3115 = vmul.f32 %v3107, %v3113
      %v3116 = vadd.f32 %v3104, %v3114
      %v3117 = vadd.f32 %v3105, %v3115
      %v3118 = vld [vmem:[%s3 + $0x7] sm:$0x1]
      %v3119 = vlaneseq
      %v3120 = vshrl.u32 %v3119, 7
      %v3121 = vsub.s32 0, %v3120
      %v3122 = vrot.slane %v3118, %v3121
      %v3123 = vmul.f32 %v3106, %v3122
      %v3124 = vmul.f32 %v3107, %v3122
      %v3125 = vmul.f32 %v3108, %v3122
      %v3129 = vrot.slane %v3123, 1
      %v3130 = vrot.slane %v3124, 1
      %v3131 = vsel %vm830, %v3129, %v3130
      %v3132 = vrot.slane %v3125, 1
      %v3133 = vsel %vm830, %v3130, %v3132
      %v3136 = vadd.f32 %v3116, %v3131
      %v3137 = vadd.f32 %v3117, %v3133
      %v3138 = vld [vmem:[%s3 + $0x8] sm:$0x1]
      %v3139 = vlaneseq
      %v3140 = vshrl.u32 %v3139, 7
      %v3141 = vsub.s32 0, %v3140
      %v3142 = vrot.slane %v3138, %v3141
      %v3143 = vmul.f32 %v3106, %v3142
      %v3144 = vmul.f32 %v3107, %v3142
      %v3145 = vmul.f32 %v3108, %v3142
      %v3149 = vrot.slane %v3143, 2
      %v3150 = vrot.slane %v3144, 2
      %v3151 = vsel %vm464, %v3149, %v3150
      %v3152 = vrot.slane %v3145, 2
      %v3153 = vsel %vm464, %v3150, %v3152
      %v3156 = vadd.f32 %v3136, %v3151
      %v3157 = vadd.f32 %v3137, %v3153
      %v3158 = vadd.f32 %v3156, %v916
      %v3159 = vadd.f32 %v3157, %v916
      %v3160 = vmax.f32 %v3158, 0.0
      %v3161 = vmax.f32 %v3159, 0.0
      %v3162 = vpack.c.bf16 %v3161, %v3160
      %3163 = vst.msk [vmem:[#allocation4 + $0x70] sm:$0xff] %vm663, %v3162
      %v3164 = vld [vmem:[%s800] sm:$0xff]
      %v3165 = vld [vmem:[%s800 + $0x8] sm:$0xff]
      %v3166 = vld [vmem:[%s800 + $0x10] sm:$0x3]
      %v3167 = vld [vmem:[%s3] sm:$0x1]
      %v3168 = vlaneseq
      %v3169 = vshrl.u32 %v3168, 7
      %v3170 = vsub.s32 0, %v3169
      %v3171 = vrot.slane %v3167, %v3170
      %v3172 = vmul.f32 %v3164, %v3171
      %v3173 = vmul.f32 %v3165, %v3171
      %v3174 = vld [vmem:[%s3 + $0x1] sm:$0x1]
      %v3175 = vlaneseq
      %v3176 = vshrl.u32 %v3175, 7
      %v3177 = vsub.s32 0, %v3176
      %v3178 = vrot.slane %v3174, %v3177
      %v3179 = vmul.f32 %v3164, %v3178
      %v3180 = vmul.f32 %v3165, %v3178
      %v3181 = vmul.f32 %v3166, %v3178
      %v3185 = vrot.slane %v3179, 1
      %v3186 = vrot.slane %v3180, 1
      %v3187 = vsel %vm830, %v3185, %v3186
      %v3188 = vrot.slane %v3181, 1
      %v3189 = vsel %vm830, %v3186, %v3188
      %v3192 = vadd.f32 %v3172, %v3187
      %v3193 = vadd.f32 %v3173, %v3189
      %v3194 = vld [vmem:[%s3 + $0x2] sm:$0x1]
      %v3195 = vlaneseq
      %v3196 = vshrl.u32 %v3195, 7
      %v3197 = vsub.s32 0, %v3196
      %v3198 = vrot.slane %v3194, %v3197
      %v3199 = vmul.f32 %v3164, %v3198
      %v3200 = vmul.f32 %v3165, %v3198
      %v3201 = vmul.f32 %v3166, %v3198
      %v3205 = vrot.slane %v3199, 2
      %v3206 = vrot.slane %v3200, 2
      %v3207 = vsel %vm464, %v3205, %v3206
      %v3208 = vrot.slane %v3201, 2
      %v3209 = vsel %vm464, %v3206, %v3208
      %v3212 = vadd.f32 %v3192, %v3207
      %v3213 = vadd.f32 %v3193, %v3209
      %v3214 = vld [vmem:[%s805] sm:$0xff]
      %v3215 = vld [vmem:[%s805 + $0x8] sm:$0xff]
      %v3216 = vld [vmem:[%s805 + $0x10] sm:$0x3]
      %v3217 = vld [vmem:[%s3 + $0x3] sm:$0x1]
      %v3218 = vlaneseq
      %v3219 = vshrl.u32 %v3218, 7
      %v3220 = vsub.s32 0, %v3219
      %v3221 = vrot.slane %v3217, %v3220
      %v3222 = vmul.f32 %v3214, %v3221
      %v3223 = vmul.f32 %v3215, %v3221
      %v3224 = vadd.f32 %v3212, %v3222
      %v3225 = vadd.f32 %v3213, %v3223
      %v3226 = vld [vmem:[%s3 + $0x4] sm:$0x1]
      %v3227 = vlaneseq
      %v3228 = vshrl.u32 %v3227, 7
      %v3229 = vsub.s32 0, %v3228
      %v3230 = vrot.slane %v3226, %v3229
      %v3231 = vmul.f32 %v3214, %v3230
      %v3232 = vmul.f32 %v3215, %v3230
      %v3233 = vmul.f32 %v3216, %v3230
      %v3237 = vrot.slane %v3231, 1
      %v3238 = vrot.slane %v3232, 1
      %v3239 = vsel %vm830, %v3237, %v3238
      %v3240 = vrot.slane %v3233, 1
      %v3241 = vsel %vm830, %v3238, %v3240
      %v3244 = vadd.f32 %v3224, %v3239
      %v3245 = vadd.f32 %v3225, %v3241
      %v3246 = vld [vmem:[%s3 + $0x5] sm:$0x1]
      %v3247 = vlaneseq
      %v3248 = vshrl.u32 %v3247, 7
      %v3249 = vsub.s32 0, %v3248
      %v3250 = vrot.slane %v3246, %v3249
      %v3251 = vmul.f32 %v3214, %v3250
      %v3252 = vmul.f32 %v3215, %v3250
      %v3253 = vmul.f32 %v3216, %v3250
      %v3257 = vrot.slane %v3251, 2
      %v3258 = vrot.slane %v3252, 2
      %v3259 = vsel %vm464, %v3257, %v3258
      %v3260 = vrot.slane %v3253, 2
      %v3261 = vsel %vm464, %v3258, %v3260
      %v3264 = vadd.f32 %v3244, %v3259
      %v3265 = vadd.f32 %v3245, %v3261
      %v3266 = vadd.f32 %v3264, %v916
      %v3267 = vadd.f32 %v3265, %v916
      %v3268 = vmax.f32 %v3266, 0.0
      %v3269 = vmax.f32 %v3267, 0.0
      %v3270 = vpack.c.bf16 %v3269, %v3268
      %3271 = vst.msk [vmem:[#allocation4 + $0x78] sm:$0xff] %vm663, %v3270
      %v3272 = vld [vmem:[#allocation4] sm:$0xff]
      %v3273 = vld [vmem:[#allocation4 + $0x8] sm:$0xff]
      %v3274 = vld [vmem:[#allocation4 + $0x10] sm:$0xff]
      %v3275 = vld [vmem:[#allocation4 + $0x18] sm:$0xff]
      %v3276 = vld [vmem:[#allocation4 + $0x20] sm:$0xff]
      %v3277 = vld [vmem:[#allocation4 + $0x28] sm:$0xff]
      %v3278 = vld [vmem:[#allocation4 + $0x30] sm:$0xff]
      %v3279 = vld [vmem:[#allocation4 + $0x38] sm:$0xff]
      %v3280 = vld [vmem:[#allocation4 + $0x40] sm:$0xff]
      %v3281 = vld [vmem:[#allocation4 + $0x48] sm:$0xff]
      %v3282 = vld [vmem:[#allocation4 + $0x50] sm:$0xff]
      %v3283 = vld [vmem:[#allocation4 + $0x58] sm:$0xff]
      %v3284 = vld [vmem:[#allocation4 + $0x60] sm:$0xff]
      %v3285 = vld [vmem:[#allocation4 + $0x68] sm:$0xff]
      %v3286 = vld [vmem:[#allocation4 + $0x70] sm:$0xff]
      %v3287 = vld [vmem:[#allocation4 + $0x78] sm:$0xff]
      %v3288 = vld [vmem:[%s5] sm:$0xf]
      %v3289 = vld [vmem:[%s5 + $0x4] sm:$0xf]
      %v3290 = vld [vmem:[%s5 + $0x8] sm:$0xf]
      %v3291 = vld [vmem:[%s6] sm:$0x1]
      %v3293 = vlaneseq
      %v3294 = vshrl.u32 %v3293, 7
      %v3295 = vsub.s32 0, %v3294
      %v3296 = vrot.slane %v3291, %v3295
      %v3301 = vunpack.c.l.b16 %v3288
      %v3302 = vunpack.c.l.b16 %v3289
      %v3303 = vunpack.c.l.b16 %v3290
      %v3304 = vpack.c.b16 %v3302, %v3301
      %v3305 = vpack.c.b16 %v3303, %v3303
      %v3308 = vsel %vm663, %v3272, 0
      %v3311 = vsel %vm663, %v3273, 0
      %v3314 = vsel %vm663, %v3274, 0
      %v3317 = vsel %vm663, %v3275, 0
      %v3320 = vsel %vm663, %v3276, 0
      %v3323 = vsel %vm663, %v3277, 0
      %v3326 = vsel %vm663, %v3278, 0
      %v3329 = vsel %vm663, %v3279, 0
      %v3332 = vsel %vm663, %v3280, 0
      %v3335 = vsel %vm663, %v3281, 0
      %v3338 = vsel %vm663, %v3282, 0
      %v3341 = vsel %vm663, %v3283, 0
      %v3344 = vsel %vm663, %v3284, 0
      %v3347 = vsel %vm663, %v3285, 0
      %v3350 = vsel %vm663, %v3286, 0
      %v3353 = vsel %vm663, %v3287, 0
      %vm3355 = vcmask 1043456
      %v3357 = vsel %vm3355, %v3305, 0
      %3359 = vmatprep.subr.bf16.mxu0 0
      %3360 = vmatpush1.bf16.msra.mxu0 %v3304
      %3361 = vmatprep.subr.bf16.mxu0 0
      %3362 = vmatpush1.bf16.msra.mxu0 %v3357
      %3363 = vmatprep.subr.bf16.mxu0 0
      %3364 = vmatpush1.bf16.msra.mxu0 0
      %3365 = vmatprep.subr.bf16.mxu0 0
      %3366 = vmatpush1.bf16.msra.mxu0 0
      %3367 = vmatprep.subr.bf16.mxu0 0
      %3368 = vmatpush1.bf16.msra.mxu0 0
      %3369 = vmatprep.subr.bf16.mxu0 0
      %3370 = vmatpush1.bf16.msra.mxu0 0
      %3371 = vmatprep.subr.bf16.mxu0 0
      %3372 = vmatpush1.bf16.msra.mxu0 0
      %3373 = vmatprep.subr.bf16.mxu0 0
      %3374 = vmatpush1.bf16.msra.mxu0 0
      %3375 = vmatprep.subr.bf16.mxu0 0
      %3376 = vmatpush1.bf16.msra.mxu0 0
      %3377 = vmatprep.subr.bf16.mxu0 0
      %3378 = vmatpush1.bf16.msra.mxu0 0
      %3379 = vmatprep.subr.bf16.mxu0 0
      %3380 = vmatpush1.bf16.msra.mxu0 0
      %3381 = vmatprep.subr.bf16.mxu0 0
      %3382 = vmatpush1.bf16.msra.mxu0 0
      %3383 = vmatprep.subr.bf16.mxu0 0
      %3384 = vmatpush1.bf16.msra.mxu0 0
      %3385 = vmatprep.subr.bf16.mxu0 0
      %3386 = vmatpush1.bf16.msra.mxu0 0
      %3387 = vmatprep.subr.bf16.mxu0 0
      %3388 = vmatpush1.bf16.msra.mxu0 0
      %3389 = vmatprep.subr.bf16.mxu0 0
      %3390 = vmatpush1.bf16.msra.mxu0 0
      %3391 = vmatprep.mubr.bf16.mxu0 0
      %3392 = vmatmul.mubr.bf16.gmra.mrb[0].mxu0 %v3308
      %v3393 = vpop.f32.mrb[0].mxu0
      %v3394 = vadd.f32 %v3296, %v3393
      %v3395 = vpop.f32.mrb[0].mxu0
      %v3396 = vpop.f32.mrb[0].mxu0
      %v3397 = vadd.f32 %v3296, %v3396
      %v3398 = vpop.f32.mrb[0].mxu0
      %3399 = vmatprep.mubr.bf16.mxu0 0
      %3400 = vmatmul.mubr.bf16.gmra.mrb[0].mxu0 %v3311
      %v3401 = vpop.f32.mrb[0].mxu0
      %v3402 = vadd.f32 %v3296, %v3401
      %v3403 = vpop.f32.mrb[0].mxu0
      %v3404 = vpop.f32.mrb[0].mxu0
      %v3405 = vadd.f32 %v3296, %v3404
      %v3406 = vpop.f32.mrb[0].mxu0
      %3407 = vmatprep.mubr.bf16.mxu0 0
      %3408 = vmatmul.mubr.bf16.gmra.mrb[0].mxu0 %v3314
      %v3409 = vpop.f32.mrb[0].mxu0
      %v3410 = vadd.f32 %v3296, %v3409
      %v3411 = vpop.f32.mrb[0].mxu0
      %v3412 = vpop.f32.mrb[0].mxu0
      %v3413 = vadd.f32 %v3296, %v3412
      %v3414 = vpop.f32.mrb[0].mxu0
      %3415 = vmatprep.mubr.bf16.mxu0 0
      %3416 = vmatmul.mubr.bf16.gmra.mrb[0].mxu0 %v3317
      %v3417 = vpop.f32.mrb[0].mxu0
      %v3418 = vadd.f32 %v3296, %v3417
      %v3419 = vpop.f32.mrb[0].mxu0
      %v3420 = vpop.f32.mrb[0].mxu0
      %v3421 = vadd.f32 %v3296, %v3420
      %v3422 = vpop.f32.mrb[0].mxu0
      %3423 = vmatprep.mubr.bf16.mxu0 0
      %3424 = vmatmul.mubr.bf16.gmra.mrb[0].mxu0 %v3320
      %v3425 = vpop.f32.mrb[0].mxu0
      %v3426 = vadd.f32 %v3296, %v3425
      %v3427 = vpop.f32.mrb[0].mxu0
      %v3428 = vpop.f32.mrb[0].mxu0
      %v3429 = vadd.f32 %v3296, %v3428
      %v3430 = vpop.f32.mrb[0].mxu0
      %3431 = vmatprep.mubr.bf16.mxu0 0
      %3432 = vmatmul.mubr.bf16.gmra.mrb[0].mxu0 %v3323
      %v3433 = vpop.f32.mrb[0].mxu0
      %v3434 = vadd.f32 %v3296, %v3433
      %v3435 = vpop.f32.mrb[0].mxu0
      %v3436 = vpop.f32.mrb[0].mxu0
      %v3437 = vadd.f32 %v3296, %v3436
      %v3438 = vpop.f32.mrb[0].mxu0
      %3439 = vmatprep.mubr.bf16.mxu0 0
      %3440 = vmatmul.mubr.bf16.gmra.mrb[0].mxu0 %v3326
      %v3441 = vpop.f32.mrb[0].mxu0
      %v3442 = vadd.f32 %v3296, %v3441
      %v3443 = vpop.f32.mrb[0].mxu0
      %v3444 = vpop.f32.mrb[0].mxu0
      %v3445 = vadd.f32 %v3296, %v3444
      %v3446 = vpop.f32.mrb[0].mxu0
      %3447 = vmatprep.mubr.bf16.mxu0 0
      %3448 = vmatmul.mubr.bf16.gmra.mrb[0].mxu0 %v3329
      %v3449 = vpop.f32.mrb[0].mxu0
      %v3450 = vadd.f32 %v3296, %v3449
      %v3451 = vpop.f32.mrb[0].mxu0
      %v3452 = vpop.f32.mrb[0].mxu0
      %v3453 = vadd.f32 %v3296, %v3452
      %v3454 = vpop.f32.mrb[0].mxu0
      %3455 = vmatprep.mubr.bf16.mxu0 0
      %3456 = vmatmul.mubr.bf16.gmra.mrb[0].mxu0 %v3332
      %v3457 = vpop.f32.mrb[0].mxu0
      %v3458 = vadd.f32 %v3296, %v3457
      %v3459 = vpop.f32.mrb[0].mxu0
      %v3460 = vpop.f32.mrb[0].mxu0
      %v3461 = vadd.f32 %v3296, %v3460
      %v3462 = vpop.f32.mrb[0].mxu0
      %3463 = vmatprep.mubr.bf16.mxu0 0
      %3464 = vmatmul.mubr.bf16.gmra.mrb[0].mxu0 %v3335
      %v3465 = vpop.f32.mrb[0].mxu0
      %v3466 = vadd.f32 %v3296, %v3465
      %v3467 = vpop.f32.mrb[0].mxu0
      %v3468 = vpop.f32.mrb[0].mxu0
      %v3469 = vadd.f32 %v3296, %v3468
      %v3470 = vpop.f32.mrb[0].mxu0
      %3471 = vmatprep.mubr.bf16.mxu0 0
      %3472 = vmatmul.mubr.bf16.gmra.mrb[0].mxu0 %v3338
      %v3473 = vpop.f32.mrb[0].mxu0
      %v3474 = vadd.f32 %v3296, %v3473
      %v3475 = vpop.f32.mrb[0].mxu0
      %v3476 = vpop.f32.mrb[0].mxu0
      %v3477 = vadd.f32 %v3296, %v3476
      %v3478 = vpop.f32.mrb[0].mxu0
      %3479 = vmatprep.mubr.bf16.mxu0 0
      %3480 = vmatmul.mubr.bf16.gmra.mrb[0].mxu0 %v3341
      %v3481 = vpop.f32.mrb[0].mxu0
      %v3482 = vadd.f32 %v3296, %v3481
      %v3483 = vpop.f32.mrb[0].mxu0
      %v3484 = vpop.f32.mrb[0].mxu0
      %v3485 = vadd.f32 %v3296, %v3484
      %v3486 = vpop.f32.mrb[0].mxu0
      %3487 = vmatprep.mubr.bf16.mxu0 0
      %3488 = vmatmul.mubr.bf16.gmra.mrb[0].mxu0 %v3344
      %v3489 = vpop.f32.mrb[0].mxu0
      %v3490 = vadd.f32 %v3296, %v3489
      %v3491 = vpop.f32.mrb[0].mxu0
      %v3492 = vpop.f32.mrb[0].mxu0
      %v3493 = vadd.f32 %v3296, %v3492
      %v3494 = vpop.f32.mrb[0].mxu0
      %3495 = vmatprep.mubr.bf16.mxu0 0
      %3496 = vmatmul.mubr.bf16.gmra.mrb[0].mxu0 %v3347
      %v3497 = vpop.f32.mrb[0].mxu0
      %v3498 = vadd.f32 %v3296, %v3497
      %v3499 = vpop.f32.mrb[0].mxu0
      %v3500 = vpop.f32.mrb[0].mxu0
      %v3501 = vadd.f32 %v3296, %v3500
      %v3502 = vpop.f32.mrb[0].mxu0
      %3503 = vmatprep.mubr.bf16.mxu0 0
      %3504 = vmatmul.mubr.bf16.gmra.mrb[0].mxu0 %v3350
      %v3505 = vpop.f32.mrb[0].mxu0
      %v3506 = vadd.f32 %v3296, %v3505
      %v3507 = vpop.f32.mrb[0].mxu0
      %v3508 = vpop.f32.mrb[0].mxu0
      %v3509 = vadd.f32 %v3296, %v3508
      %v3510 = vpop.f32.mrb[0].mxu0
      %3511 = vmatprep.mubr.bf16.mxu0 0
      %3512 = vmatmul.mubr.bf16.gmra.mrb[0].mxu0 %v3353
      %v3513 = vpop.f32.mrb[0].mxu0
      %v3514 = vadd.f32 %v3296, %v3513
      %v3515 = vpop.f32.mrb[0].mxu0
      %v3516 = vpop.f32.mrb[0].mxu0
      %v3517 = vadd.f32 %v3296, %v3516
      %v3518 = vpop.f32.mrb[0].mxu0
      %3519 = vdwg.mxu0
      %v3520 = vpack.c.bf16 %v3397, %v3394
      %v3521 = vpack.c.bf16 %v3405, %v3402
      %v3522 = vpack.c.bf16 %v3413, %v3410
      %v3523 = vpack.c.bf16 %v3421, %v3418
      %v3524 = vpack.c.bf16 %v3429, %v3426
      %v3525 = vpack.c.bf16 %v3437, %v3434
      %v3526 = vpack.c.bf16 %v3445, %v3442
      %v3527 = vpack.c.bf16 %v3453, %v3450
      %v3528 = vpack.c.bf16 %v3461, %v3458
      %v3529 = vpack.c.bf16 %v3469, %v3466
      %v3530 = vpack.c.bf16 %v3477, %v3474
      %v3531 = vpack.c.bf16 %v3485, %v3482
      %v3532 = vpack.c.bf16 %v3493, %v3490
      %v3533 = vpack.c.bf16 %v3501, %v3498
      %v3534 = vpack.c.bf16 %v3509, %v3506
      %v3535 = vpack.c.bf16 %v3517, %v3514
      %v3552 = vunpack.c.l.b16 %v3520
      %v3553 = vunpack.c.h.b16 %v3520
      %v3554 = vunpack.c.l.b16 %v3521
      %v3555 = vunpack.c.h.b16 %v3521
      %v3556 = vunpack.c.l.b16 %v3522
      %v3557 = vunpack.c.h.b16 %v3522
      %v3558 = vunpack.c.l.b16 %v3523
      %v3559 = vunpack.c.h.b16 %v3523
      %v3560 = vunpack.c.l.b16 %v3524
      %v3561 = vunpack.c.h.b16 %v3524
      %v3562 = vunpack.c.l.b16 %v3525
      %v3563 = vunpack.c.h.b16 %v3525
      %v3564 = vunpack.c.l.b16 %v3526
      %v3565 = vunpack.c.h.b16 %v3526
      %v3566 = vunpack.c.l.b16 %v3527
      %v3567 = vunpack.c.h.b16 %v3527
      %v3568 = vunpack.c.l.b16 %v3528
      %v3569 = vunpack.c.h.b16 %v3528
      %v3570 = vunpack.c.l.b16 %v3529
      %v3571 = vunpack.c.h.b16 %v3529
      %v3572 = vunpack.c.l.b16 %v3530
      %v3573 = vunpack.c.h.b16 %v3530
      %v3574 = vunpack.c.l.b16 %v3531
      %v3575 = vunpack.c.h.b16 %v3531
      %v3576 = vunpack.c.l.b16 %v3532
      %v3577 = vunpack.c.h.b16 %v3532
      %v3578 = vunpack.c.l.b16 %v3533
      %v3579 = vunpack.c.h.b16 %v3533
      %v3580 = vunpack.c.l.b16 %v3534
      %v3581 = vunpack.c.h.b16 %v3534
      %v3582 = vunpack.c.l.b16 %v3535
      %v3583 = vunpack.c.h.b16 %v3535
      %v3584 = vpack.c.b16 %v3552, %v3552
      %v3585 = vpack.c.b16 %v3553, %v3553
      %v3586 = vpack.c.b16 %v3554, %v3554
      %v3587 = vpack.c.b16 %v3555, %v3555
      %v3588 = vpack.c.b16 %v3556, %v3556
      %v3589 = vpack.c.b16 %v3557, %v3557
      %v3590 = vpack.c.b16 %v3558, %v3558
      %v3591 = vpack.c.b16 %v3559, %v3559
      %v3592 = vpack.c.b16 %v3560, %v3560
      %v3593 = vpack.c.b16 %v3561, %v3561
      %v3594 = vpack.c.b16 %v3562, %v3562
      %v3595 = vpack.c.b16 %v3563, %v3563
      %v3596 = vpack.c.b16 %v3564, %v3564
      %v3597 = vpack.c.b16 %v3565, %v3565
      %v3598 = vpack.c.b16 %v3566, %v3566
      %v3599 = vpack.c.b16 %v3567, %v3567
      %v3600 = vpack.c.b16 %v3568, %v3568
      %v3601 = vpack.c.b16 %v3569, %v3569
      %v3602 = vpack.c.b16 %v3570, %v3570
      %v3603 = vpack.c.b16 %v3571, %v3571
      %v3604 = vpack.c.b16 %v3572, %v3572
      %v3605 = vpack.c.b16 %v3573, %v3573
      %v3606 = vpack.c.b16 %v3574, %v3574
      %v3607 = vpack.c.b16 %v3575, %v3575
      %v3608 = vpack.c.b16 %v3576, %v3576
      %v3609 = vpack.c.b16 %v3577, %v3577
      %v3610 = vpack.c.b16 %v3578, %v3578
      %v3611 = vpack.c.b16 %v3579, %v3579
      %v3612 = vpack.c.b16 %v3580, %v3580
      %v3613 = vpack.c.b16 %v3581, %v3581
      %v3614 = vpack.c.b16 %v3582, %v3582
      %v3615 = vpack.c.b16 %v3583, %v3583
      %vm3648 = vcmask 125952
      %3649 = vst.msk [vmem:[%s278] sm:$0xf] %vm3648, %v3584
      %3650 = vst.msk [vmem:[%s278 + $0x4] sm:$0xf] %vm3648, %v3585
      %3651 = vst.msk [vmem:[%s278 + $0x8] sm:$0xf] %vm3648, %v3586
      %3652 = vst.msk [vmem:[%s278 + $0xc] sm:$0xf] %vm3648, %v3587
      %3653 = vst.msk [vmem:[%s278 + $0x10] sm:$0xf] %vm3648, %v3588
      %3654 = vst.msk [vmem:[%s278 + $0x14] sm:$0xf] %vm3648, %v3589
      %3655 = vst.msk [vmem:[%s278 + $0x18] sm:$0xf] %vm3648, %v3590
      %3656 = vst.msk [vmem:[%s278 + $0x1c] sm:$0xf] %vm3648, %v3591
      %3657 = vst.msk [vmem:[%s278 + $0x20] sm:$0xf] %vm3648, %v3592
      %3658 = vst.msk [vmem:[%s278 + $0x24] sm:$0xf] %vm3648, %v3593
      %3659 = vst.msk [vmem:[%s278 + $0x28] sm:$0xf] %vm3648, %v3594
      %3660 = vst.msk [vmem:[%s278 + $0x2c] sm:$0xf] %vm3648, %v3595
      %3661 = vst.msk [vmem:[%s278 + $0x30] sm:$0xf] %vm3648, %v3596
      %3662 = vst.msk [vmem:[%s278 + $0x34] sm:$0xf] %vm3648, %v3597
      %3663 = vst.msk [vmem:[%s278 + $0x38] sm:$0xf] %vm3648, %v3598
      %3664 = vst.msk [vmem:[%s278 + $0x3c] sm:$0xf] %vm3648, %v3599
      %3665 = vst.msk [vmem:[%s278 + $0x40] sm:$0xf] %vm3648, %v3600
      %3666 = vst.msk [vmem:[%s278 + $0x44] sm:$0xf] %vm3648, %v3601
      %3667 = vst.msk [vmem:[%s278 + $0x48] sm:$0xf] %vm3648, %v3602
      %3668 = vst.msk [vmem:[%s278 + $0x4c] sm:$0xf] %vm3648, %v3603
      %3669 = vst.msk [vmem:[%s278 + $0x50] sm:$0xf] %vm3648, %v3604
      %3670 = vst.msk [vmem:[%s278 + $0x54] sm:$0xf] %vm3648, %v3605
      %3671 = vst.msk [vmem:[%s278 + $0x58] sm:$0xf] %vm3648, %v3606
      %3672 = vst.msk [vmem:[%s278 + $0x5c] sm:$0xf] %vm3648, %v3607
      %3673 = vst.msk [vmem:[%s278 + $0x60] sm:$0xf] %vm3648, %v3608
      %3674 = vst.msk [vmem:[%s278 + $0x64] sm:$0xf] %vm3648, %v3609
      %3675 = vst.msk [vmem:[%s278 + $0x68] sm:$0xf] %vm3648, %v3610
      %3676 = vst.msk [vmem:[%s278 + $0x6c] sm:$0xf] %vm3648, %v3611
      %3677 = vst.msk [vmem:[%s278 + $0x70] sm:$0xf] %vm3648, %v3612
      %3678 = vst.msk [vmem:[%s278 + $0x74] sm:$0xf] %vm3648, %v3613
      %3679 = vst.msk [vmem:[%s278 + $0x78] sm:$0xf] %vm3648, %v3614
      %3680 = vst.msk [vmem:[%s278 + $0x7c] sm:$0xf] %vm3648, %v3615
      %p3681 = scmp.lt.s32.totalorder %s18, 1
      %s3682 = scalar_select %p3681, %s18, 1
      %s3683 = smul.addr %s3682, 32
      %s3684 = smul.addr %s3683, 4
      %s3685 = scalar_lea.vmem %s7, %s3684
      // Predicated region
      $region49: #{tpu_custom_call.1} parent=47 // pred_check
        %p3686 = pneg %p188
      $region50: #{tpu_custom_call.1} parent=47 // pred_check_branch
        %3688 = sbr.rel (%p3686) target = $region52
      $region51: #{tpu_custom_call.1} parent=47 // pred_region
        _
      $region52: #{tpu_custom_call.1} parent=47 // pred_fallthru
        _
    $region48: #{tpu_custom_call.1} parent=5 // pred_fallthru
      _
    %p3689 = scmp.le.s32.totalorder 2, %s13
    // Predicated region
    $region53: #{tpu_custom_call.1} parent=5 // pred_check
      %p3690 = pneg %p3689
    $region54: #{tpu_custom_call.1} parent=5 // pred_check_branch
      %3692 = sbr.rel (%p3690) target = $region56
    $region55: #{tpu_custom_call.1} parent=5 // pred_region
      %s3693 = ssub.s32 %s13, 2
      // Predicated region
      $region57: #{tpu_custom_call.1} parent=55 // pred_check
        %p3694 = pneg %p194
      $region58: #{tpu_custom_call.1} parent=55 // pred_check_branch
        %3696 = sbr.rel (%p3694) target = $region60
      $region59: #{tpu_custom_call.1} parent=55 // pred_region
        %p3697 = scmp.lt.s32.totalorder %s19, 1
        %s3698 = scalar_select %p3697, %s19, 1
        %s3699 = smul.addr %s3698, 32
        %s3700 = smul.addr %s3699, 4
        %s3701 = scalar_lea.vmem %s7, %s3700
      $region60: #{tpu_custom_call.1} parent=55 // pred_fallthru
        _
    $region56: #{tpu_custom_call.1} parent=5 // pred_fallthru
      _
  $region6: #{tpu_custom_call.1} parent=0 // loop_footer
    %s17 = sadd.s32 1, %s13
  $region7: #{tpu_custom_call.1} parent=0 // loop_footer_branch
    %12 = sbr.rel target = $region3
  $region8: #{tpu_custom_call.1} parent=0 // loop_exit
    _

</llo_original>
